<compile_context>
chip_gen: v7x
topology: tpu7x:2x2x1
jax: 0.10.0
libtpu: 0.0.40
codegen_flags: <defaults>
</compile_context>

<pallas_src>
import functools
import numpy as np
import jax
import jax.numpy as jnp
from jax.experimental import pallas as pl
from jax.experimental.pallas import tpu as pltpu

EPS = 1e-5


def _vmem_limit_bytes():
    """Per-generation scoped-VMEM budget (capped below v7x's 64 MiB/TC)."""
    try:
        cap = pltpu.get_tpu_info().vmem_capacity_bytes
    except Exception:
        cap = 128 * 1024 * 1024
    return min(int(cap * 3) // 4, 64 * 1024 * 1024)


# --------------------------------------------------------------------------
# Fused kernel: expand + depthwise + project (+ residual) for one (n, d) plane
# --------------------------------------------------------------------------
def _fused_block_kernel(x0_ref, x1_ref, x2_ref,
                        w_exp_ref, b1_ref,
                        w_dw_ref, b2_ref,
                        w_proj_ref, b3_ref,
                        o_ref, xh_ref, *,
                        stride, in_depth, out_hw,
                        has_expand, vpu_expand, use_res):
    sd, sh, sw = stride
    Ho, Wo = out_hw
    H, W, Cin = x0_ref.shape[2], x0_ref.shape[3], x0_ref.shape[4]
    hidden = w_dw_ref.shape[1]
    oup = o_ref.shape[-1]
    d = pl.program_id(1)

    # Hoisted loads (reused across the 27-tap loop / 3 planes).
    w_dw = w_dw_ref[...]                          # (27, hidden) f32, scale-folded
    b2 = b2_ref[...]                              # (1, hidden)  f32
    if has_expand:
        w_exp = w_exp_ref[...]                    # (Cin, hidden)
        b1 = b1_ref[...]                          # (1, hidden)

    # Zero the padded scratch plane once per step (keeps the halo border at 0).
    xh_ref[...] = jnp.zeros_like(xh_ref)

    # f32 accumulator, pre-loaded with the folded BN2 bias (saves one add pass).
    acc = jnp.zeros((Ho, Wo, hidden), jnp.float32) + b2

    x_refs = (x0_ref, x1_ref, x2_ref)
    for kd in range(3):
        d_in = d * sd - 1 + kd
        valid = jnp.logical_and(d_in >= 0, d_in < in_depth)
        xplane = x_refs[kd][0, 0]                 # (H, W, Cin) f32

        # ---- 1x1x1 expand + BN1 + ReLU6 (fused; hidden never hits HBM) ----
        if has_expand:
            if vpu_expand:
                # Tiny K: VPU broadcast-multiply-add beats a K=Cin MXU pass.
                hp = jnp.zeros((H, W, hidden), jnp.float32) + b1
                for c in range(Cin):
                    hp = hp + xplane[:, :, c:c + 1] * w_exp[c:c + 1, :]
            else:
                hp = jnp.dot(xplane.reshape(H * W, Cin).astype(jnp.bfloat16),
                             w_exp, preferred_element_type=jnp.float32)
                hp = (hp + b1).reshape(H, W, hidden)
            hp = jnp.clip(hp, 0.0, 6.0)
        else:
            hp = xplane.astype(jnp.float32)       # expand_ratio == 1

        # Depth halo: out-of-range planes contribute zeros (post-pad semantics).
        hp = jnp.where(valid, hp, 0.0)
        xh_ref[pl.ds(1, H), pl.ds(1, W), :] = hp

        # ---- 3x3 spatial taps of the 3x3x3 depthwise for this depth plane ----
        for kh in range(3):
            for kw in range(3):
                if sh == 1 and sw == 1:
                    sl = xh_ref[pl.ds(kh, Ho), pl.ds(kw, Wo), :]
                else:
                    sl = xh_ref[pl.ds(kh, Ho, sh), pl.ds(kw, Wo, sw), :]
                t = kd * 9 + kh * 3 + kw
                acc = acc + sl * w_dw[t:t + 1, :]

    # ---- BN2 ReLU6 + 1x1x1 project + BN3 (+ residual) ----
    h = jnp.clip(acc, 0.0, 6.0)
    y = jnp.dot(h.reshape(Ho * Wo, hidden).astype(jnp.bfloat16), w_proj_ref[...],
                preferred_element_type=jnp.float32)
    y = (y + b3_ref[...]).reshape(Ho, Wo, oup)
    if use_res:
        # stride == (1,1,1) and Cin == oup here; the kd=1 plane IS x[n, d].
        y = y + x_refs[1][0, 0]
    o_ref[0, 0] = y.astype(o_ref.dtype)


# --------------------------------------------------------------------------
# Module forward (glue in plain JAX)
# --------------------------------------------------------------------------
def _fold_bn(p):
    gamma, beta, mean, var = p
    s = gamma / jnp.sqrt(var + EPS)
    return s, beta - mean * s


def inverted_residual_3d(x, params, stride):
    """x: (N, C_in, D, H, W) float32 -> (N, C_out, Do, Ho, Wo) float32."""
    N, Cin, D, H, W = x.shape
    oup, hidden = params["w_proj"].shape
    sd, sh, sw = stride
    use_res = (stride == (1, 1, 1)) and (Cin == oup)
    Do = (D - 1) // sd + 1
    Ho = (H - 1) // sh + 1
    Wo = (W - 1) // sw + 1

    x_cl = jnp.transpose(x, (0, 2, 3, 4, 1)).astype(jnp.float32)   # (N,D,H,W,Cin)

    has_expand = "w_exp" in params
    vpu_expand = has_expand and Cin <= 8
    if has_expand:
        s1, b1 = _fold_bn(params["bn1"])
        w_exp = params["w_exp"].T * s1[None, :]                    # (Cin, hidden)
        w_exp = w_exp.astype(jnp.float32 if vpu_expand else jnp.bfloat16)
        b1 = b1.reshape(1, hidden).astype(jnp.float32)
    else:
        w_exp = jnp.zeros((Cin, hidden), jnp.float32)              # unused placeholder
        b1 = jnp.zeros((1, hidden), jnp.float32)

    s2, b2 = _fold_bn(params["bn2"])
    w_dw = jnp.transpose(params["w_dw"], (1, 2, 3, 0)).reshape(27, hidden)
    w_dw = (w_dw * s2[None, :]).astype(jnp.float32)
    b2 = b2.reshape(1, hidden).astype(jnp.float32)

    s3, b3 = _fold_bn(params["bn3"])
    w_proj = (params["w_proj"].T * s3[None, :]).astype(jnp.bfloat16)   # (hidden, oup)
    b3 = b3.reshape(1, oup).astype(jnp.float32)

    def plane_spec(kd):
        # Depth block size is 1 -> block index == element index; clamp to stay
        # in range, the kernel zeroes out-of-range (halo) planes itself.
        def imap(n, d, kd=kd):
            return (n, jnp.clip(d * sd - 1 + kd, 0, D - 1), 0, 0, 0)
        return pl.BlockSpec((1, 1, H, W, Cin), imap)

    const = lambda n, d: (0, 0)

    kernel = functools.partial(
        _fused_block_kernel, stride=(sd, sh, sw), in_depth=D, out_hw=(Ho, Wo),
        has_expand=has_expand, vpu_expand=vpu_expand, use_res=use_res)

    o_cl = pl.pallas_call(
        kernel,
        grid=(N, Do),
        in_specs=[plane_spec(0), plane_spec(1), plane_spec(2),
                  pl.BlockSpec((Cin, hidden), const),
                  pl.BlockSpec((1, hidden), const),
                  pl.BlockSpec((27, hidden), const),
                  pl.BlockSpec((1, hidden), const),
                  pl.BlockSpec((hidden, oup), const),
                  pl.BlockSpec((1, oup), const)],
        out_specs=pl.BlockSpec((1, 1, Ho, Wo, oup), lambda n, d: (n, d, 0, 0, 0)),
        out_shape=jax.ShapeDtypeStruct((N, Do, Ho, Wo, oup), jnp.float32),
        scratch_shapes=[pltpu.VMEM((H + 2, W + 2, hidden), jnp.float32)],
        compiler_params=pltpu.CompilerParams(
            dimension_semantics=("parallel", "parallel"),   # megacore-friendly
            vmem_limit_bytes=_vmem_limit_bytes()),
    )(x_cl, x_cl, x_cl, w_exp, b1, w_dw, b2, w_proj, b3)

    return jnp.transpose(o_cl, (0, 4, 1, 2, 3))   # back to NCDHW


# --------------------------------------------------------------------------
# Pure-JAX reference (mirrors the PyTorch forward, eval-mode BN, f32)
# --------------------------------------------------------------------------
def reference(x, params, stride):
    dn = ("NCDHW", "OIDHW", "NCDHW")

    def bn(y, p):
        g, b, m, v = (a[None, :, None, None, None] for a in p)
        return (y - m) / jnp.sqrt(v + EPS) * g + b

    Cin = x.shape[1]
    oup, hidden = params["w_proj"].shape
    use_res = (stride == (1, 1, 1)) and (Cin == oup)

    h = x
    if "w_exp" in params:
        h = jax.lax.conv_general_dilated(
            h, params["w_exp"][:, :, None, None, None], (1, 1, 1),
            [(0, 0)] * 3, dimension_numbers=dn)
        h = jnp.clip(bn(h, params["bn1"]), 0.0, 6.0)
    h = jax.lax.conv_general_dilated(
        h, params["w_dw"][:, None, :, :, :], stride,
        [(1, 1)] * 3, dimension_numbers=dn, feature_group_count=hidden)
    h = jnp.clip(bn(h, params["bn2"]), 0.0, 6.0)
    h = jax.lax.conv_general_dilated(
        h, params["w_proj"][:, :, None, None, None], (1, 1, 1),
        [(0, 0)] * 3, dimension_numbers=dn)
    h = bn(h, params["bn3"])
    return x + h if use_res else h


# --------------------------------------------------------------------------
def make_params(key, inp, oup, expand_ratio):
    hidden = int(round(inp * expand_ratio))
    ks = jax.random.split(key, 16)

    def bn_params(k, c):
        k1, k2, k3, k4 = jax.random.split(k, 4)
        gamma = jax.random.uniform(k1, (c,), jnp.float32, 0.5, 1.5)
        beta = 0.1 * jax.random.normal(k2, (c,), jnp.float32)
        mean = 0.1 * jax.random.normal(k3, (c,), jnp.float32)
        var = jax.random.uniform(k4, (c,), jnp.float32, 0.5, 1.5)
        return (gamma, beta, mean, var)

    params = {
        "w_dw": 0.1 * jax.random.normal(ks[1], (hidden, 3, 3, 3), jnp.float32),
        "bn2": bn_params(ks[2], hidden),
        "w_proj": 0.1 * jax.random.normal(ks[3], (oup, hidden), jnp.float32),
        "bn3": bn_params(ks[4], oup),
    }
    if expand_ratio != 1:
        params["w_exp"] = 0.1 * jax.random.normal(ks[0], (hidden, inp), jnp.float32)
        params["bn1"] = bn_params(ks[5], hidden)
    return params


if __name__ == "__main__":
    key = jax.random.PRNGKey(0)
    k_x, k_p = jax.random.split(key)

    N, inp, oup = 2, 4, 4
    D = H = W = 8
    expand_ratio = 4.0
    stride = (1, 1, 1)          # -> use_res_connect = True (inp == oup)

    x = jax.random.normal(k_x, (N, inp, D, H, W), jnp.float32)
    params = make_params(k_p, inp, oup, expand_ratio)

    out = jax.block_until_ready(inverted_residual_3d(x, params, stride))
    ref = jax.block_until_ready(reference(x, params, stride))

    assert out.shape == ref.shape, (out.shape, ref.shape)
    # f32 expand/depthwise, bf16-operand project matmul -> modest tolerance.
    if not np.allclose(np.asarray(out), np.asarray(ref), atol=3e-2, rtol=3e-2):
        max_err = float(np.max(np.abs(np.asarray(out) - np.asarray(ref))))
        raise AssertionError(f"mismatch vs reference, max abs err = {max_err}")

    print("KERNEL_OK")
</pallas_src>

<mosaic_0001>
module attributes {stable_mosaic.version = 11 : i64} {
  func.func @_fused_block_kernel(%arg0: i32, %arg1: i32, %arg2: memref<1x1x8x8x4xf32, #tpu.memory_space<vmem>>, %arg3: memref<1x1x8x8x4xf32, #tpu.memory_space<vmem>>, %arg4: memref<1x1x8x8x4xf32, #tpu.memory_space<vmem>>, %arg5: memref<4x16xf32, #tpu.memory_space<vmem>>, %arg6: memref<1x16xf32, #tpu.memory_space<vmem>>, %arg7: memref<27x16xf32, #tpu.memory_space<vmem>>, %arg8: memref<1x16xf32, #tpu.memory_space<vmem>>, %arg9: memref<16x4xbf16, #tpu.memory_space<vmem>>, %arg10: memref<1x4xf32, #tpu.memory_space<vmem>>, %arg11: memref<1x1x8x8x4xf32, #tpu.memory_space<vmem>>, %arg12: memref<10x10x16xf32, #tpu.memory_space<vmem>>) attributes {dimension_semantics = [#tpu.dimension_semantics<parallel>, #tpu.dimension_semantics<parallel>], iteration_bounds = array<i64: 2, 8>, scalar_prefetch = 0 : i64, scratch_operands = 1 : i64, tpu.core_type = #tpu.core_type<tc>, window_params = [{transform_indices = @transform_0, window_bounds = array<i64: 1, 1, 8, 8, 4>}, {transform_indices = @transform_1, window_bounds = array<i64: 1, 1, 8, 8, 4>}, {transform_indices = @transform_2, window_bounds = array<i64: 1, 1, 8, 8, 4>}, {pipeline_mode = #tpu.pipeline_mode<synchronous>, transform_indices = @transform_3, window_bounds = array<i64: 4, 16>}, {pipeline_mode = #tpu.pipeline_mode<synchronous>, transform_indices = @transform_4, window_bounds = array<i64: 1, 16>}, {pipeline_mode = #tpu.pipeline_mode<synchronous>, transform_indices = @transform_5, window_bounds = array<i64: 27, 16>}, {pipeline_mode = #tpu.pipeline_mode<synchronous>, transform_indices = @transform_6, window_bounds = array<i64: 1, 16>}, {pipeline_mode = #tpu.pipeline_mode<synchronous>, transform_indices = @transform_7, window_bounds = array<i64: 16, 4>}, {pipeline_mode = #tpu.pipeline_mode<synchronous>, transform_indices = @transform_8, window_bounds = array<i64: 1, 4>}, {transform_indices = @transform_9, window_bounds = array<i64: 1, 1, 8, 8, 4>}]} {
    %c0 = arith.constant 0 : index
    %c0_0 = arith.constant 0 : index
    %0 = vector.load %arg7[%c0, %c0_0] : memref<27x16xf32, #tpu.memory_space<vmem>>, vector<27x16xf32>
    %c0_1 = arith.constant 0 : index
    %c0_2 = arith.constant 0 : index
    %1 = vector.load %arg8[%c0_1, %c0_2] : memref<1x16xf32, #tpu.memory_space<vmem>>, vector<1x16xf32>
    %c0_3 = arith.constant 0 : index
    %c0_4 = arith.constant 0 : index
    %2 = vector.load %arg5[%c0_3, %c0_4] : memref<4x16xf32, #tpu.memory_space<vmem>>, vector<4x16xf32>
    %c0_5 = arith.constant 0 : index
    %c0_6 = arith.constant 0 : index
    %3 = vector.load %arg6[%c0_5, %c0_6] : memref<1x16xf32, #tpu.memory_space<vmem>>, vector<1x16xf32>
    %cst = arith.constant 0.000000e+00 : f32
    %4 = vector.broadcast %cst : f32 to vector<10x10x16xf32>
    %c0_7 = arith.constant 0 : index
    %c0_8 = arith.constant 0 : index
    %c0_9 = arith.constant 0 : index
    %5 = vector.load %arg12[%c0_7, %c0_8, %c0_9] : memref<10x10x16xf32, #tpu.memory_space<vmem>>, vector<10x10x16xf32>
    tpu.vector_store %arg12[%c0_7, %c0_8, %c0_9], %4 {strides = array<i32>} : memref<10x10x16xf32, #tpu.memory_space<vmem>>, vector<10x10x16xf32>,
    %cst_10 = arith.constant 0.000000e+00 : f32
    %6 = vector.broadcast %cst_10 : f32 to vector<8x8x16xf32>
    %7 = vector.shape_cast %1 : vector<1x16xf32> to vector<1x1x16xf32>
    %8 = vector.broadcast %7 : vector<1x1x16xf32> to vector<8x8x16xf32>
    %9 = arith.addf %6, %8 : vector<8x8x16xf32>
    %c1_i32 = arith.constant 1 : i32
    %10 = arith.muli %arg1, %c1_i32 : i32
    %c1_i32_11 = arith.constant 1 : i32
    %11 = arith.subi %10, %c1_i32_11 : i32
    %c0_i32 = arith.constant 0 : i32
    %12 = arith.addi %11, %c0_i32 : i32
    %c0_i32_12 = arith.constant 0 : i32
    %13 = arith.cmpi sge, %12, %c0_i32_12 : i32
    %c8_i32 = arith.constant 8 : i32
    %14 = arith.cmpi slt, %12, %c8_i32 : i32
    %15 = arith.andi %13, %14 : i1
    %c0_13 = arith.constant 0 : index
    %c0_14 = arith.constant 0 : index
    %c0_15 = arith.constant 0 : index
    %c0_16 = arith.constant 0 : index
    %c0_17 = arith.constant 0 : index
    %16 = vector.load %arg2[%c0_13, %c0_14, %c0_15, %c0_16, %c0_17] : memref<1x1x8x8x4xf32, #tpu.memory_space<vmem>>, vector<1x1x8x8x4xf32>
    %17 = vector.shape_cast %16 : vector<1x1x8x8x4xf32> to vector<8x8x4xf32>
    %cst_18 = arith.constant 0.000000e+00 : f32
    %18 = vector.broadcast %cst_18 : f32 to vector<8x8x16xf32>
    %19 = vector.shape_cast %3 : vector<1x16xf32> to vector<1x1x16xf32>
    %20 = vector.broadcast %19 : vector<1x1x16xf32> to vector<8x8x16xf32>
    %21 = arith.addf %18, %20 : vector<8x8x16xf32>
    %22 = vector.extract_strided_slice %17 {offsets = [0, 0, 0], sizes = [8, 8, 1], strides = [1, 1, 1]} : vector<8x8x4xf32> to vector<8x8x1xf32>
    %23 = vector.extract_strided_slice %2 {offsets = [0, 0], sizes = [1, 16], strides = [1, 1]} : vector<4x16xf32> to vector<1x16xf32>
    %24 = vector.shape_cast %23 : vector<1x16xf32> to vector<1x1x16xf32>
    %25 = vector.broadcast %22 : vector<8x8x1xf32> to vector<8x8x16xf32>
    %26 = vector.broadcast %24 : vector<1x1x16xf32> to vector<8x8x16xf32>
    %27 = arith.mulf %25, %26 : vector<8x8x16xf32>
    %28 = arith.addf %21, %27 : vector<8x8x16xf32>
    %29 = vector.extract_strided_slice %17 {offsets = [0, 0, 1], sizes = [8, 8, 1], strides = [1, 1, 1]} : vector<8x8x4xf32> to vector<8x8x1xf32>
    %30 = vector.extract_strided_slice %2 {offsets = [1, 0], sizes = [1, 16], strides = [1, 1]} : vector<4x16xf32> to vector<1x16xf32>
    %31 = vector.shape_cast %30 : vector<1x16xf32> to vector<1x1x16xf32>
    %32 = vector.broadcast %29 : vector<8x8x1xf32> to vector<8x8x16xf32>
    %33 = vector.broadcast %31 : vector<1x1x16xf32> to vector<8x8x16xf32>
    %34 = arith.mulf %32, %33 : vector<8x8x16xf32>
    %35 = arith.addf %28, %34 : vector<8x8x16xf32>
    %36 = vector.extract_strided_slice %17 {offsets = [0, 0, 2], sizes = [8, 8, 1], strides = [1, 1, 1]} : vector<8x8x4xf32> to vector<8x8x1xf32>
    %37 = vector.extract_strided_slice %2 {offsets = [2, 0], sizes = [1, 16], strides = [1, 1]} : vector<4x16xf32> to vector<1x16xf32>
    %38 = vector.shape_cast %37 : vector<1x16xf32> to vector<1x1x16xf32>
    %39 = vector.broadcast %36 : vector<8x8x1xf32> to vector<8x8x16xf32>
    %40 = vector.broadcast %38 : vector<1x1x16xf32> to vector<8x8x16xf32>
    %41 = arith.mulf %39, %40 : vector<8x8x16xf32>
    %42 = arith.addf %35, %41 : vector<8x8x16xf32>
    %43 = vector.extract_strided_slice %17 {offsets = [0, 0, 3], sizes = [8, 8, 1], strides = [1, 1, 1]} : vector<8x8x4xf32> to vector<8x8x1xf32>
    %44 = vector.extract_strided_slice %2 {offsets = [3, 0], sizes = [1, 16], strides = [1, 1]} : vector<4x16xf32> to vector<1x16xf32>
    %45 = vector.shape_cast %44 : vector<1x16xf32> to vector<1x1x16xf32>
    %46 = vector.broadcast %43 : vector<8x8x1xf32> to vector<8x8x16xf32>
    %47 = vector.broadcast %45 : vector<1x1x16xf32> to vector<8x8x16xf32>
    %48 = arith.mulf %46, %47 : vector<8x8x16xf32>
    %49 = arith.addf %42, %48 : vector<8x8x16xf32>
    %cst_19 = arith.constant 0.000000e+00 : f32
    %cst_20 = arith.constant 6.000000e+00 : f32
    %50 = vector.broadcast %cst_19 : f32 to vector<8x8x16xf32>
    %51 = arith.maximumf %50, %49 : vector<8x8x16xf32>
    %52 = vector.broadcast %cst_20 : f32 to vector<8x8x16xf32>
    %53 = arith.minimumf %52, %51 : vector<8x8x16xf32>
    %cst_21 = arith.constant 0.000000e+00 : f32
    %54 = vector.broadcast %cst_21 : f32 to vector<8x8x16xf32>
    %55 = arith.select %15, %53, %54 : vector<8x8x16xf32>
    %c1 = arith.constant 1 : index
    %c1_22 = arith.constant 1 : index
    %c0_23 = arith.constant 0 : index
    %56 = vector.load %arg12[%c1, %c1_22, %c0_23] : memref<10x10x16xf32, #tpu.memory_space<vmem>>, vector<8x8x16xf32>
    tpu.vector_store %arg12[%c1, %c1_22, %c0_23], %55 {strides = array<i32>} : memref<10x10x16xf32, #tpu.memory_space<vmem>>, vector<8x8x16xf32>,
    %c0_24 = arith.constant 0 : index
    %c0_25 = arith.constant 0 : index
    %c0_26 = arith.constant 0 : index
    %57 = vector.load %arg12[%c0_24, %c0_25, %c0_26] : memref<10x10x16xf32, #tpu.memory_space<vmem>>, vector<8x8x16xf32>
    %58 = vector.extract_strided_slice %0 {offsets = [0, 0], sizes = [1, 16], strides = [1, 1]} : vector<27x16xf32> to vector<1x16xf32>
    %59 = vector.shape_cast %58 : vector<1x16xf32> to vector<1x1x16xf32>
    %60 = vector.broadcast %59 : vector<1x1x16xf32> to vector<8x8x16xf32>
    %61 = arith.mulf %57, %60 : vector<8x8x16xf32>
    %62 = arith.addf %9, %61 : vector<8x8x16xf32>
    %c0_27 = arith.constant 0 : index
    %c1_28 = arith.constant 1 : index
    %c0_29 = arith.constant 0 : index
    %63 = vector.load %arg12[%c0_27, %c1_28, %c0_29] : memref<10x10x16xf32, #tpu.memory_space<vmem>>, vector<8x8x16xf32>
    %64 = vector.extract_strided_slice %0 {offsets = [1, 0], sizes = [1, 16], strides = [1, 1]} : vector<27x16xf32> to vector<1x16xf32>
    %65 = vector.shape_cast %64 : vector<1x16xf32> to vector<1x1x16xf32>
    %66 = vector.broadcast %65 : vector<1x1x16xf32> to vector<8x8x16xf32>
    %67 = arith.mulf %63, %66 : vector<8x8x16xf32>
    %68 = arith.addf %62, %67 : vector<8x8x16xf32>
    %c0_30 = arith.constant 0 : index
    %c2 = arith.constant 2 : index
    %c0_31 = arith.constant 0 : index
    %69 = vector.load %arg12[%c0_30, %c2, %c0_31] : memref<10x10x16xf32, #tpu.memory_space<vmem>>, vector<8x8x16xf32>
    %70 = vector.extract_strided_slice %0 {offsets = [2, 0], sizes = [1, 16], strides = [1, 1]} : vector<27x16xf32> to vector<1x16xf32>
    %71 = vector.shape_cast %70 : vector<1x16xf32> to vector<1x1x16xf32>
    %72 = vector.broadcast %71 : vector<1x1x16xf32> to vector<8x8x16xf32>
    %73 = arith.mulf %69, %72 : vector<8x8x16xf32>
    %74 = arith.addf %68, %73 : vector<8x8x16xf32>
    %c1_32 = arith.constant 1 : index
    %c0_33 = arith.constant 0 : index
    %c0_34 = arith.constant 0 : index
    %75 = vector.load %arg12[%c1_32, %c0_33, %c0_34] : memref<10x10x16xf32, #tpu.memory_space<vmem>>, vector<8x8x16xf32>
    %76 = vector.extract_strided_slice %0 {offsets = [3, 0], sizes = [1, 16], strides = [1, 1]} : vector<27x16xf32> to vector<1x16xf32>
    %77 = vector.shape_cast %76 : vector<1x16xf32> to vector<1x1x16xf32>
    %78 = vector.broadcast %77 : vector<1x1x16xf32> to vector<8x8x16xf32>
    %79 = arith.mulf %75, %78 : vector<8x8x16xf32>
    %80 = arith.addf %74, %79 : vector<8x8x16xf32>
    %c1_35 = arith.constant 1 : index
    %c1_36 = arith.constant 1 : index
    %c0_37 = arith.constant 0 : index
    %81 = vector.load %arg12[%c1_35, %c1_36, %c0_37] : memref<10x10x16xf32, #tpu.memory_space<vmem>>, vector<8x8x16xf32>
    %82 = vector.extract_strided_slice %0 {offsets = [4, 0], sizes = [1, 16], strides = [1, 1]} : vector<27x16xf32> to vector<1x16xf32>
    %83 = vector.shape_cast %82 : vector<1x16xf32> to vector<1x1x16xf32>
    %84 = vector.broadcast %83 : vector<1x1x16xf32> to vector<8x8x16xf32>
    %85 = arith.mulf %81, %84 : vector<8x8x16xf32>
    %86 = arith.addf %80, %85 : vector<8x8x16xf32>
    %c1_38 = arith.constant 1 : index
    %c2_39 = arith.constant 2 : index
    %c0_40 = arith.constant 0 : index
    %87 = vector.load %arg12[%c1_38, %c2_39, %c0_40] : memref<10x10x16xf32, #tpu.memory_space<vmem>>, vector<8x8x16xf32>
    %88 = vector.extract_strided_slice %0 {offsets = [5, 0], sizes = [1, 16], strides = [1, 1]} : vector<27x16xf32> to vector<1x16xf32>
    %89 = vector.shape_cast %88 : vector<1x16xf32> to vector<1x1x16xf32>
    %90 = vector.broadcast %89 : vector<1x1x16xf32> to vector<8x8x16xf32>
    %91 = arith.mulf %87, %90 : vector<8x8x16xf32>
    %92 = arith.addf %86, %91 : vector<8x8x16xf32>
    %c2_41 = arith.constant 2 : index
    %c0_42 = arith.constant 0 : index
    %c0_43 = arith.constant 0 : index
    %93 = vector.load %arg12[%c2_41, %c0_42, %c0_43] : memref<10x10x16xf32, #tpu.memory_space<vmem>>, vector<8x8x16xf32>
    %94 = vector.extract_strided_slice %0 {offsets = [6, 0], sizes = [1, 16], strides = [1, 1]} : vector<27x16xf32> to vector<1x16xf32>
    %95 = vector.shape_cast %94 : vector<1x16xf32> to vector<1x1x16xf32>
    %96 = vector.broadcast %95 : vector<1x1x16xf32> to vector<8x8x16xf32>
    %97 = arith.mulf %93, %96 : vector<8x8x16xf32>
    %98 = arith.addf %92, %97 : vector<8x8x16xf32>
    %c2_44 = arith.constant 2 : index
    %c1_45 = arith.constant 1 : index
    %c0_46 = arith.constant 0 : index
    %99 = vector.load %arg12[%c2_44, %c1_45, %c0_46] : memref<10x10x16xf32, #tpu.memory_space<vmem>>, vector<8x8x16xf32>
    %100 = vector.extract_strided_slice %0 {offsets = [7, 0], sizes = [1, 16], strides = [1, 1]} : vector<27x16xf32> to vector<1x16xf32>
    %101 = vector.shape_cast %100 : vector<1x16xf32> to vector<1x1x16xf32>
    %102 = vector.broadcast %101 : vector<1x1x16xf32> to vector<8x8x16xf32>
    %103 = arith.mulf %99, %102 : vector<8x8x16xf32>
    %104 = arith.addf %98, %103 : vector<8x8x16xf32>
    %c2_47 = arith.constant 2 : index
    %c2_48 = arith.constant 2 : index
    %c0_49 = arith.constant 0 : index
    %105 = vector.load %arg12[%c2_47, %c2_48, %c0_49] : memref<10x10x16xf32, #tpu.memory_space<vmem>>, vector<8x8x16xf32>
    %106 = vector.extract_strided_slice %0 {offsets = [8, 0], sizes = [1, 16], strides = [1, 1]} : vector<27x16xf32> to vector<1x16xf32>
    %107 = vector.shape_cast %106 : vector<1x16xf32> to vector<1x1x16xf32>
    %108 = vector.broadcast %107 : vector<1x1x16xf32> to vector<8x8x16xf32>
    %109 = arith.mulf %105, %108 : vector<8x8x16xf32>
    %110 = arith.addf %104, %109 : vector<8x8x16xf32>
    %c1_i32_50 = arith.constant 1 : i32
    %111 = arith.muli %arg1, %c1_i32_50 : i32
    %c1_i32_51 = arith.constant 1 : i32
    %112 = arith.subi %111, %c1_i32_51 : i32
    %c1_i32_52 = arith.constant 1 : i32
    %113 = arith.addi %112, %c1_i32_52 : i32
    %c0_i32_53 = arith.constant 0 : i32
    %114 = arith.cmpi sge, %113, %c0_i32_53 : i32
    %c8_i32_54 = arith.constant 8 : i32
    %115 = arith.cmpi slt, %113, %c8_i32_54 : i32
    %116 = arith.andi %114, %115 : i1
    %c0_55 = arith.constant 0 : index
    %c0_56 = arith.constant 0 : index
    %c0_57 = arith.constant 0 : index
    %c0_58 = arith.constant 0 : index
    %c0_59 = arith.constant 0 : index
    %117 = vector.load %arg3[%c0_55, %c0_56, %c0_57, %c0_58, %c0_59] : memref<1x1x8x8x4xf32, #tpu.memory_space<vmem>>, vector<1x1x8x8x4xf32>
    %118 = vector.shape_cast %117 : vector<1x1x8x8x4xf32> to vector<8x8x4xf32>
    %cst_60 = arith.constant 0.000000e+00 : f32
    %119 = vector.broadcast %cst_60 : f32 to vector<8x8x16xf32>
    %120 = vector.shape_cast %3 : vector<1x16xf32> to vector<1x1x16xf32>
    %121 = vector.broadcast %120 : vector<1x1x16xf32> to vector<8x8x16xf32>
    %122 = arith.addf %119, %121 : vector<8x8x16xf32>
    %123 = vector.extract_strided_slice %118 {offsets = [0, 0, 0], sizes = [8, 8, 1], strides = [1, 1, 1]} : vector<8x8x4xf32> to vector<8x8x1xf32>
    %124 = vector.extract_strided_slice %2 {offsets = [0, 0], sizes = [1, 16], strides = [1, 1]} : vector<4x16xf32> to vector<1x16xf32>
    %125 = vector.shape_cast %124 : vector<1x16xf32> to vector<1x1x16xf32>
    %126 = vector.broadcast %123 : vector<8x8x1xf32> to vector<8x8x16xf32>
    %127 = vector.broadcast %125 : vector<1x1x16xf32> to vector<8x8x16xf32>
    %128 = arith.mulf %126, %127 : vector<8x8x16xf32>
    %129 = arith.addf %122, %128 : vector<8x8x16xf32>
    %130 = vector.extract_strided_slice %118 {offsets = [0, 0, 1], sizes = [8, 8, 1], strides = [1, 1, 1]} : vector<8x8x4xf32> to vector<8x8x1xf32>
    %131 = vector.extract_strided_slice %2 {offsets = [1, 0], sizes = [1, 16], strides = [1, 1]} : vector<4x16xf32> to vector<1x16xf32>
    %132 = vector.shape_cast %131 : vector<1x16xf32> to vector<1x1x16xf32>
    %133 = vector.broadcast %130 : vector<8x8x1xf32> to vector<8x8x16xf32>
    %134 = vector.broadcast %132 : vector<1x1x16xf32> to vector<8x8x16xf32>
    %135 = arith.mulf %133, %134 : vector<8x8x16xf32>
    %136 = arith.addf %129, %135 : vector<8x8x16xf32>
    %137 = vector.extract_strided_slice %118 {offsets = [0, 0, 2], sizes = [8, 8, 1], strides = [1, 1, 1]} : vector<8x8x4xf32> to vector<8x8x1xf32>
    %138 = vector.extract_strided_slice %2 {offsets = [2, 0], sizes = [1, 16], strides = [1, 1]} : vector<4x16xf32> to vector<1x16xf32>
    %139 = vector.shape_cast %138 : vector<1x16xf32> to vector<1x1x16xf32>
    %140 = vector.broadcast %137 : vector<8x8x1xf32> to vector<8x8x16xf32>
    %141 = vector.broadcast %139 : vector<1x1x16xf32> to vector<8x8x16xf32>
    %142 = arith.mulf %140, %141 : vector<8x8x16xf32>
    %143 = arith.addf %136, %142 : vector<8x8x16xf32>
    %144 = vector.extract_strided_slice %118 {offsets = [0, 0, 3], sizes = [8, 8, 1], strides = [1, 1, 1]} : vector<8x8x4xf32> to vector<8x8x1xf32>
    %145 = vector.extract_strided_slice %2 {offsets = [3, 0], sizes = [1, 16], strides = [1, 1]} : vector<4x16xf32> to vector<1x16xf32>
    %146 = vector.shape_cast %145 : vector<1x16xf32> to vector<1x1x16xf32>
    %147 = vector.broadcast %144 : vector<8x8x1xf32> to vector<8x8x16xf32>
    %148 = vector.broadcast %146 : vector<1x1x16xf32> to vector<8x8x16xf32>
    %149 = arith.mulf %147, %148 : vector<8x8x16xf32>
    %150 = arith.addf %143, %149 : vector<8x8x16xf32>
    %cst_61 = arith.constant 0.000000e+00 : f32
    %cst_62 = arith.constant 6.000000e+00 : f32
    %151 = vector.broadcast %cst_61 : f32 to vector<8x8x16xf32>
    %152 = arith.maximumf %151, %150 : vector<8x8x16xf32>
    %153 = vector.broadcast %cst_62 : f32 to vector<8x8x16xf32>
    %154 = arith.minimumf %153, %152 : vector<8x8x16xf32>
    %cst_63 = arith.constant 0.000000e+00 : f32
    %155 = vector.broadcast %cst_63 : f32 to vector<8x8x16xf32>
    %156 = arith.select %116, %154, %155 : vector<8x8x16xf32>
    %c1_64 = arith.constant 1 : index
    %c1_65 = arith.constant 1 : index
    %c0_66 = arith.constant 0 : index
    %157 = vector.load %arg12[%c1_64, %c1_65, %c0_66] : memref<10x10x16xf32, #tpu.memory_space<vmem>>, vector<8x8x16xf32>
    tpu.vector_store %arg12[%c1_64, %c1_65, %c0_66], %156 {strides = array<i32>} : memref<10x10x16xf32, #tpu.memory_space<vmem>>, vector<8x8x16xf32>,
    %c0_67 = arith.constant 0 : index
    %c0_68 = arith.constant 0 : index
    %c0_69 = arith.constant 0 : index
    %158 = vector.load %arg12[%c0_67, %c0_68, %c0_69] : memref<10x10x16xf32, #tpu.memory_space<vmem>>, vector<8x8x16xf32>
    %159 = vector.extract_strided_slice %0 {offsets = [9, 0], sizes = [1, 16], strides = [1, 1]} : vector<27x16xf32> to vector<1x16xf32>
    %160 = vector.shape_cast %159 : vector<1x16xf32> to vector<1x1x16xf32>
    %161 = vector.broadcast %160 : vector<1x1x16xf32> to vector<8x8x16xf32>
    %162 = arith.mulf %158, %161 : vector<8x8x16xf32>
    %163 = arith.addf %110, %162 : vector<8x8x16xf32>
    %c0_70 = arith.constant 0 : index
    %c1_71 = arith.constant 1 : index
    %c0_72 = arith.constant 0 : index
    %164 = vector.load %arg12[%c0_70, %c1_71, %c0_72] : memref<10x10x16xf32, #tpu.memory_space<vmem>>, vector<8x8x16xf32>
    %165 = vector.extract_strided_slice %0 {offsets = [10, 0], sizes = [1, 16], strides = [1, 1]} : vector<27x16xf32> to vector<1x16xf32>
    %166 = vector.shape_cast %165 : vector<1x16xf32> to vector<1x1x16xf32>
    %167 = vector.broadcast %166 : vector<1x1x16xf32> to vector<8x8x16xf32>
    %168 = arith.mulf %164, %167 : vector<8x8x16xf32>
    %169 = arith.addf %163, %168 : vector<8x8x16xf32>
    %c0_73 = arith.constant 0 : index
    %c2_74 = arith.constant 2 : index
    %c0_75 = arith.constant 0 : index
    %170 = vector.load %arg12[%c0_73, %c2_74, %c0_75] : memref<10x10x16xf32, #tpu.memory_space<vmem>>, vector<8x8x16xf32>
    %171 = vector.extract_strided_slice %0 {offsets = [11, 0], sizes = [1, 16], strides = [1, 1]} : vector<27x16xf32> to vector<1x16xf32>
    %172 = vector.shape_cast %171 : vector<1x16xf32> to vector<1x1x16xf32>
    %173 = vector.broadcast %172 : vector<1x1x16xf32> to vector<8x8x16xf32>
    %174 = arith.mulf %170, %173 : vector<8x8x16xf32>
    %175 = arith.addf %169, %174 : vector<8x8x16xf32>
    %c1_76 = arith.constant 1 : index
    %c0_77 = arith.constant 0 : index
    %c0_78 = arith.constant 0 : index
    %176 = vector.load %arg12[%c1_76, %c0_77, %c0_78] : memref<10x10x16xf32, #tpu.memory_space<vmem>>, vector<8x8x16xf32>
    %177 = vector.extract_strided_slice %0 {offsets = [12, 0], sizes = [1, 16], strides = [1, 1]} : vector<27x16xf32> to vector<1x16xf32>
    %178 = vector.shape_cast %177 : vector<1x16xf32> to vector<1x1x16xf32>
    %179 = vector.broadcast %178 : vector<1x1x16xf32> to vector<8x8x16xf32>
    %180 = arith.mulf %176, %179 : vector<8x8x16xf32>
    %181 = arith.addf %175, %180 : vector<8x8x16xf32>
    %c1_79 = arith.constant 1 : index
    %c1_80 = arith.constant 1 : index
    %c0_81 = arith.constant 0 : index
    %182 = vector.load %arg12[%c1_79, %c1_80, %c0_81] : memref<10x10x16xf32, #tpu.memory_space<vmem>>, vector<8x8x16xf32>
    %183 = vector.extract_strided_slice %0 {offsets = [13, 0], sizes = [1, 16], strides = [1, 1]} : vector<27x16xf32> to vector<1x16xf32>
    %184 = vector.shape_cast %183 : vector<1x16xf32> to vector<1x1x16xf32>
    %185 = vector.broadcast %184 : vector<1x1x16xf32> to vector<8x8x16xf32>
    %186 = arith.mulf %182, %185 : vector<8x8x16xf32>
    %187 = arith.addf %181, %186 : vector<8x8x16xf32>
    %c1_82 = arith.constant 1 : index
    %c2_83 = arith.constant 2 : index
    %c0_84 = arith.constant 0 : index
    %188 = vector.load %arg12[%c1_82, %c2_83, %c0_84] : memref<10x10x16xf32, #tpu.memory_space<vmem>>, vector<8x8x16xf32>
    %189 = vector.extract_strided_slice %0 {offsets = [14, 0], sizes = [1, 16], strides = [1, 1]} : vector<27x16xf32> to vector<1x16xf32>
    %190 = vector.shape_cast %189 : vector<1x16xf32> to vector<1x1x16xf32>
    %191 = vector.broadcast %190 : vector<1x1x16xf32> to vector<8x8x16xf32>
    %192 = arith.mulf %188, %191 : vector<8x8x16xf32>
    %193 = arith.addf %187, %192 : vector<8x8x16xf32>
    %c2_85 = arith.constant 2 : index
    %c0_86 = arith.constant 0 : index
    %c0_87 = arith.constant 0 : index
    %194 = vector.load %arg12[%c2_85, %c0_86, %c0_87] : memref<10x10x16xf32, #tpu.memory_space<vmem>>, vector<8x8x16xf32>
    %195 = vector.extract_strided_slice %0 {offsets = [15, 0], sizes = [1, 16], strides = [1, 1]} : vector<27x16xf32> to vector<1x16xf32>
    %196 = vector.shape_cast %195 : vector<1x16xf32> to vector<1x1x16xf32>
    %197 = vector.broadcast %196 : vector<1x1x16xf32> to vector<8x8x16xf32>
    %198 = arith.mulf %194, %197 : vector<8x8x16xf32>
    %199 = arith.addf %193, %198 : vector<8x8x16xf32>
    %c2_88 = arith.constant 2 : index
    %c1_89 = arith.constant 1 : index
    %c0_90 = arith.constant 0 : index
    %200 = vector.load %arg12[%c2_88, %c1_89, %c0_90] : memref<10x10x16xf32, #tpu.memory_space<vmem>>, vector<8x8x16xf32>
    %201 = vector.extract_strided_slice %0 {offsets = [16, 0], sizes = [1, 16], strides = [1, 1]} : vector<27x16xf32> to vector<1x16xf32>
    %202 = vector.shape_cast %201 : vector<1x16xf32> to vector<1x1x16xf32>
    %203 = vector.broadcast %202 : vector<1x1x16xf32> to vector<8x8x16xf32>
    %204 = arith.mulf %200, %203 : vector<8x8x16xf32>
    %205 = arith.addf %199, %204 : vector<8x8x16xf32>
    %c2_91 = arith.constant 2 : index
    %c2_92 = arith.constant 2 : index
    %c0_93 = arith.constant 0 : index
    %206 = vector.load %arg12[%c2_91, %c2_92, %c0_93] : memref<10x10x16xf32, #tpu.memory_space<vmem>>, vector<8x8x16xf32>
    %207 = vector.extract_strided_slice %0 {offsets = [17, 0], sizes = [1, 16], strides = [1, 1]} : vector<27x16xf32> to vector<1x16xf32>
    %208 = vector.shape_cast %207 : vector<1x16xf32> to vector<1x1x16xf32>
    %209 = vector.broadcast %208 : vector<1x1x16xf32> to vector<8x8x16xf32>
    %210 = arith.mulf %206, %209 : vector<8x8x16xf32>
    %211 = arith.addf %205, %210 : vector<8x8x16xf32>
    %c1_i32_94 = arith.constant 1 : i32
    %212 = arith.muli %arg1, %c1_i32_94 : i32
    %c1_i32_95 = arith.constant 1 : i32
    %213 = arith.subi %212, %c1_i32_95 : i32
    %c2_i32 = arith.constant 2 : i32
    %214 = arith.addi %213, %c2_i32 : i32
    %c0_i32_96 = arith.constant 0 : i32
    %215 = arith.cmpi sge, %214, %c0_i32_96 : i32
    %c8_i32_97 = arith.constant 8 : i32
    %216 = arith.cmpi slt, %214, %c8_i32_97 : i32
    %217 = arith.andi %215, %216 : i1
    %c0_98 = arith.constant 0 : index
    %c0_99 = arith.constant 0 : index
    %c0_100 = arith.constant 0 : index
    %c0_101 = arith.constant 0 : index
    %c0_102 = arith.constant 0 : index
    %218 = vector.load %arg4[%c0_98, %c0_99, %c0_100, %c0_101, %c0_102] : memref<1x1x8x8x4xf32, #tpu.memory_space<vmem>>, vector<1x1x8x8x4xf32>
    %219 = vector.shape_cast %218 : vector<1x1x8x8x4xf32> to vector<8x8x4xf32>
    %cst_103 = arith.constant 0.000000e+00 : f32
    %220 = vector.broadcast %cst_103 : f32 to vector<8x8x16xf32>
    %221 = vector.shape_cast %3 : vector<1x16xf32> to vector<1x1x16xf32>
    %222 = vector.broadcast %221 : vector<1x1x16xf32> to vector<8x8x16xf32>
    %223 = arith.addf %220, %222 : vector<8x8x16xf32>
    %224 = vector.extract_strided_slice %219 {offsets = [0, 0, 0], sizes = [8, 8, 1], strides = [1, 1, 1]} : vector<8x8x4xf32> to vector<8x8x1xf32>
    %225 = vector.extract_strided_slice %2 {offsets = [0, 0], sizes = [1, 16], strides = [1, 1]} : vector<4x16xf32> to vector<1x16xf32>
    %226 = vector.shape_cast %225 : vector<1x16xf32> to vector<1x1x16xf32>
    %227 = vector.broadcast %224 : vector<8x8x1xf32> to vector<8x8x16xf32>
    %228 = vector.broadcast %226 : vector<1x1x16xf32> to vector<8x8x16xf32>
    %229 = arith.mulf %227, %228 : vector<8x8x16xf32>
    %230 = arith.addf %223, %229 : vector<8x8x16xf32>
    %231 = vector.extract_strided_slice %219 {offsets = [0, 0, 1], sizes = [8, 8, 1], strides = [1, 1, 1]} : vector<8x8x4xf32> to vector<8x8x1xf32>
    %232 = vector.extract_strided_slice %2 {offsets = [1, 0], sizes = [1, 16], strides = [1, 1]} : vector<4x16xf32> to vector<1x16xf32>
    %233 = vector.shape_cast %232 : vector<1x16xf32> to vector<1x1x16xf32>
    %234 = vector.broadcast %231 : vector<8x8x1xf32> to vector<8x8x16xf32>
    %235 = vector.broadcast %233 : vector<1x1x16xf32> to vector<8x8x16xf32>
    %236 = arith.mulf %234, %235 : vector<8x8x16xf32>
    %237 = arith.addf %230, %236 : vector<8x8x16xf32>
    %238 = vector.extract_strided_slice %219 {offsets = [0, 0, 2], sizes = [8, 8, 1], strides = [1, 1, 1]} : vector<8x8x4xf32> to vector<8x8x1xf32>
    %239 = vector.extract_strided_slice %2 {offsets = [2, 0], sizes = [1, 16], strides = [1, 1]} : vector<4x16xf32> to vector<1x16xf32>
    %240 = vector.shape_cast %239 : vector<1x16xf32> to vector<1x1x16xf32>
    %241 = vector.broadcast %238 : vector<8x8x1xf32> to vector<8x8x16xf32>
    %242 = vector.broadcast %240 : vector<1x1x16xf32> to vector<8x8x16xf32>
    %243 = arith.mulf %241, %242 : vector<8x8x16xf32>
    %244 = arith.addf %237, %243 : vector<8x8x16xf32>
    %245 = vector.extract_strided_slice %219 {offsets = [0, 0, 3], sizes = [8, 8, 1], strides = [1, 1, 1]} : vector<8x8x4xf32> to vector<8x8x1xf32>
    %246 = vector.extract_strided_slice %2 {offsets = [3, 0], sizes = [1, 16], strides = [1, 1]} : vector<4x16xf32> to vector<1x16xf32>
    %247 = vector.shape_cast %246 : vector<1x16xf32> to vector<1x1x16xf32>
    %248 = vector.broadcast %245 : vector<8x8x1xf32> to vector<8x8x16xf32>
    %249 = vector.broadcast %247 : vector<1x1x16xf32> to vector<8x8x16xf32>
    %250 = arith.mulf %248, %249 : vector<8x8x16xf32>
    %251 = arith.addf %244, %250 : vector<8x8x16xf32>
    %cst_104 = arith.constant 0.000000e+00 : f32
    %cst_105 = arith.constant 6.000000e+00 : f32
    %252 = vector.broadcast %cst_104 : f32 to vector<8x8x16xf32>
    %253 = arith.maximumf %252, %251 : vector<8x8x16xf32>
    %254 = vector.broadcast %cst_105 : f32 to vector<8x8x16xf32>
    %255 = arith.minimumf %254, %253 : vector<8x8x16xf32>
    %cst_106 = arith.constant 0.000000e+00 : f32
    %256 = vector.broadcast %cst_106 : f32 to vector<8x8x16xf32>
    %257 = arith.select %217, %255, %256 : vector<8x8x16xf32>
    %c1_107 = arith.constant 1 : index
    %c1_108 = arith.constant 1 : index
    %c0_109 = arith.constant 0 : index
    %258 = vector.load %arg12[%c1_107, %c1_108, %c0_109] : memref<10x10x16xf32, #tpu.memory_space<vmem>>, vector<8x8x16xf32>
    tpu.vector_store %arg12[%c1_107, %c1_108, %c0_109], %257 {strides = array<i32>} : memref<10x10x16xf32, #tpu.memory_space<vmem>>, vector<8x8x16xf32>,
    %c0_110 = arith.constant 0 : index
    %c0_111 = arith.constant 0 : index
    %c0_112 = arith.constant 0 : index
    %259 = vector.load %arg12[%c0_110, %c0_111, %c0_112] : memref<10x10x16xf32, #tpu.memory_space<vmem>>, vector<8x8x16xf32>
    %260 = vector.extract_strided_slice %0 {offsets = [18, 0], sizes = [1, 16], strides = [1, 1]} : vector<27x16xf32> to vector<1x16xf32>
    %261 = vector.shape_cast %260 : vector<1x16xf32> to vector<1x1x16xf32>
    %262 = vector.broadcast %261 : vector<1x1x16xf32> to vector<8x8x16xf32>
    %263 = arith.mulf %259, %262 : vector<8x8x16xf32>
    %264 = arith.addf %211, %263 : vector<8x8x16xf32>
    %c0_113 = arith.constant 0 : index
    %c1_114 = arith.constant 1 : index
    %c0_115 = arith.constant 0 : index
    %265 = vector.load %arg12[%c0_113, %c1_114, %c0_115] : memref<10x10x16xf32, #tpu.memory_space<vmem>>, vector<8x8x16xf32>
    %266 = vector.extract_strided_slice %0 {offsets = [19, 0], sizes = [1, 16], strides = [1, 1]} : vector<27x16xf32> to vector<1x16xf32>
    %267 = vector.shape_cast %266 : vector<1x16xf32> to vector<1x1x16xf32>
    %268 = vector.broadcast %267 : vector<1x1x16xf32> to vector<8x8x16xf32>
    %269 = arith.mulf %265, %268 : vector<8x8x16xf32>
    %270 = arith.addf %264, %269 : vector<8x8x16xf32>
    %c0_116 = arith.constant 0 : index
    %c2_117 = arith.constant 2 : index
    %c0_118 = arith.constant 0 : index
    %271 = vector.load %arg12[%c0_116, %c2_117, %c0_118] : memref<10x10x16xf32, #tpu.memory_space<vmem>>, vector<8x8x16xf32>
    %272 = vector.extract_strided_slice %0 {offsets = [20, 0], sizes = [1, 16], strides = [1, 1]} : vector<27x16xf32> to vector<1x16xf32>
    %273 = vector.shape_cast %272 : vector<1x16xf32> to vector<1x1x16xf32>
    %274 = vector.broadcast %273 : vector<1x1x16xf32> to vector<8x8x16xf32>
    %275 = arith.mulf %271, %274 : vector<8x8x16xf32>
    %276 = arith.addf %270, %275 : vector<8x8x16xf32>
    %c1_119 = arith.constant 1 : index
    %c0_120 = arith.constant 0 : index
    %c0_121 = arith.constant 0 : index
    %277 = vector.load %arg12[%c1_119, %c0_120, %c0_121] : memref<10x10x16xf32, #tpu.memory_space<vmem>>, vector<8x8x16xf32>
    %278 = vector.extract_strided_slice %0 {offsets = [21, 0], sizes = [1, 16], strides = [1, 1]} : vector<27x16xf32> to vector<1x16xf32>
    %279 = vector.shape_cast %278 : vector<1x16xf32> to vector<1x1x16xf32>
    %280 = vector.broadcast %279 : vector<1x1x16xf32> to vector<8x8x16xf32>
    %281 = arith.mulf %277, %280 : vector<8x8x16xf32>
    %282 = arith.addf %276, %281 : vector<8x8x16xf32>
    %c1_122 = arith.constant 1 : index
    %c1_123 = arith.constant 1 : index
    %c0_124 = arith.constant 0 : index
    %283 = vector.load %arg12[%c1_122, %c1_123, %c0_124] : memref<10x10x16xf32, #tpu.memory_space<vmem>>, vector<8x8x16xf32>
    %284 = vector.extract_strided_slice %0 {offsets = [22, 0], sizes = [1, 16], strides = [1, 1]} : vector<27x16xf32> to vector<1x16xf32>
    %285 = vector.shape_cast %284 : vector<1x16xf32> to vector<1x1x16xf32>
    %286 = vector.broadcast %285 : vector<1x1x16xf32> to vector<8x8x16xf32>
    %287 = arith.mulf %283, %286 : vector<8x8x16xf32>
    %288 = arith.addf %282, %287 : vector<8x8x16xf32>
    %c1_125 = arith.constant 1 : index
    %c2_126 = arith.constant 2 : index
    %c0_127 = arith.constant 0 : index
    %289 = vector.load %arg12[%c1_125, %c2_126, %c0_127] : memref<10x10x16xf32, #tpu.memory_space<vmem>>, vector<8x8x16xf32>
    %290 = vector.extract_strided_slice %0 {offsets = [23, 0], sizes = [1, 16], strides = [1, 1]} : vector<27x16xf32> to vector<1x16xf32>
    %291 = vector.shape_cast %290 : vector<1x16xf32> to vector<1x1x16xf32>
    %292 = vector.broadcast %291 : vector<1x1x16xf32> to vector<8x8x16xf32>
    %293 = arith.mulf %289, %292 : vector<8x8x16xf32>
    %294 = arith.addf %288, %293 : vector<8x8x16xf32>
    %c2_128 = arith.constant 2 : index
    %c0_129 = arith.constant 0 : index
    %c0_130 = arith.constant 0 : index
    %295 = vector.load %arg12[%c2_128, %c0_129, %c0_130] : memref<10x10x16xf32, #tpu.memory_space<vmem>>, vector<8x8x16xf32>
    %296 = vector.extract_strided_slice %0 {offsets = [24, 0], sizes = [1, 16], strides = [1, 1]} : vector<27x16xf32> to vector<1x16xf32>
    %297 = vector.shape_cast %296 : vector<1x16xf32> to vector<1x1x16xf32>
    %298 = vector.broadcast %297 : vector<1x1x16xf32> to vector<8x8x16xf32>
    %299 = arith.mulf %295, %298 : vector<8x8x16xf32>
    %300 = arith.addf %294, %299 : vector<8x8x16xf32>
    %c2_131 = arith.constant 2 : index
    %c1_132 = arith.constant 1 : index
    %c0_133 = arith.constant 0 : index
    %301 = vector.load %arg12[%c2_131, %c1_132, %c0_133] : memref<10x10x16xf32, #tpu.memory_space<vmem>>, vector<8x8x16xf32>
    %302 = vector.extract_strided_slice %0 {offsets = [25, 0], sizes = [1, 16], strides = [1, 1]} : vector<27x16xf32> to vector<1x16xf32>
    %303 = vector.shape_cast %302 : vector<1x16xf32> to vector<1x1x16xf32>
    %304 = vector.broadcast %303 : vector<1x1x16xf32> to vector<8x8x16xf32>
    %305 = arith.mulf %301, %304 : vector<8x8x16xf32>
    %306 = arith.addf %300, %305 : vector<8x8x16xf32>
    %c2_134 = arith.constant 2 : index
    %c2_135 = arith.constant 2 : index
    %c0_136 = arith.constant 0 : index
    %307 = vector.load %arg12[%c2_134, %c2_135, %c0_136] : memref<10x10x16xf32, #tpu.memory_space<vmem>>, vector<8x8x16xf32>
    %308 = vector.extract_strided_slice %0 {offsets = [26, 0], sizes = [1, 16], strides = [1, 1]} : vector<27x16xf32> to vector<1x16xf32>
    %309 = vector.shape_cast %308 : vector<1x16xf32> to vector<1x1x16xf32>
    %310 = vector.broadcast %309 : vector<1x1x16xf32> to vector<8x8x16xf32>
    %311 = arith.mulf %307, %310 : vector<8x8x16xf32>
    %312 = arith.addf %306, %311 : vector<8x8x16xf32>
    %cst_137 = arith.constant 0.000000e+00 : f32
    %cst_138 = arith.constant 6.000000e+00 : f32
    %313 = vector.broadcast %cst_137 : f32 to vector<8x8x16xf32>
    %314 = arith.maximumf %313, %312 : vector<8x8x16xf32>
    %315 = vector.broadcast %cst_138 : f32 to vector<8x8x16xf32>
    %316 = arith.minimumf %315, %314 : vector<8x8x16xf32>
    %317 = vector.shape_cast %316 : vector<8x8x16xf32> to vector<64x16xf32>
    %318 = arith.truncf %317 : vector<64x16xf32> to vector<64x16xbf16>
    %c0_139 = arith.constant 0 : index
    %c0_140 = arith.constant 0 : index
    %319 = vector.load %arg9[%c0_139, %c0_140] : memref<16x4xbf16, #tpu.memory_space<vmem>>, vector<16x4xbf16>
    %cst_141 = arith.constant dense<0.000000e+00> : vector<64x4xf32>
    %320 = tpu.matmul %318, %319, %cst_141 {dimension_numbers = #tpu.dot_dimension_numbers<[1], [0], [0], [1], [0, 0, 1, 1], [], []>} : vector<64x16xbf16>, vector<16x4xbf16>, vector<64x4xf32> -> vector<64x4xf32>
    %c0_142 = arith.constant 0 : index
    %c0_143 = arith.constant 0 : index
    %321 = vector.load %arg10[%c0_142, %c0_143] : memref<1x4xf32, #tpu.memory_space<vmem>>, vector<1x4xf32>
    %322 = vector.broadcast %321 : vector<1x4xf32> to vector<64x4xf32>
    %323 = arith.addf %320, %322 : vector<64x4xf32>
    %324 = vector.shape_cast %323 : vector<64x4xf32> to vector<8x8x4xf32>
    %c0_144 = arith.constant 0 : index
    %c0_145 = arith.constant 0 : index
    %c0_146 = arith.constant 0 : index
    %c0_147 = arith.constant 0 : index
    %c0_148 = arith.constant 0 : index
    %325 = vector.load %arg3[%c0_144, %c0_145, %c0_146, %c0_147, %c0_148] : memref<1x1x8x8x4xf32, #tpu.memory_space<vmem>>, vector<1x1x8x8x4xf32>
    %326 = vector.shape_cast %325 : vector<1x1x8x8x4xf32> to vector<8x8x4xf32>
    %327 = arith.addf %324, %326 : vector<8x8x4xf32>
    %c0_149 = arith.constant 0 : index
    %c0_150 = arith.constant 0 : index
    %c0_151 = arith.constant 0 : index
    %c0_152 = arith.constant 0 : index
    %c0_153 = arith.constant 0 : index
    %328 = vector.load %arg11[%c0_149, %c0_150, %c0_151, %c0_152, %c0_153] : memref<1x1x8x8x4xf32, #tpu.memory_space<vmem>>, vector<1x1x8x8x4xf32>
    %329 = vector.shape_cast %328 : vector<1x1x8x8x4xf32> to vector<8x8x4xf32>
    %330 = vector.shape_cast %327 : vector<8x8x4xf32> to vector<1x1x8x8x4xf32>
    tpu.vector_store %arg11[%c0_149, %c0_150, %c0_151, %c0_152, %c0_153], %330 {strides = array<i32>} : memref<1x1x8x8x4xf32, #tpu.memory_space<vmem>>, vector<1x1x8x8x4xf32>,
    return
  }
  func.func @transform_0(%arg0: i32, %arg1: i32) -> (i32, i32, i32, i32, i32) {
    %c1_i32 = arith.constant 1 : i32
    %0 = arith.muli %arg1, %c1_i32 : i32
    %c1_i32_0 = arith.constant 1 : i32
    %1 = arith.subi %0, %c1_i32_0 : i32
    %c0_i32 = arith.constant 0 : i32
    %2 = arith.addi %1, %c0_i32 : i32
    %c0_i32_1 = arith.constant 0 : i32
    %c7_i32 = arith.constant 7 : i32
    %3 = arith.maxsi %c0_i32_1, %2 : i32
    %4 = arith.minsi %c7_i32, %3 : i32
    %c0_i32_2 = arith.constant 0 : i32
    %c0_i32_3 = arith.constant 0 : i32
    %c0_i32_4 = arith.constant 0 : i32
    %c0_i32_5 = arith.constant 0 : i32
    return %arg0, %4, %c0_i32_2, %c0_i32_3, %c0_i32_4 : i32, i32, i32, i32, i32
  }
  func.func @transform_1(%arg0: i32, %arg1: i32) -> (i32, i32, i32, i32, i32) {
    %c1_i32 = arith.constant 1 : i32
    %0 = arith.muli %arg1, %c1_i32 : i32
    %c1_i32_0 = arith.constant 1 : i32
    %1 = arith.subi %0, %c1_i32_0 : i32
    %c1_i32_1 = arith.constant 1 : i32
    %2 = arith.addi %1, %c1_i32_1 : i32
    %c0_i32 = arith.constant 0 : i32
    %c7_i32 = arith.constant 7 : i32
    %3 = arith.maxsi %c0_i32, %2 : i32
    %4 = arith.minsi %c7_i32, %3 : i32
    %c0_i32_2 = arith.constant 0 : i32
    %c0_i32_3 = arith.constant 0 : i32
    %c0_i32_4 = arith.constant 0 : i32
    %c0_i32_5 = arith.constant 0 : i32
    return %arg0, %4, %c0_i32_2, %c0_i32_3, %c0_i32_4 : i32, i32, i32, i32, i32
  }
  func.func @transform_2(%arg0: i32, %arg1: i32) -> (i32, i32, i32, i32, i32) {
    %c1_i32 = arith.constant 1 : i32
    %0 = arith.muli %arg1, %c1_i32 : i32
    %c1_i32_0 = arith.constant 1 : i32
    %1 = arith.subi %0, %c1_i32_0 : i32
    %c2_i32 = arith.constant 2 : i32
    %2 = arith.addi %1, %c2_i32 : i32
    %c0_i32 = arith.constant 0 : i32
    %c7_i32 = arith.constant 7 : i32
    %3 = arith.maxsi %c0_i32, %2 : i32
    %4 = arith.minsi %c7_i32, %3 : i32
    %c0_i32_1 = arith.constant 0 : i32
    %c0_i32_2 = arith.constant 0 : i32
    %c0_i32_3 = arith.constant 0 : i32
    %c0_i32_4 = arith.constant 0 : i32
    return %arg0, %4, %c0_i32_1, %c0_i32_2, %c0_i32_3 : i32, i32, i32, i32, i32
  }
  func.func @transform_3(%arg0: i32, %arg1: i32) -> (i32, i32) {
    %c0_i32 = arith.constant 0 : i32
    %c0_i32_0 = arith.constant 0 : i32
    %c0_i32_1 = arith.constant 0 : i32
    return %c0_i32, %c0_i32_0 : i32, i32
  }
  func.func @transform_4(%arg0: i32, %arg1: i32) -> (i32, i32) {
    %c0_i32 = arith.constant 0 : i32
    %c0_i32_0 = arith.constant 0 : i32
    %c0_i32_1 = arith.constant 0 : i32
    return %c0_i32, %c0_i32_0 : i32, i32
  }
  func.func @transform_5(%arg0: i32, %arg1: i32) -> (i32, i32) {
    %c0_i32 = arith.constant 0 : i32
    %c0_i32_0 = arith.constant 0 : i32
    %c0_i32_1 = arith.constant 0 : i32
    return %c0_i32, %c0_i32_0 : i32, i32
  }
  func.func @transform_6(%arg0: i32, %arg1: i32) -> (i32, i32) {
    %c0_i32 = arith.constant 0 : i32
    %c0_i32_0 = arith.constant 0 : i32
    %c0_i32_1 = arith.constant 0 : i32
    return %c0_i32, %c0_i32_0 : i32, i32
  }
  func.func @transform_7(%arg0: i32, %arg1: i32) -> (i32, i32) {
    %c0_i32 = arith.constant 0 : i32
    %c0_i32_0 = arith.constant 0 : i32
    %c0_i32_1 = arith.constant 0 : i32
    return %c0_i32, %c0_i32_0 : i32, i32
  }
  func.func @transform_8(%arg0: i32, %arg1: i32) -> (i32, i32) {
    %c0_i32 = arith.constant 0 : i32
    %c0_i32_0 = arith.constant 0 : i32
    %c0_i32_1 = arith.constant 0 : i32
    return %c0_i32, %c0_i32_0 : i32, i32
  }
  func.func @transform_9(%arg0: i32, %arg1: i32) -> (i32, i32, i32, i32, i32) {
    %c0_i32 = arith.constant 0 : i32
    %c0_i32_0 = arith.constant 0 : i32
    %c0_i32_1 = arith.constant 0 : i32
    %c0_i32_2 = arith.constant 0 : i32
    return %arg0, %arg1, %c0_i32, %c0_i32_0, %c0_i32_1 : i32, i32, i32, i32, i32
  }
}

</mosaic_0001>

<llo_original>
// kernel: tpu_custom_call.1
$region0: #{tpu_custom_call.1}
  #allocation0 [shape = 'u32[]', space=smem, size = 0x4, offset = 0x4, fixed_abs, tag = 'smem constant byte address 0x4 - core index']
  #allocation1 [shape = 'u32[144,128]{1,0:T(1,128)}', space=vmem, size = 0x12000, scoped, tag = 'internal scratch']
  #allocation2 [shape = 'f32[10,10,16]{2,1,0:T(8,128)}', space=vmem, size = 0x14000, scoped, tag = 'scratch operand']
  %s0 = inlined_call_operand.hbm [shape: f32[2,8,8,8,4], index: 0, kind: input, shape index: {}]
  %s1 = inlined_call_operand.hbm [shape: f32[2,8,8,8,4], index: 1, kind: input, shape index: {}]
  %s2 = inlined_call_operand.hbm [shape: f32[2,8,8,8,4], index: 2, kind: input, shape index: {}]
  %s3 = inlined_call_operand.hbm [shape: f32[4,16], index: 3, kind: input, shape index: {}]
  %s4 = inlined_call_operand.hbm [shape: f32[1,16], index: 4, kind: input, shape index: {}]
  %s5 = inlined_call_operand.hbm [shape: f32[27,16], index: 5, kind: input, shape index: {}]
  %s6 = inlined_call_operand.hbm [shape: f32[1,16], index: 6, kind: input, shape index: {}]
  %s7 = inlined_call_operand.hbm [shape: bf16[16,4], index: 7, kind: input, shape index: {}]
  %s8 = inlined_call_operand.hbm [shape: f32[1,4], index: 8, kind: input, shape index: {}]
  %s9 = inlined_call_operand.hbm [shape: f32[2,8,8,8,4], index: 9, kind: output, shape index: {}]
  %s10 = sld [smem:[#allocation0]]
  $region105: #{tpu_custom_call.1} parent=0
    _
  %s12 = ssub.s32 1, %s10
  %s13 = scalar_select 0, %s12, %s10
  $region1: #{tpu_custom_call.1} parent=0
    #allocation3 [shape = 'u8[65536]{0}', space=vmem, size = 0x10000, scoped, tag = 'input window, operand 0']
    #allocation4 [shape = 's32[2]{0}', space=sflag, size = 0x8, scoped, tag = 'scoped memory for tpu_custom_call.1']
    #allocation5 [shape = 's32[2]{0}', space=sflag, size = 0x8, scoped, tag = 'scoped memory for tpu_custom_call.1']
    #allocation6 [shape = 'u8[65536]{0}', space=vmem, size = 0x10000, scoped, tag = 'input window, operand 1']
    #allocation7 [shape = 's32[2]{0}', space=sflag, size = 0x8, scoped, tag = 'scoped memory for tpu_custom_call.1']
    #allocation8 [shape = 'u8[65536]{0}', space=vmem, size = 0x10000, scoped, tag = 'input window, operand 2']
    #allocation9 [shape = 'u8[2048]{0}', space=vmem, size = 0x800, scoped, tag = 'input window, operand 3, single buffered']
    #allocation10 [shape = 's32[1]{0}', space=sflag, size = 0x4, scoped, tag = 'scoped memory for tpu_custom_call.1']
    #allocation11 [shape = 'u8[512]{0}', space=vmem, size = 0x400, scoped, tag = 'input window, operand 4, single buffered']
    #allocation12 [shape = 'u8[16384]{0}', space=vmem, size = 0x4000, scoped, tag = 'input window, operand 5, single buffered']
    #allocation13 [shape = 's32[1]{0}', space=sflag, size = 0x4, scoped, tag = 'scoped memory for tpu_custom_call.1']
    #allocation14 [shape = 'u8[512]{0}', space=vmem, size = 0x400, scoped, tag = 'input window, operand 6, single buffered']
    #allocation15 [shape = 'u8[4096]{0}', space=vmem, size = 0x1000, scoped, tag = 'input window, operand 7, single buffered']
    #allocation16 [shape = 's32[1]{0}', space=sflag, size = 0x4, scoped, tag = 'scoped memory for tpu_custom_call.1']
    #allocation17 [shape = 'u8[512]{0}', space=vmem, size = 0x400, scoped, tag = 'input window, operand 8, single buffered']
    #allocation18 [shape = 'u8[65536]{0}', space=vmem, size = 0x10000, scoped, tag = 'output window, operand 0']
    %14 = vsyncpa [#allocation4], 0
    %s15 = scalar_lea.sflag [#allocation4], 1
    %16 = vsyncpa %s15, 0
    %17 = vsyncpa [#allocation7], 0
    %s18 = scalar_lea.sflag [#allocation7], 1
    %19 = vsyncpa %s18, 0
    %20 = vsyncpa [#allocation10], 0
    %21 = vsyncpa [#allocation13], 0
    %22 = vsyncpa [#allocation16], 0
    %23 = vsyncpa [#allocation5], 0
    %s24 = scalar_lea.sflag [#allocation5], 1
    %25 = vsyncpa %s24, 0
    loop: start=0, step=1, limit=18
    $region2: #{tpu_custom_call.1} parent=1 // loop_pre_header
      _
    $region3: #{tpu_custom_call.1} parent=1 // loop_header
      %s27 = sphi 0, %s31
      %p28 = scmp.ge.s32.totalorder %s27, 18
      %s34 = sphi 0, %s46
      %s35 = sphi 0, %s42
      %s36 = sphi 0, %s34
      %s37 = sphi 0, %s35
      %s38 = sphi 0, %s36
      %s39 = sphi 0, %s37
      %s61 = sphi 0, %s63
      %s64 = sphi 0, %s61
      %s65 = sphi 0, %s64
      %s81 = sphi 0, %s65
      %s97 = sphi 0, %s99
      %s100 = sphi 0, %s97
      %s101 = sphi 0, %s100
      %s117 = sphi 0, %s101
      %s135 = sphi 0, %s137
      %s138 = sphi 0, %s135
      %s139 = sphi 0, %s138
      %s155 = sphi 0, %s139
      %s159 = sphi 0, %s159
      %s161 = sphi 0, %s159
      %s162 = sphi 0, %s161
      %s176 = sphi 0, %s162
      %s180 = sphi 0, %s180
      %s182 = sphi 0, %s180
      %s183 = sphi 0, %s182
      %s197 = sphi 0, %s183
      %s201 = sphi 0, %s201
      %s203 = sphi 0, %s201
      %s204 = sphi 0, %s203
      %s218 = sphi 0, %s204
      %s222 = sphi 0, %s222
      %s224 = sphi 0, %s222
      %s225 = sphi 0, %s224
      %s239 = sphi 0, %s225
      %s243 = sphi 0, %s243
      %s245 = sphi 0, %s243
      %s246 = sphi 0, %s245
      %s260 = sphi 0, %s246
      %s264 = sphi 0, %s264
      %s266 = sphi 0, %s264
      %s267 = sphi 0, %s266
      %s281 = sphi 0, %s267
      %s289 = sphi 0, %s291
      %s292 = sphi 0, %s289
      %s293 = sphi 0, %s292
      %s309 = sphi 0, %s293
    $region4: #{tpu_custom_call.1} parent=1 // loop_header_branch
      %30 = sbr.rel (%p28) target = $region8
    $region5: #{tpu_custom_call.1} parent=1 // loop_body
      %s32 = ssub.s32 %s27, 1
      %s33 = ssub.s32 %s27, 2
      %s40 = sadd.s32 1, %s35
      %p41 = scmp.ge.s32.totalorder %s40, 8
      %s42 = scalar_select %p41, 0, %s40
      %s43 = sadd.s32 1, %s34
      %s44 = scalar_select %p41, %s43, %s34
      %p45 = scmp.ge.s32.totalorder %s44, 2
      %s46 = scalar_select %p45, 0, %s44
      %s47 = ssub.s32 %s35, 1
      %p48 = scmp.gt.s32.totalorder %s47, 0
      %s49 = scalar_select %p48, %s47, 0
      %p50 = scmp.lt.s32.totalorder %s49, 7
      %s51 = scalar_select %p50, %s49, 7
      %s52 = ssub.s32 %s42, 1
      %p53 = scmp.gt.s32.totalorder %s52, 0
      %s54 = scalar_select %p53, %s52, 0
      %p55 = scmp.lt.s32.totalorder %s54, 7
      %s56 = scalar_select %p55, %s54, 7
      %s57 = ssub.s32 %s34, %s46
      %s58 = ssub.s32 %s51, %s56
      %s59 = sor.u32 %s57, %s58
      %p60 = scmp.eq.s32.totalorder %s59, 0
      %s62 = sadd.s32 %s61, 1
      %s63 = scalar_select %p60, %s61, %s62
      %p66 = pneg %p60
      %p67 = scmp.eq.s32.totalorder %s27, 15
      %p68 = por %p66, %p67
      %p69 = scmp.ne.s32.totalorder %s61, %s64
      %p70 = scmp.eq.s32.totalorder %s27, 0
      %p71 = por %p69, %p70
      %p72 = scmp.ne.s32.totalorder %s61, %s64
      %p73 = scmp.eq.s32.totalorder %s32, 15
      %p74 = por %p72, %p73
      %p75 = scmp.ne.s32.totalorder %s64, %s65
      %p76 = scmp.eq.s32.totalorder %s32, 0
      %p77 = por %p75, %p76
      %p78 = scmp.ne.s32.totalorder %s64, %s65
      %p79 = scmp.eq.s32.totalorder %s33, 15
      %p80 = por %p78, %p79
      %p82 = scmp.ne.s32.totalorder %s65, %s81
      %p83 = scmp.eq.s32.totalorder %s33, 0
      %p84 = por %p82, %p83
      %p85 = scmp.gt.s32.totalorder %s35, 0
      %s86 = scalar_select %p85, %s35, 0
      %p87 = scmp.lt.s32.totalorder %s86, 7
      %s88 = scalar_select %p87, %s86, 7
      %p89 = scmp.gt.s32.totalorder %s42, 0
      %s90 = scalar_select %p89, %s42, 0
      %p91 = scmp.lt.s32.totalorder %s90, 7
      %s92 = scalar_select %p91, %s90, 7
      %s93 = ssub.s32 %s34, %s46
      %s94 = ssub.s32 %s88, %s92
      %s95 = sor.u32 %s93, %s94
      %p96 = scmp.eq.s32.totalorder %s95, 0
      %s98 = sadd.s32 %s97, 1
      %s99 = scalar_select %p96, %s97, %s98
      %p102 = pneg %p96
      %p103 = scmp.eq.s32.totalorder %s27, 15
      %p104 = por %p102, %p103
      %p105 = scmp.ne.s32.totalorder %s97, %s100
      %p106 = scmp.eq.s32.totalorder %s27, 0
      %p107 = por %p105, %p106
      %p108 = scmp.ne.s32.totalorder %s97, %s100
      %p109 = scmp.eq.s32.totalorder %s32, 15
      %p110 = por %p108, %p109
      %p111 = scmp.ne.s32.totalorder %s100, %s101
      %p112 = scmp.eq.s32.totalorder %s32, 0
      %p113 = por %p111, %p112
      %p114 = scmp.ne.s32.totalorder %s100, %s101
      %p115 = scmp.eq.s32.totalorder %s33, 15
      %p116 = por %p114, %p115
      %p118 = scmp.ne.s32.totalorder %s101, %s117
      %p119 = scmp.eq.s32.totalorder %s33, 0
      %p120 = por %p118, %p119
      %s121 = sadd.s32 %s35, 1
      %p122 = scmp.gt.s32.totalorder %s121, 0
      %s123 = scalar_select %p122, %s121, 0
      %p124 = scmp.lt.s32.totalorder %s123, 7
      %s125 = scalar_select %p124, %s123, 7
      %s126 = sadd.s32 %s42, 1
      %p127 = scmp.gt.s32.totalorder %s126, 0
      %s128 = scalar_select %p127, %s126, 0
      %p129 = scmp.lt.s32.totalorder %s128, 7
      %s130 = scalar_select %p129, %s128, 7
      %s131 = ssub.s32 %s34, %s46
      %s132 = ssub.s32 %s125, %s130
      %s133 = sor.u32 %s131, %s132
      %p134 = scmp.eq.s32.totalorder %s133, 0
      %s136 = sadd.s32 %s135, 1
      %s137 = scalar_select %p134, %s135, %s136
      %p140 = pneg %p134
      %p141 = scmp.eq.s32.totalorder %s27, 15
      %p142 = por %p140, %p141
      %p143 = scmp.ne.s32.totalorder %s135, %s138
      %p144 = scmp.eq.s32.totalorder %s27, 0
      %p145 = por %p143, %p144
      %p146 = scmp.ne.s32.totalorder %s135, %s138
      %p147 = scmp.eq.s32.totalorder %s32, 15
      %p148 = por %p146, %p147
      %p149 = scmp.ne.s32.totalorder %s138, %s139
      %p150 = scmp.eq.s32.totalorder %s32, 0
      %p151 = por %p149, %p150
      %p152 = scmp.ne.s32.totalorder %s138, %s139
      %p153 = scmp.eq.s32.totalorder %s33, 15
      %p154 = por %p152, %p153
      %p156 = scmp.ne.s32.totalorder %s139, %s155
      %p157 = scmp.eq.s32.totalorder %s33, 0
      %p158 = por %p156, %p157
      %s160 = sadd.s32 %s159, 1
      %p163 = scmp.eq.s32.totalorder %s27, 15
      %p164 = scmp.ne.s32.totalorder %s159, %s161
      %p165 = scmp.eq.s32.totalorder %s27, 0
      %p166 = por %p164, %p165
      %p167 = scmp.ne.s32.totalorder %s159, %s161
      %p168 = scmp.eq.s32.totalorder %s32, 15
      %p169 = por %p167, %p168
      %p170 = scmp.ne.s32.totalorder %s161, %s162
      %p171 = scmp.eq.s32.totalorder %s32, 0
      %p172 = por %p170, %p171
      %p173 = scmp.ne.s32.totalorder %s161, %s162
      %p174 = scmp.eq.s32.totalorder %s33, 15
      %p175 = por %p173, %p174
      %p177 = scmp.ne.s32.totalorder %s162, %s176
      %p178 = scmp.eq.s32.totalorder %s33, 0
      %p179 = por %p177, %p178
      %s181 = sadd.s32 %s180, 1
      %p184 = scmp.eq.s32.totalorder %s27, 15
      %p185 = scmp.ne.s32.totalorder %s180, %s182
      %p186 = scmp.eq.s32.totalorder %s27, 0
      %p187 = por %p185, %p186
      %p188 = scmp.ne.s32.totalorder %s180, %s182
      %p189 = scmp.eq.s32.totalorder %s32, 15
      %p190 = por %p188, %p189
      %p191 = scmp.ne.s32.totalorder %s182, %s183
      %p192 = scmp.eq.s32.totalorder %s32, 0
      %p193 = por %p191, %p192
      %p194 = scmp.ne.s32.totalorder %s182, %s183
      %p195 = scmp.eq.s32.totalorder %s33, 15
      %p196 = por %p194, %p195
      %p198 = scmp.ne.s32.totalorder %s183, %s197
      %p199 = scmp.eq.s32.totalorder %s33, 0
      %p200 = por %p198, %p199
      %s202 = sadd.s32 %s201, 1
      %p205 = scmp.eq.s32.totalorder %s27, 15
      %p206 = scmp.ne.s32.totalorder %s201, %s203
      %p207 = scmp.eq.s32.totalorder %s27, 0
      %p208 = por %p206, %p207
      %p209 = scmp.ne.s32.totalorder %s201, %s203
      %p210 = scmp.eq.s32.totalorder %s32, 15
      %p211 = por %p209, %p210
      %p212 = scmp.ne.s32.totalorder %s203, %s204
      %p213 = scmp.eq.s32.totalorder %s32, 0
      %p214 = por %p212, %p213
      %p215 = scmp.ne.s32.totalorder %s203, %s204
      %p216 = scmp.eq.s32.totalorder %s33, 15
      %p217 = por %p215, %p216
      %p219 = scmp.ne.s32.totalorder %s204, %s218
      %p220 = scmp.eq.s32.totalorder %s33, 0
      %p221 = por %p219, %p220
      %s223 = sadd.s32 %s222, 1
      %p226 = scmp.eq.s32.totalorder %s27, 15
      %p227 = scmp.ne.s32.totalorder %s222, %s224
      %p228 = scmp.eq.s32.totalorder %s27, 0
      %p229 = por %p227, %p228
      %p230 = scmp.ne.s32.totalorder %s222, %s224
      %p231 = scmp.eq.s32.totalorder %s32, 15
      %p232 = por %p230, %p231
      %p233 = scmp.ne.s32.totalorder %s224, %s225
      %p234 = scmp.eq.s32.totalorder %s32, 0
      %p235 = por %p233, %p234
      %p236 = scmp.ne.s32.totalorder %s224, %s225
      %p237 = scmp.eq.s32.totalorder %s33, 15
      %p238 = por %p236, %p237
      %p240 = scmp.ne.s32.totalorder %s225, %s239
      %p241 = scmp.eq.s32.totalorder %s33, 0
      %p242 = por %p240, %p241
      %s244 = sadd.s32 %s243, 1
      %p247 = scmp.eq.s32.totalorder %s27, 15
      %p248 = scmp.ne.s32.totalorder %s243, %s245
      %p249 = scmp.eq.s32.totalorder %s27, 0
      %p250 = por %p248, %p249
      %p251 = scmp.ne.s32.totalorder %s243, %s245
      %p252 = scmp.eq.s32.totalorder %s32, 15
      %p253 = por %p251, %p252
      %p254 = scmp.ne.s32.totalorder %s245, %s246
      %p255 = scmp.eq.s32.totalorder %s32, 0
      %p256 = por %p254, %p255
      %p257 = scmp.ne.s32.totalorder %s245, %s246
      %p258 = scmp.eq.s32.totalorder %s33, 15
      %p259 = por %p257, %p258
      %p261 = scmp.ne.s32.totalorder %s246, %s260
      %p262 = scmp.eq.s32.totalorder %s33, 0
      %p263 = por %p261, %p262
      %s265 = sadd.s32 %s264, 1
      %p268 = scmp.eq.s32.totalorder %s27, 15
      %p269 = scmp.ne.s32.totalorder %s264, %s266
      %p270 = scmp.eq.s32.totalorder %s27, 0
      %p271 = por %p269, %p270
      %p272 = scmp.ne.s32.totalorder %s264, %s266
      %p273 = scmp.eq.s32.totalorder %s32, 15
      %p274 = por %p272, %p273
      %p275 = scmp.ne.s32.totalorder %s266, %s267
      %p276 = scmp.eq.s32.totalorder %s32, 0
      %p277 = por %p275, %p276
      %p278 = scmp.ne.s32.totalorder %s266, %s267
      %p279 = scmp.eq.s32.totalorder %s33, 15
      %p280 = por %p278, %p279
      %p282 = scmp.ne.s32.totalorder %s267, %s281
      %p283 = scmp.eq.s32.totalorder %s33, 0
      %p284 = por %p282, %p283
      %s285 = ssub.s32 %s34, %s46
      %s286 = ssub.s32 %s35, %s42
      %s287 = sor.u32 %s285, %s286
      %p288 = scmp.eq.s32.totalorder %s287, 0
      %s290 = sadd.s32 %s289, 1
      %s291 = scalar_select %p288, %s289, %s290
      %p294 = pneg %p288
      %p295 = scmp.eq.s32.totalorder %s27, 15
      %p296 = por %p294, %p295
      %p297 = scmp.ne.s32.totalorder %s289, %s292
      %p298 = scmp.eq.s32.totalorder %s27, 0
      %p299 = por %p297, %p298
      %p300 = scmp.ne.s32.totalorder %s289, %s292
      %p301 = scmp.eq.s32.totalorder %s32, 15
      %p302 = por %p300, %p301
      %p303 = scmp.ne.s32.totalorder %s292, %s293
      %p304 = scmp.eq.s32.totalorder %s32, 0
      %p305 = por %p303, %p304
      %p306 = scmp.ne.s32.totalorder %s292, %s293
      %p307 = scmp.eq.s32.totalorder %s33, 15
      %p308 = por %p306, %p307
      %p310 = scmp.ne.s32.totalorder %s293, %s309
      %p311 = scmp.eq.s32.totalorder %s33, 0
      %p312 = por %p310, %p311
      %p313 = scmp.le.s32.totalorder 1, %s27
      %p314 = scmp.lt.s32.totalorder %s27, 17
      %p315 = pnand %p313, %p314
      %p316 = pneg %p315
      // Predicated region
      $region9: #{tpu_custom_call.1} parent=5 // pred_check
        _
      $region10: #{tpu_custom_call.1} parent=5 // pred_check_branch
        %318 = sbr.rel (%p315) target = $region12
      $region11: #{tpu_custom_call.1} parent=5 // pred_region
        %s319 = ssub.s32 %s27, 1
        // Predicated region
        $region13: #{tpu_custom_call.1} parent=11 // pred_check
          %p320 = pneg %p172
        $region14: #{tpu_custom_call.1} parent=11 // pred_check_branch
          %322 = sbr.rel (%p320) target = $region16
        $region15: #{tpu_custom_call.1} parent=11 // pred_region
          %s324 = ssub.s32 64, 64
          %325 = vsyncadd [#allocation10], %s324
          %s327 = sshll.u32 [#allocation9], 4
          %s328 = int_to_ptr.vmem [resolvable:$true] %s327
          %330 = dma.hbm_to_vmem [thread:$0]  %s3, 64, %s328, [#allocation10]
        $region16: #{tpu_custom_call.1} parent=11 // pred_fallthru
          _
        // Predicated region
        $region17: #{tpu_custom_call.1} parent=11 // pred_check
          %p331 = pneg %p193
        $region18: #{tpu_custom_call.1} parent=11 // pred_check_branch
          %333 = sbr.rel (%p331) target = $region20
        $region19: #{tpu_custom_call.1} parent=11 // pred_region
          %s335 = ssub.s32 16, 16
          %336 = vsyncadd [#allocation10], %s335
          %s338 = sshll.u32 [#allocation11], 4
          %s339 = int_to_ptr.vmem [resolvable:$true] %s338
          %341 = dma.hbm_to_vmem [thread:$0]  %s4, 16, %s339, [#allocation10]
        $region20: #{tpu_custom_call.1} parent=11 // pred_fallthru
          _
        // Predicated region
        $region21: #{tpu_custom_call.1} parent=11 // pred_check
          %p342 = pneg %p214
        $region22: #{tpu_custom_call.1} parent=11 // pred_check_branch
          %344 = sbr.rel (%p342) target = $region24
        $region23: #{tpu_custom_call.1} parent=11 // pred_region
          %s346 = ssub.s32 512, 512
          %347 = vsyncadd [#allocation13], %s346
          %s348 = sshll.u32 [#allocation12], 4
          %s349 = int_to_ptr.vmem [resolvable:$true] %s348
          %354 = dma.hbm_to_vmem [thread:$0]  %s5, 512, %s349, [#allocation13], 128, 128, 8
        $region24: #{tpu_custom_call.1} parent=11 // pred_fallthru
          _
        // Predicated region
        $region25: #{tpu_custom_call.1} parent=11 // pred_check
          %p355 = pneg %p235
        $region26: #{tpu_custom_call.1} parent=11 // pred_check_branch
          %357 = sbr.rel (%p355) target = $region28
        $region27: #{tpu_custom_call.1} parent=11 // pred_region
          %s359 = ssub.s32 16, 16
          %360 = vsyncadd [#allocation13], %s359
          %s362 = sshll.u32 [#allocation14], 4
          %s363 = int_to_ptr.vmem [resolvable:$true] %s362
          %365 = dma.hbm_to_vmem [thread:$0]  %s6, 16, %s363, [#allocation13]
        $region28: #{tpu_custom_call.1} parent=11 // pred_fallthru
          _
        // Predicated region
        $region29: #{tpu_custom_call.1} parent=11 // pred_check
          %p366 = pneg %p256
        $region30: #{tpu_custom_call.1} parent=11 // pred_check_branch
          %368 = sbr.rel (%p366) target = $region32
        $region31: #{tpu_custom_call.1} parent=11 // pred_region
          %s370 = ssub.s32 128, 128
          %371 = vsyncadd [#allocation16], %s370
          %s372 = sshll.u32 [#allocation15], 4
          %s373 = int_to_ptr.vmem [resolvable:$true] %s372
          %378 = dma.hbm_to_vmem [thread:$0]  %s7, 128, %s373, [#allocation16], 64, 64, 4
        $region32: #{tpu_custom_call.1} parent=11 // pred_fallthru
          _
        // Predicated region
        $region33: #{tpu_custom_call.1} parent=11 // pred_check
          %p379 = pneg %p277
        $region34: #{tpu_custom_call.1} parent=11 // pred_check_branch
          %381 = sbr.rel (%p379) target = $region36
        $region35: #{tpu_custom_call.1} parent=11 // pred_region
          %s383 = ssub.s32 16, 16
          %384 = vsyncadd [#allocation16], %s383
          %s386 = sshll.u32 [#allocation17], 4
          %s387 = int_to_ptr.vmem [resolvable:$true] %s386
          %389 = dma.hbm_to_vmem [thread:$0]  %s8, 16, %s387, [#allocation16]
        $region36: #{tpu_custom_call.1} parent=11 // pred_fallthru
          _
      $region12: #{tpu_custom_call.1} parent=5 // pred_fallthru
        _
      %p390 = scmp.lt.s32.totalorder %s27, 16
      // Predicated region
      $region37: #{tpu_custom_call.1} parent=5 // pred_check
        %p391 = pneg %p390
      $region38: #{tpu_custom_call.1} parent=5 // pred_check_branch
        %393 = sbr.rel (%p391) target = $region40
      $region39: #{tpu_custom_call.1} parent=5 // pred_region
        // Predicated region
        $region41: #{tpu_custom_call.1} parent=39 // pred_check
          %p394 = pneg %p71
        $region42: #{tpu_custom_call.1} parent=39 // pred_check_branch
          %396 = sbr.rel (%p394) target = $region44
        $region43: #{tpu_custom_call.1} parent=39 // pred_region
          %s397 = sand.u32 %s61, 1
          %s398 = scalar_lea.sflag [#allocation4], %s397
          %s399 = sand.u32 %s61, 1
          %s400 = smul.addr %s399, 64
          %s401 = scalar_lea.vmem [#allocation3], %s400
          %s402 = ssub.s32 %s35, 1
          %p403 = scmp.gt.s32.totalorder %s402, 0
          %s404 = scalar_select %p403, %s402, 0
          %p405 = scmp.lt.s32.totalorder %s404, 7
          %s406 = scalar_select %p405, %s404, 7
          %s408 = ssub.s32 1024, 1024
          %409 = vsyncadd %s398, %s408
          %s410 = smul.addr %s406, 8
          %s411 = smul.addr %s34, 64
          %s412 = sadd.s32 %s410, %s411
          %s413 = smul.addr %s412, 128
          %s414 = scalar_lea.hbm %s0, %s413
          %s415 = sshll.u32 %s401, 4
          %s416 = int_to_ptr.vmem [resolvable:$true] %s415
          %421 = dma.hbm_to_vmem [thread:$0]  %s414, 1024, %s416, %s398, 128, 128, 8
        $region44: #{tpu_custom_call.1} parent=39 // pred_fallthru
          _
        // Predicated region
        $region45: #{tpu_custom_call.1} parent=39 // pred_check
          %p422 = pneg %p107
        $region46: #{tpu_custom_call.1} parent=39 // pred_check_branch
          %424 = sbr.rel (%p422) target = $region48
        $region47: #{tpu_custom_call.1} parent=39 // pred_region
          %s425 = sand.u32 %s27, 1
          %s426 = scalar_lea.sflag [#allocation7], %s425
          %s427 = sand.u32 %s97, 1
          %s428 = smul.addr %s427, 64
          %s429 = scalar_lea.vmem [#allocation6], %s428
          %p430 = scmp.gt.s32.totalorder %s35, 0
          %s431 = scalar_select %p430, %s35, 0
          %p432 = scmp.lt.s32.totalorder %s431, 7
          %s433 = scalar_select %p432, %s431, 7
          %s435 = ssub.s32 1024, 1024
          %436 = vsyncadd %s426, %s435
          %s437 = smul.addr %s433, 8
          %s438 = smul.addr %s34, 64
          %s439 = sadd.s32 %s437, %s438
          %s440 = smul.addr %s439, 128
          %s441 = scalar_lea.hbm %s1, %s440
          %s442 = sshll.u32 %s429, 4
          %s443 = int_to_ptr.vmem [resolvable:$true] %s442
          %448 = dma.hbm_to_vmem [thread:$0]  %s441, 1024, %s443, %s426, 128, 128, 8
        $region48: #{tpu_custom_call.1} parent=39 // pred_fallthru
          _
        // Predicated region
        $region49: #{tpu_custom_call.1} parent=39 // pred_check
          %p449 = pneg %p145
        $region50: #{tpu_custom_call.1} parent=39 // pred_check_branch
          %451 = sbr.rel (%p449) target = $region52
        $region51: #{tpu_custom_call.1} parent=39 // pred_region
          %s452 = sand.u32 %s27, 1
          %s453 = scalar_lea.sflag [#allocation7], %s452
          %s454 = sand.u32 %s135, 1
          %s455 = smul.addr %s454, 64
          %s456 = scalar_lea.vmem [#allocation8], %s455
          %s457 = sadd.s32 %s35, 1
          %p458 = scmp.gt.s32.totalorder %s457, 0
          %s459 = scalar_select %p458, %s457, 0
          %p460 = scmp.lt.s32.totalorder %s459, 7
          %s461 = scalar_select %p460, %s459, 7
          %s463 = ssub.s32 1024, 1024
          %464 = vsyncadd %s453, %s463
          %s465 = smul.addr %s461, 8
          %s466 = smul.addr %s34, 64
          %s467 = sadd.s32 %s465, %s466
          %s468 = smul.addr %s467, 128
          %s469 = scalar_lea.hbm %s2, %s468
          %s470 = sshll.u32 %s456, 4
          %s471 = int_to_ptr.vmem [resolvable:$true] %s470
          %476 = dma.hbm_to_vmem [thread:$0]  %s469, 1024, %s471, %s453, 128, 128, 8
        $region52: #{tpu_custom_call.1} parent=39 // pred_fallthru
          _
      $region40: #{tpu_custom_call.1} parent=5 // pred_fallthru
        _
      %p477 = scmp.le.s32.totalorder 1, %s27
      %p478 = scmp.lt.s32.totalorder %s27, 17
      %p479 = pnand %p477, %p478
      %p480 = pneg %p479
      // Predicated region
      $region53: #{tpu_custom_call.1} parent=5 // pred_check
        _
      $region54: #{tpu_custom_call.1} parent=5 // pred_check_branch
        %482 = sbr.rel (%p479) target = $region56
      $region55: #{tpu_custom_call.1} parent=5 // pred_region
        %s483 = ssub.s32 %s27, 1
        %s484 = sand.u32 %s64, 1
        %s485 = scalar_lea.sflag [#allocation4], %s484
        %s486 = sand.u32 %s64, 1
        %s487 = smul.addr %s486, 64
        %s488 = scalar_lea.vmem [#allocation3], %s487
        // Predicated region
        $region57: #{tpu_custom_call.1} parent=55 // pred_check
          %p489 = pneg %p77
        $region58: #{tpu_custom_call.1} parent=55 // pred_check_branch
          %491 = sbr.rel (%p489) target = $region60
        $region59: #{tpu_custom_call.1} parent=55 // pred_region
          %492 = dma.done %s485, 1024
        $region60: #{tpu_custom_call.1} parent=55 // pred_fallthru
          _
        %s493 = sand.u32 %s32, 1
        %s494 = scalar_lea.sflag [#allocation7], %s493
        %s495 = sand.u32 %s100, 1
        %s496 = smul.addr %s495, 64
        %s497 = scalar_lea.vmem [#allocation6], %s496
        // Predicated region
        $region61: #{tpu_custom_call.1} parent=55 // pred_check
          %p498 = pneg %p113
        $region62: #{tpu_custom_call.1} parent=55 // pred_check_branch
          %500 = sbr.rel (%p498) target = $region64
        $region63: #{tpu_custom_call.1} parent=55 // pred_region
          %501 = dma.done %s494, 1024
        $region64: #{tpu_custom_call.1} parent=55 // pred_fallthru
          _
        %s502 = sand.u32 %s32, 1
        %s503 = scalar_lea.sflag [#allocation7], %s502
        %s504 = sand.u32 %s138, 1
        %s505 = smul.addr %s504, 64
        %s506 = scalar_lea.vmem [#allocation8], %s505
        // Predicated region
        $region65: #{tpu_custom_call.1} parent=55 // pred_check
          %p507 = pneg %p151
        $region66: #{tpu_custom_call.1} parent=55 // pred_check_branch
          %509 = sbr.rel (%p507) target = $region68
        $region67: #{tpu_custom_call.1} parent=55 // pred_region
          %510 = dma.done %s503, 1024
        $region68: #{tpu_custom_call.1} parent=55 // pred_fallthru
          _
        // Predicated region
        $region69: #{tpu_custom_call.1} parent=55 // pred_check
          %p511 = pneg %p172
        $region70: #{tpu_custom_call.1} parent=55 // pred_check_branch
          %513 = sbr.rel (%p511) target = $region72
        $region71: #{tpu_custom_call.1} parent=55 // pred_region
          %514 = dma.done [#allocation10], 64
        $region72: #{tpu_custom_call.1} parent=55 // pred_fallthru
          _
        // Predicated region
        $region73: #{tpu_custom_call.1} parent=55 // pred_check
          %p515 = pneg %p193
        $region74: #{tpu_custom_call.1} parent=55 // pred_check_branch
          %517 = sbr.rel (%p515) target = $region76
        $region75: #{tpu_custom_call.1} parent=55 // pred_region
          %518 = dma.done [#allocation10], 16
        $region76: #{tpu_custom_call.1} parent=55 // pred_fallthru
          _
        // Predicated region
        $region77: #{tpu_custom_call.1} parent=55 // pred_check
          %p519 = pneg %p214
        $region78: #{tpu_custom_call.1} parent=55 // pred_check_branch
          %521 = sbr.rel (%p519) target = $region80
        $region79: #{tpu_custom_call.1} parent=55 // pred_region
          %522 = dma.done [#allocation13], 512
        $region80: #{tpu_custom_call.1} parent=55 // pred_fallthru
          _
        // Predicated region
        $region81: #{tpu_custom_call.1} parent=55 // pred_check
          %p523 = pneg %p235
        $region82: #{tpu_custom_call.1} parent=55 // pred_check_branch
          %525 = sbr.rel (%p523) target = $region84
        $region83: #{tpu_custom_call.1} parent=55 // pred_region
          %526 = dma.done [#allocation13], 16
        $region84: #{tpu_custom_call.1} parent=55 // pred_fallthru
          _
        // Predicated region
        $region85: #{tpu_custom_call.1} parent=55 // pred_check
          %p527 = pneg %p256
        $region86: #{tpu_custom_call.1} parent=55 // pred_check_branch
          %529 = sbr.rel (%p527) target = $region88
        $region87: #{tpu_custom_call.1} parent=55 // pred_region
          %530 = dma.done [#allocation16], 128
        $region88: #{tpu_custom_call.1} parent=55 // pred_fallthru
          _
        // Predicated region
        $region89: #{tpu_custom_call.1} parent=55 // pred_check
          %p531 = pneg %p277
        $region90: #{tpu_custom_call.1} parent=55 // pred_check_branch
          %533 = sbr.rel (%p531) target = $region92
        $region91: #{tpu_custom_call.1} parent=55 // pred_region
          %534 = dma.done [#allocation16], 16
        $region92: #{tpu_custom_call.1} parent=55 // pred_fallthru
          _
        %s535 = sand.u32 %s64, 1
        %s536 = scalar_lea.sflag [#allocation4], %s535
        %s537 = sand.u32 %s64, 1
        %s538 = smul.addr %s537, 64
        %s539 = scalar_lea.vmem [#allocation3], %s538
        %p540 = pneg %p77
        %p541 = pneg %p74
        %s542 = sand.u32 %s32, 1
        %s543 = scalar_lea.sflag [#allocation7], %s542
        %s544 = sand.u32 %s100, 1
        %s545 = smul.addr %s544, 64
        %s546 = scalar_lea.vmem [#allocation6], %s545
        %p547 = pneg %p113
        %p548 = pneg %p110
        %s549 = sand.u32 %s32, 1
        %s550 = scalar_lea.sflag [#allocation7], %s549
        %s551 = sand.u32 %s138, 1
        %s552 = smul.addr %s551, 64
        %s553 = scalar_lea.vmem [#allocation8], %s552
        %p554 = pneg %p151
        %p555 = pneg %p148
        %p556 = pneg %p172
        %p557 = pneg %p169
        %p558 = pneg %p193
        %p559 = pneg %p190
        %p560 = pneg %p214
        %p561 = pneg %p211
        %p562 = pneg %p235
        %p563 = pneg %p232
        %p564 = pneg %p256
        %p565 = pneg %p253
        %p566 = pneg %p277
        %p567 = pneg %p274
        %p568 = pneg %p305
        %p569 = pneg %p302
        %s570 = sand.u32 %s292, 1
        %s571 = scalar_lea.sflag [#allocation5], %s570
        %s572 = sand.u32 %s292, 1
        %s573 = smul.addr %s572, 64
        %s574 = scalar_lea.vmem [#allocation18], %s573
        %s575 = ssub.s32 %s37, 1
        %p576 = scmp.gt.s32.totalorder %s575, 0
        %s577 = scalar_select %p576, %s575, 0
        %p578 = scmp.lt.s32.totalorder %s577, 7
        %s579 = scalar_select %p578, %s577, 7
        %p580 = scmp.gt.s32.totalorder %s37, 0
        %s581 = scalar_select %p580, %s37, 0
        %p582 = scmp.lt.s32.totalorder %s581, 7
        %s583 = scalar_select %p582, %s581, 7
        %s584 = sadd.s32 %s37, 1
        %p585 = scmp.gt.s32.totalorder %s584, 0
        %s586 = scalar_select %p585, %s584, 0
        %p587 = scmp.lt.s32.totalorder %s586, 7
        %s588 = scalar_select %p587, %s586, 7
        %v590 = vld [vmem:[#allocation12] sm:$0xff]
        %v591 = vld [vmem:[#allocation12 + $0x8] sm:$0xff]
        %v592 = vld [vmem:[#allocation12 + $0x10] sm:$0xff]
        %v593 = vld [vmem:[#allocation12 + $0x18] sm:$0x7]
        %v594 = vld [vmem:[#allocation14] sm:$0x1]
        %v595 = vld [vmem:[#allocation9] sm:$0xf]
        %v596 = vld [vmem:[#allocation11] sm:$0x1]
        %vm597 = vcmask 130048
        %598 = vst.msk [vmem:[#allocation2] sm:$0xff] %vm597, 0.0
        %vm599 = vcmask 123904
        %600 = vst.msk [vmem:[#allocation2 + $0x8] sm:$0x3] %vm599, 0.0
        %601 = vst.msk [vmem:[#allocation2 + $0x10] sm:$0xff] %vm597, 0.0
        %602 = vst.msk [vmem:[#allocation2 + $0x18] sm:$0x3] %vm599, 0.0
        %603 = vst.msk [vmem:[#allocation2 + $0x20] sm:$0xff] %vm597, 0.0
        %604 = vst.msk [vmem:[#allocation2 + $0x28] sm:$0x3] %vm599, 0.0
        %605 = vst.msk [vmem:[#allocation2 + $0x30] sm:$0xff] %vm597, 0.0
        %606 = vst.msk [vmem:[#allocation2 + $0x38] sm:$0x3] %vm599, 0.0
        %607 = vst.msk [vmem:[#allocation2 + $0x40] sm:$0xff] %vm597, 0.0
        %608 = vst.msk [vmem:[#allocation2 + $0x48] sm:$0x3] %vm599, 0.0
        %609 = vst.msk [vmem:[#allocation2 + $0x50] sm:$0xff] %vm597, 0.0
        %610 = vst.msk [vmem:[#allocation2 + $0x58] sm:$0x3] %vm599, 0.0
        %611 = vst.msk [vmem:[#allocation2 + $0x60] sm:$0xff] %vm597, 0.0
        %612 = vst.msk [vmem:[#allocation2 + $0x68] sm:$0x3] %vm599, 0.0
        %613 = vst.msk [vmem:[#allocation2 + $0x70] sm:$0xff] %vm597, 0.0
        %614 = vst.msk [vmem:[#allocation2 + $0x78] sm:$0x3] %vm599, 0.0
        %615 = vst.msk [vmem:[#allocation2 + $0x80] sm:$0xff] %vm597, 0.0
        %616 = vst.msk [vmem:[#allocation2 + $0x88] sm:$0x3] %vm599, 0.0
        %617 = vst.msk [vmem:[#allocation2 + $0x90] sm:$0xff] %vm597, 0.0
        %618 = vst.msk [vmem:[#allocation2 + $0x98] sm:$0x3] %vm599, 0.0
        %v620 = vlaneseq
        %v621 = vshrl.u32 %v620, 7
        %v622 = vsub.s32 0, %v621
        %v623 = vrot.slane %v594, %v622
        %v625 = vadd.f32 %v623, 0.0
        %s626 = ssub.s32 %s37, 1
        %p627 = scmp.ge.s32.totalorder %s626, 0
        %p628 = scmp.lt.s32.totalorder %s626, 8
        %p629 = pnand %p627, %p628
        %p630 = pneg %p629
        %v631 = vld [vmem:[%s488] sm:$0xff]
        %v632 = vld [vmem:[%s488 + $0x8] sm:$0xff]
        %v633 = vld [vmem:[%s488 + $0x10] sm:$0xff]
        %v634 = vld [vmem:[%s488 + $0x18] sm:$0xff]
        %v635 = vld [vmem:[%s488 + $0x20] sm:$0xff]
        %v636 = vld [vmem:[%s488 + $0x28] sm:$0xff]
        %v637 = vld [vmem:[%s488 + $0x30] sm:$0xff]
        %v638 = vld [vmem:[%s488 + $0x38] sm:$0xff]
        %v640 = vlaneseq
        %v641 = vshrl.u32 %v640, 7
        %v642 = vsub.s32 0, %v641
        %v643 = vrot.slane %v596, %v642
        %v645 = vadd.f32 %v643, 0.0
        %647 = vset.pattern.permute.xlu0 0
        %648 = vperm.xlu0 %647, %v631
        %v649 = vpop.permute.xlu0 %648
        %652 = vset.pattern.permute.xlu0 0
        %653 = vperm.xlu0 %652, %v632
        %v654 = vpop.permute.xlu0 %653
        %657 = vset.pattern.permute.xlu0 0
        %658 = vperm.xlu0 %657, %v633
        %v659 = vpop.permute.xlu0 %658
        %662 = vset.pattern.permute.xlu0 0
        %663 = vperm.xlu0 %662, %v634
        %v664 = vpop.permute.xlu0 %663
        %667 = vset.pattern.permute.xlu0 0
        %668 = vperm.xlu0 %667, %v635
        %v669 = vpop.permute.xlu0 %668
        %672 = vset.pattern.permute.xlu0 0
        %673 = vperm.xlu0 %672, %v636
        %v674 = vpop.permute.xlu0 %673
        %677 = vset.pattern.permute.xlu0 0
        %678 = vperm.xlu0 %677, %v637
        %v679 = vpop.permute.xlu0 %678
        %682 = vset.pattern.permute.xlu0 0
        %683 = vperm.xlu0 %682, %v638
        %v684 = vpop.permute.xlu0 %683
        %v686 = vlaneseq
        %v687 = vshrl.u32 %v686, 7
        %v688 = vsub.s32 0, %v687
        %v689 = vrot.slane %v595, %v688
        %v690 = vmul.f32 %v649, %v689
        %v691 = vmul.f32 %v654, %v689
        %v692 = vmul.f32 %v659, %v689
        %v693 = vmul.f32 %v664, %v689
        %v694 = vmul.f32 %v669, %v689
        %v695 = vmul.f32 %v674, %v689
        %v696 = vmul.f32 %v679, %v689
        %v697 = vmul.f32 %v684, %v689
        %v698 = vadd.f32 %v645, %v690
        %v699 = vadd.f32 %v645, %v691
        %v700 = vadd.f32 %v645, %v692
        %v701 = vadd.f32 %v645, %v693
        %v702 = vadd.f32 %v645, %v694
        %v703 = vadd.f32 %v645, %v695
        %v704 = vadd.f32 %v645, %v696
        %v705 = vadd.f32 %v645, %v697
        %706 = vset.pattern.permute.xlu0 1
        %707 = vperm.xlu0 %706, %v631
        %v708 = vpop.permute.xlu0 %707
        %710 = vset.pattern.permute.xlu0 1
        %711 = vperm.xlu0 %710, %v632
        %v712 = vpop.permute.xlu0 %711
        %714 = vset.pattern.permute.xlu0 1
        %715 = vperm.xlu0 %714, %v633
        %v716 = vpop.permute.xlu0 %715
        %718 = vset.pattern.permute.xlu0 1
        %719 = vperm.xlu0 %718, %v634
        %v720 = vpop.permute.xlu0 %719
        %722 = vset.pattern.permute.xlu0 1
        %723 = vperm.xlu0 %722, %v635
        %v724 = vpop.permute.xlu0 %723
        %726 = vset.pattern.permute.xlu0 1
        %727 = vperm.xlu0 %726, %v636
        %v728 = vpop.permute.xlu0 %727
        %730 = vset.pattern.permute.xlu0 1
        %731 = vperm.xlu0 %730, %v637
        %v732 = vpop.permute.xlu0 %731
        %734 = vset.pattern.permute.xlu0 1
        %735 = vperm.xlu0 %734, %v638
        %v736 = vpop.permute.xlu0 %735
        %v738 = vlaneseq
        %v739 = vshrl.u32 %v738, 7
        %v740 = vsub.s32 1, %v739
        %v741 = vrot.slane %v595, %v740
        %v742 = vmul.f32 %v708, %v741
        %v743 = vmul.f32 %v712, %v741
        %v744 = vmul.f32 %v716, %v741
        %v745 = vmul.f32 %v720, %v741
        %v746 = vmul.f32 %v724, %v741
        %v747 = vmul.f32 %v728, %v741
        %v748 = vmul.f32 %v732, %v741
        %v749 = vmul.f32 %v736, %v741
        %v750 = vadd.f32 %v698, %v742
        %v751 = vadd.f32 %v699, %v743
        %v752 = vadd.f32 %v700, %v744
        %v753 = vadd.f32 %v701, %v745
        %v754 = vadd.f32 %v702, %v746
        %v755 = vadd.f32 %v703, %v747
        %v756 = vadd.f32 %v704, %v748
        %v757 = vadd.f32 %v705, %v749
        %758 = vset.pattern.permute.xlu0 2
        %759 = vperm.xlu0 %758, %v631
        %v760 = vpop.permute.xlu0 %759
        %762 = vset.pattern.permute.xlu0 2
        %763 = vperm.xlu0 %762, %v632
        %v764 = vpop.permute.xlu0 %763
        %766 = vset.pattern.permute.xlu0 2
        %767 = vperm.xlu0 %766, %v633
        %v768 = vpop.permute.xlu0 %767
        %770 = vset.pattern.permute.xlu0 2
        %771 = vperm.xlu0 %770, %v634
        %v772 = vpop.permute.xlu0 %771
        %774 = vset.pattern.permute.xlu0 2
        %775 = vperm.xlu0 %774, %v635
        %v776 = vpop.permute.xlu0 %775
        %778 = vset.pattern.permute.xlu0 2
        %779 = vperm.xlu0 %778, %v636
        %v780 = vpop.permute.xlu0 %779
        %782 = vset.pattern.permute.xlu0 2
        %783 = vperm.xlu0 %782, %v637
        %v784 = vpop.permute.xlu0 %783
        %786 = vset.pattern.permute.xlu0 2
        %787 = vperm.xlu0 %786, %v638
        %v788 = vpop.permute.xlu0 %787
        %v790 = vlaneseq
        %v791 = vshrl.u32 %v790, 7
        %v792 = vsub.s32 2, %v791
        %v793 = vrot.slane %v595, %v792
        %v794 = vmul.f32 %v760, %v793
        %v795 = vmul.f32 %v764, %v793
        %v796 = vmul.f32 %v768, %v793
        %v797 = vmul.f32 %v772, %v793
        %v798 = vmul.f32 %v776, %v793
        %v799 = vmul.f32 %v780, %v793
        %v800 = vmul.f32 %v784, %v793
        %v801 = vmul.f32 %v788, %v793
        %v802 = vadd.f32 %v750, %v794
        %v803 = vadd.f32 %v751, %v795
        %v804 = vadd.f32 %v752, %v796
        %v805 = vadd.f32 %v753, %v797
        %v806 = vadd.f32 %v754, %v798
        %v807 = vadd.f32 %v755, %v799
        %v808 = vadd.f32 %v756, %v800
        %v809 = vadd.f32 %v757, %v801
        %810 = vset.pattern.permute.xlu0 3
        %811 = vperm.xlu0 %810, %v631
        %v812 = vpop.permute.xlu0 %811
        %814 = vset.pattern.permute.xlu0 3
        %815 = vperm.xlu0 %814, %v632
        %v816 = vpop.permute.xlu0 %815
        %818 = vset.pattern.permute.xlu0 3
        %819 = vperm.xlu0 %818, %v633
        %v820 = vpop.permute.xlu0 %819
        %822 = vset.pattern.permute.xlu0 3
        %823 = vperm.xlu0 %822, %v634
        %v824 = vpop.permute.xlu0 %823
        %826 = vset.pattern.permute.xlu0 3
        %827 = vperm.xlu0 %826, %v635
        %v828 = vpop.permute.xlu0 %827
        %830 = vset.pattern.permute.xlu0 3
        %831 = vperm.xlu0 %830, %v636
        %v832 = vpop.permute.xlu0 %831
        %834 = vset.pattern.permute.xlu0 3
        %835 = vperm.xlu0 %834, %v637
        %v836 = vpop.permute.xlu0 %835
        %838 = vset.pattern.permute.xlu0 3
        %839 = vperm.xlu0 %838, %v638
        %v840 = vpop.permute.xlu0 %839
        %v842 = vlaneseq
        %v843 = vshrl.u32 %v842, 7
        %v844 = vsub.s32 3, %v843
        %v845 = vrot.slane %v595, %v844
        %v846 = vmul.f32 %v812, %v845
        %v847 = vmul.f32 %v816, %v845
        %v848 = vmul.f32 %v820, %v845
        %v849 = vmul.f32 %v824, %v845
        %v850 = vmul.f32 %v828, %v845
        %v851 = vmul.f32 %v832, %v845
        %v852 = vmul.f32 %v836, %v845
        %v853 = vmul.f32 %v840, %v845
        %v854 = vadd.f32 %v802, %v846
        %v855 = vadd.f32 %v803, %v847
        %v856 = vadd.f32 %v804, %v848
        %v857 = vadd.f32 %v805, %v849
        %v858 = vadd.f32 %v806, %v850
        %v859 = vadd.f32 %v807, %v851
        %v860 = vadd.f32 %v808, %v852
        %v861 = vadd.f32 %v809, %v853
        %v862 = vmax.f32 %v854, 0.0
        %v863 = vmax.f32 %v855, 0.0
        %v864 = vmax.f32 %v856, 0.0
        %v865 = vmax.f32 %v857, 0.0
        %v866 = vmax.f32 %v858, 0.0
        %v867 = vmax.f32 %v859, 0.0
        %v868 = vmax.f32 %v860, 0.0
        %v869 = vmax.f32 %v861, 0.0
        %v870 = vmin.f32 %v862, 6.0
        %v871 = vmin.f32 %v863, 6.0
        %v872 = vmin.f32 %v864, 6.0
        %v873 = vmin.f32 %v865, 6.0
        %v874 = vmin.f32 %v866, 6.0
        %v875 = vmin.f32 %v867, 6.0
        %v876 = vmin.f32 %v868, 6.0
        %v877 = vmin.f32 %v869, 6.0
        %s878 = scalar_select %p630, 1, 0
        %v879 = vstv %s878
        %vm880 = vcmp.eq.s32.totalorder %v879, 1
        %v881 = vsel %vm880, %v870, 0.0
        %v882 = vsel %vm880, %v871, 0.0
        %v883 = vsel %vm880, %v872, 0.0
        %v884 = vsel %vm880, %v873, 0.0
        %v885 = vsel %vm880, %v874, 0.0
        %v886 = vsel %vm880, %v875, 0.0
        %v887 = vsel %vm880, %v876, 0.0
        %v888 = vsel %vm880, %v877, 0.0
        %s889 = scalar_lea.vmem [#allocation2], 16
        %890 = vst.msk [vmem:[%s889 + $0x1] sm:$0xff] %vm597, %v881
        %891 = vst.msk [vmem:[%s889 + $0x11] sm:$0xff] %vm597, %v882
        %892 = vst.msk [vmem:[%s889 + $0x21] sm:$0xff] %vm597, %v883
        %893 = vst.msk [vmem:[%s889 + $0x31] sm:$0xff] %vm597, %v884
        %894 = vst.msk [vmem:[%s889 + $0x41] sm:$0xff] %vm597, %v885
        %895 = vst.msk [vmem:[%s889 + $0x51] sm:$0xff] %vm597, %v886
        %896 = vst.msk [vmem:[%s889 + $0x61] sm:$0xff] %vm597, %v887
        %897 = vst.msk [vmem:[%s889 + $0x71] sm:$0xff] %vm597, %v888
        %v898 = vld [vmem:[#allocation2] sm:$0xff]
        %v899 = vld [vmem:[#allocation2 + $0x10] sm:$0xff]
        %v900 = vld [vmem:[#allocation2 + $0x20] sm:$0xff]
        %v901 = vld [vmem:[#allocation2 + $0x30] sm:$0xff]
        %v902 = vld [vmem:[#allocation2 + $0x40] sm:$0xff]
        %v903 = vld [vmem:[#allocation2 + $0x50] sm:$0xff]
        %v904 = vld [vmem:[#allocation2 + $0x60] sm:$0xff]
        %v905 = vld [vmem:[#allocation2 + $0x70] sm:$0xff]
        %v906 = vlaneseq
        %v907 = vshrl.u32 %v906, 7
        %v908 = vsub.s32 0, %v907
        %v909 = vrot.slane %v590, %v908
        %v910 = vmul.f32 %v898, %v909
        %v911 = vmul.f32 %v899, %v909
        %v912 = vmul.f32 %v900, %v909
        %v913 = vmul.f32 %v901, %v909
        %v914 = vmul.f32 %v902, %v909
        %v915 = vmul.f32 %v903, %v909
        %v916 = vmul.f32 %v904, %v909
        %v917 = vmul.f32 %v905, %v909
        %v918 = vadd.f32 %v625, %v910
        %v919 = vadd.f32 %v625, %v911
        %v920 = vadd.f32 %v625, %v912
        %v921 = vadd.f32 %v625, %v913
        %v922 = vadd.f32 %v625, %v914
        %v923 = vadd.f32 %v625, %v915
        %v924 = vadd.f32 %v625, %v916
        %v925 = vadd.f32 %v625, %v917
        %v926 = vld [vmem:[#allocation2 + $0x1] sm:$0xff]
        %v927 = vld [vmem:[#allocation2 + $0x11] sm:$0xff]
        %v928 = vld [vmem:[#allocation2 + $0x21] sm:$0xff]
        %v929 = vld [vmem:[#allocation2 + $0x31] sm:$0xff]
        %v930 = vld [vmem:[#allocation2 + $0x41] sm:$0xff]
        %v931 = vld [vmem:[#allocation2 + $0x51] sm:$0xff]
        %v932 = vld [vmem:[#allocation2 + $0x61] sm:$0xff]
        %v933 = vld [vmem:[#allocation2 + $0x71] sm:$0xff]
        %v934 = vlaneseq
        %v935 = vshrl.u32 %v934, 7
        %v936 = vsub.s32 1, %v935
        %v937 = vrot.slane %v590, %v936
        %v938 = vmul.f32 %v926, %v937
        %v939 = vmul.f32 %v927, %v937
        %v940 = vmul.f32 %v928, %v937
        %v941 = vmul.f32 %v929, %v937
        %v942 = vmul.f32 %v930, %v937
        %v943 = vmul.f32 %v931, %v937
        %v944 = vmul.f32 %v932, %v937
        %v945 = vmul.f32 %v933, %v937
        %v946 = vadd.f32 %v918, %v938
        %v947 = vadd.f32 %v919, %v939
        %v948 = vadd.f32 %v920, %v940
        %v949 = vadd.f32 %v921, %v941
        %v950 = vadd.f32 %v922, %v942
        %v951 = vadd.f32 %v923, %v943
        %v952 = vadd.f32 %v924, %v944
        %v953 = vadd.f32 %v925, %v945
        %v954 = vld [vmem:[#allocation2 + $0x2] sm:$0xff]
        %v955 = vld [vmem:[#allocation2 + $0x12] sm:$0xff]
        %v956 = vld [vmem:[#allocation2 + $0x22] sm:$0xff]
        %v957 = vld [vmem:[#allocation2 + $0x32] sm:$0xff]
        %v958 = vld [vmem:[#allocation2 + $0x42] sm:$0xff]
        %v959 = vld [vmem:[#allocation2 + $0x52] sm:$0xff]
        %v960 = vld [vmem:[#allocation2 + $0x62] sm:$0xff]
        %v961 = vld [vmem:[#allocation2 + $0x72] sm:$0xff]
        %v962 = vlaneseq
        %v963 = vshrl.u32 %v962, 7
        %v964 = vsub.s32 2, %v963
        %v965 = vrot.slane %v590, %v964
        %v966 = vmul.f32 %v954, %v965
        %v967 = vmul.f32 %v955, %v965
        %v968 = vmul.f32 %v956, %v965
        %v969 = vmul.f32 %v957, %v965
        %v970 = vmul.f32 %v958, %v965
        %v971 = vmul.f32 %v959, %v965
        %v972 = vmul.f32 %v960, %v965
        %v973 = vmul.f32 %v961, %v965
        %v974 = vadd.f32 %v946, %v966
        %v975 = vadd.f32 %v947, %v967
        %v976 = vadd.f32 %v948, %v968
        %v977 = vadd.f32 %v949, %v969
        %v978 = vadd.f32 %v950, %v970
        %v979 = vadd.f32 %v951, %v971
        %v980 = vadd.f32 %v952, %v972
        %v981 = vadd.f32 %v953, %v973
        %v982 = vld [vmem:[%s889] sm:$0xff]
        %v983 = vld [vmem:[%s889 + $0x10] sm:$0xff]
        %v984 = vld [vmem:[%s889 + $0x20] sm:$0xff]
        %v985 = vld [vmem:[%s889 + $0x30] sm:$0xff]
        %v986 = vld [vmem:[%s889 + $0x40] sm:$0xff]
        %v987 = vld [vmem:[%s889 + $0x50] sm:$0xff]
        %v988 = vld [vmem:[%s889 + $0x60] sm:$0xff]
        %v989 = vld [vmem:[%s889 + $0x70] sm:$0xff]
        %v990 = vlaneseq
        %v991 = vshrl.u32 %v990, 7
        %v992 = vsub.s32 3, %v991
        %v993 = vrot.slane %v590, %v992
        %v994 = vmul.f32 %v982, %v993
        %v995 = vmul.f32 %v983, %v993
        %v996 = vmul.f32 %v984, %v993
        %v997 = vmul.f32 %v985, %v993
        %v998 = vmul.f32 %v986, %v993
        %v999 = vmul.f32 %v987, %v993
        %v1000 = vmul.f32 %v988, %v993
        %v1001 = vmul.f32 %v989, %v993
        %v1002 = vadd.f32 %v974, %v994
        %v1003 = vadd.f32 %v975, %v995
        %v1004 = vadd.f32 %v976, %v996
        %v1005 = vadd.f32 %v977, %v997
        %v1006 = vadd.f32 %v978, %v998
        %v1007 = vadd.f32 %v979, %v999
        %v1008 = vadd.f32 %v980, %v1000
        %v1009 = vadd.f32 %v981, %v1001
        %v1010 = vld [vmem:[%s889 + $0x1] sm:$0xff]
        %v1011 = vld [vmem:[%s889 + $0x11] sm:$0xff]
        %v1012 = vld [vmem:[%s889 + $0x21] sm:$0xff]
        %v1013 = vld [vmem:[%s889 + $0x31] sm:$0xff]
        %v1014 = vld [vmem:[%s889 + $0x41] sm:$0xff]
        %v1015 = vld [vmem:[%s889 + $0x51] sm:$0xff]
        %v1016 = vld [vmem:[%s889 + $0x61] sm:$0xff]
        %v1017 = vld [vmem:[%s889 + $0x71] sm:$0xff]
        %v1018 = vlaneseq
        %v1019 = vshrl.u32 %v1018, 7
        %v1020 = vsub.s32 4, %v1019
        %v1021 = vrot.slane %v590, %v1020
        %v1022 = vmul.f32 %v1010, %v1021
        %v1023 = vmul.f32 %v1011, %v1021
        %v1024 = vmul.f32 %v1012, %v1021
        %v1025 = vmul.f32 %v1013, %v1021
        %v1026 = vmul.f32 %v1014, %v1021
        %v1027 = vmul.f32 %v1015, %v1021
        %v1028 = vmul.f32 %v1016, %v1021
        %v1029 = vmul.f32 %v1017, %v1021
        %v1030 = vadd.f32 %v1002, %v1022
        %v1031 = vadd.f32 %v1003, %v1023
        %v1032 = vadd.f32 %v1004, %v1024
        %v1033 = vadd.f32 %v1005, %v1025
        %v1034 = vadd.f32 %v1006, %v1026
        %v1035 = vadd.f32 %v1007, %v1027
        %v1036 = vadd.f32 %v1008, %v1028
        %v1037 = vadd.f32 %v1009, %v1029
        %v1038 = vld [vmem:[%s889 + $0x2] sm:$0xff]
        %v1039 = vld [vmem:[%s889 + $0x12] sm:$0xff]
        %v1040 = vld [vmem:[%s889 + $0x22] sm:$0xff]
        %v1041 = vld [vmem:[%s889 + $0x32] sm:$0xff]
        %v1042 = vld [vmem:[%s889 + $0x42] sm:$0xff]
        %v1043 = vld [vmem:[%s889 + $0x52] sm:$0xff]
        %v1044 = vld [vmem:[%s889 + $0x62] sm:$0xff]
        %v1045 = vld [vmem:[%s889 + $0x72] sm:$0xff]
        %v1046 = vlaneseq
        %v1047 = vshrl.u32 %v1046, 7
        %v1048 = vsub.s32 5, %v1047
        %v1049 = vrot.slane %v590, %v1048
        %v1050 = vmul.f32 %v1038, %v1049
        %v1051 = vmul.f32 %v1039, %v1049
        %v1052 = vmul.f32 %v1040, %v1049
        %v1053 = vmul.f32 %v1041, %v1049
        %v1054 = vmul.f32 %v1042, %v1049
        %v1055 = vmul.f32 %v1043, %v1049
        %v1056 = vmul.f32 %v1044, %v1049
        %v1057 = vmul.f32 %v1045, %v1049
        %v1058 = vadd.f32 %v1030, %v1050
        %v1059 = vadd.f32 %v1031, %v1051
        %v1060 = vadd.f32 %v1032, %v1052
        %v1061 = vadd.f32 %v1033, %v1053
        %v1062 = vadd.f32 %v1034, %v1054
        %v1063 = vadd.f32 %v1035, %v1055
        %v1064 = vadd.f32 %v1036, %v1056
        %v1065 = vadd.f32 %v1037, %v1057
        %s1066 = scalar_lea.vmem [#allocation2], 32
        %v1067 = vld [vmem:[%s1066] sm:$0xff]
        %v1068 = vld [vmem:[%s1066 + $0x10] sm:$0xff]
        %v1069 = vld [vmem:[%s1066 + $0x20] sm:$0xff]
        %v1070 = vld [vmem:[%s1066 + $0x30] sm:$0xff]
        %v1071 = vld [vmem:[%s1066 + $0x40] sm:$0xff]
        %v1072 = vld [vmem:[%s1066 + $0x50] sm:$0xff]
        %v1073 = vld [vmem:[%s1066 + $0x60] sm:$0xff]
        %v1074 = vld [vmem:[%s1066 + $0x70] sm:$0xff]
        %v1075 = vlaneseq
        %v1076 = vshrl.u32 %v1075, 7
        %v1077 = vsub.s32 6, %v1076
        %v1078 = vrot.slane %v590, %v1077
        %v1079 = vmul.f32 %v1067, %v1078
        %v1080 = vmul.f32 %v1068, %v1078
        %v1081 = vmul.f32 %v1069, %v1078
        %v1082 = vmul.f32 %v1070, %v1078
        %v1083 = vmul.f32 %v1071, %v1078
        %v1084 = vmul.f32 %v1072, %v1078
        %v1085 = vmul.f32 %v1073, %v1078
        %v1086 = vmul.f32 %v1074, %v1078
        %v1087 = vadd.f32 %v1058, %v1079
        %v1088 = vadd.f32 %v1059, %v1080
        %v1089 = vadd.f32 %v1060, %v1081
        %v1090 = vadd.f32 %v1061, %v1082
        %v1091 = vadd.f32 %v1062, %v1083
        %v1092 = vadd.f32 %v1063, %v1084
        %v1093 = vadd.f32 %v1064, %v1085
        %v1094 = vadd.f32 %v1065, %v1086
        %v1095 = vld [vmem:[%s1066 + $0x1] sm:$0xff]
        %v1096 = vld [vmem:[%s1066 + $0x11] sm:$0xff]
        %v1097 = vld [vmem:[%s1066 + $0x21] sm:$0xff]
        %v1098 = vld [vmem:[%s1066 + $0x31] sm:$0xff]
        %v1099 = vld [vmem:[%s1066 + $0x41] sm:$0xff]
        %v1100 = vld [vmem:[%s1066 + $0x51] sm:$0xff]
        %v1101 = vld [vmem:[%s1066 + $0x61] sm:$0xff]
        %v1102 = vld [vmem:[%s1066 + $0x71] sm:$0xff]
        %v1103 = vlaneseq
        %v1104 = vshrl.u32 %v1103, 7
        %v1105 = vsub.s32 7, %v1104
        %v1106 = vrot.slane %v590, %v1105
        %v1107 = vmul.f32 %v1095, %v1106
        %v1108 = vmul.f32 %v1096, %v1106
        %v1109 = vmul.f32 %v1097, %v1106
        %v1110 = vmul.f32 %v1098, %v1106
        %v1111 = vmul.f32 %v1099, %v1106
        %v1112 = vmul.f32 %v1100, %v1106
        %v1113 = vmul.f32 %v1101, %v1106
        %v1114 = vmul.f32 %v1102, %v1106
        %v1115 = vadd.f32 %v1087, %v1107
        %v1116 = vadd.f32 %v1088, %v1108
        %v1117 = vadd.f32 %v1089, %v1109
        %v1118 = vadd.f32 %v1090, %v1110
        %v1119 = vadd.f32 %v1091, %v1111
        %v1120 = vadd.f32 %v1092, %v1112
        %v1121 = vadd.f32 %v1093, %v1113
        %v1122 = vadd.f32 %v1094, %v1114
        %v1123 = vld [vmem:[%s1066 + $0x2] sm:$0xff]
        %v1124 = vld [vmem:[%s1066 + $0x12] sm:$0xff]
        %v1125 = vld [vmem:[%s1066 + $0x22] sm:$0xff]
        %v1126 = vld [vmem:[%s1066 + $0x32] sm:$0xff]
        %v1127 = vld [vmem:[%s1066 + $0x42] sm:$0xff]
        %v1128 = vld [vmem:[%s1066 + $0x52] sm:$0xff]
        %v1129 = vld [vmem:[%s1066 + $0x62] sm:$0xff]
        %v1130 = vld [vmem:[%s1066 + $0x72] sm:$0xff]
        %v1131 = vlaneseq
        %v1132 = vshrl.u32 %v1131, 7
        %v1133 = vsub.s32 0, %v1132
        %v1134 = vrot.slane %v591, %v1133
        %v1135 = vmul.f32 %v1123, %v1134
        %v1136 = vmul.f32 %v1124, %v1134
        %v1137 = vmul.f32 %v1125, %v1134
        %v1138 = vmul.f32 %v1126, %v1134
        %v1139 = vmul.f32 %v1127, %v1134
        %v1140 = vmul.f32 %v1128, %v1134
        %v1141 = vmul.f32 %v1129, %v1134
        %v1142 = vmul.f32 %v1130, %v1134
        %v1143 = vadd.f32 %v1115, %v1135
        %v1144 = vadd.f32 %v1116, %v1136
        %v1145 = vadd.f32 %v1117, %v1137
        %v1146 = vadd.f32 %v1118, %v1138
        %v1147 = vadd.f32 %v1119, %v1139
        %v1148 = vadd.f32 %v1120, %v1140
        %v1149 = vadd.f32 %v1121, %v1141
        %v1150 = vadd.f32 %v1122, %v1142
        %p1151 = scmp.ge.s32.totalorder %s37, 0
        %p1152 = scmp.lt.s32.totalorder %s37, 8
        %p1153 = pnand %p1151, %p1152
        %p1154 = pneg %p1153
        %v1155 = vld [vmem:[%s497] sm:$0xff]
        %v1156 = vld [vmem:[%s497 + $0x8] sm:$0xff]
        %v1157 = vld [vmem:[%s497 + $0x10] sm:$0xff]
        %v1158 = vld [vmem:[%s497 + $0x18] sm:$0xff]
        %v1159 = vld [vmem:[%s497 + $0x20] sm:$0xff]
        %v1160 = vld [vmem:[%s497 + $0x28] sm:$0xff]
        %v1161 = vld [vmem:[%s497 + $0x30] sm:$0xff]
        %v1162 = vld [vmem:[%s497 + $0x38] sm:$0xff]
        %1164 = vset.pattern.permute.xlu0 0
        %1165 = vperm.xlu0 %1164, %v1155
        %v1166 = vpop.permute.xlu0 %1165
        %1169 = vset.pattern.permute.xlu0 0
        %1170 = vperm.xlu0 %1169, %v1156
        %v1171 = vpop.permute.xlu0 %1170
        %1174 = vset.pattern.permute.xlu0 0
        %1175 = vperm.xlu0 %1174, %v1157
        %v1176 = vpop.permute.xlu0 %1175
        %1179 = vset.pattern.permute.xlu0 0
        %1180 = vperm.xlu0 %1179, %v1158
        %v1181 = vpop.permute.xlu0 %1180
        %1184 = vset.pattern.permute.xlu0 0
        %1185 = vperm.xlu0 %1184, %v1159
        %v1186 = vpop.permute.xlu0 %1185
        %1189 = vset.pattern.permute.xlu0 0
        %1190 = vperm.xlu0 %1189, %v1160
        %v1191 = vpop.permute.xlu0 %1190
        %1194 = vset.pattern.permute.xlu0 0
        %1195 = vperm.xlu0 %1194, %v1161
        %v1196 = vpop.permute.xlu0 %1195
        %1199 = vset.pattern.permute.xlu0 0
        %1200 = vperm.xlu0 %1199, %v1162
        %v1201 = vpop.permute.xlu0 %1200
        %v1203 = vmul.f32 %v1166, %v689
        %v1204 = vmul.f32 %v1171, %v689
        %v1205 = vmul.f32 %v1176, %v689
        %v1206 = vmul.f32 %v1181, %v689
        %v1207 = vmul.f32 %v1186, %v689
        %v1208 = vmul.f32 %v1191, %v689
        %v1209 = vmul.f32 %v1196, %v689
        %v1210 = vmul.f32 %v1201, %v689
        %v1211 = vadd.f32 %v645, %v1203
        %v1212 = vadd.f32 %v645, %v1204
        %v1213 = vadd.f32 %v645, %v1205
        %v1214 = vadd.f32 %v645, %v1206
        %v1215 = vadd.f32 %v645, %v1207
        %v1216 = vadd.f32 %v645, %v1208
        %v1217 = vadd.f32 %v645, %v1209
        %v1218 = vadd.f32 %v645, %v1210
        %1219 = vset.pattern.permute.xlu0 1
        %1220 = vperm.xlu0 %1219, %v1155
        %v1221 = vpop.permute.xlu0 %1220
        %1223 = vset.pattern.permute.xlu0 1
        %1224 = vperm.xlu0 %1223, %v1156
        %v1225 = vpop.permute.xlu0 %1224
        %1227 = vset.pattern.permute.xlu0 1
        %1228 = vperm.xlu0 %1227, %v1157
        %v1229 = vpop.permute.xlu0 %1228
        %1231 = vset.pattern.permute.xlu0 1
        %1232 = vperm.xlu0 %1231, %v1158
        %v1233 = vpop.permute.xlu0 %1232
        %1235 = vset.pattern.permute.xlu0 1
        %1236 = vperm.xlu0 %1235, %v1159
        %v1237 = vpop.permute.xlu0 %1236
        %1239 = vset.pattern.permute.xlu0 1
        %1240 = vperm.xlu0 %1239, %v1160
        %v1241 = vpop.permute.xlu0 %1240
        %1243 = vset.pattern.permute.xlu0 1
        %1244 = vperm.xlu0 %1243, %v1161
        %v1245 = vpop.permute.xlu0 %1244
        %1247 = vset.pattern.permute.xlu0 1
        %1248 = vperm.xlu0 %1247, %v1162
        %v1249 = vpop.permute.xlu0 %1248
        %v1251 = vmul.f32 %v1221, %v741
        %v1252 = vmul.f32 %v1225, %v741
        %v1253 = vmul.f32 %v1229, %v741
        %v1254 = vmul.f32 %v1233, %v741
        %v1255 = vmul.f32 %v1237, %v741
        %v1256 = vmul.f32 %v1241, %v741
        %v1257 = vmul.f32 %v1245, %v741
        %v1258 = vmul.f32 %v1249, %v741
        %v1259 = vadd.f32 %v1211, %v1251
        %v1260 = vadd.f32 %v1212, %v1252
        %v1261 = vadd.f32 %v1213, %v1253
        %v1262 = vadd.f32 %v1214, %v1254
        %v1263 = vadd.f32 %v1215, %v1255
        %v1264 = vadd.f32 %v1216, %v1256
        %v1265 = vadd.f32 %v1217, %v1257
        %v1266 = vadd.f32 %v1218, %v1258
        %1267 = vset.pattern.permute.xlu0 2
        %1268 = vperm.xlu0 %1267, %v1155
        %v1269 = vpop.permute.xlu0 %1268
        %1271 = vset.pattern.permute.xlu0 2
        %1272 = vperm.xlu0 %1271, %v1156
        %v1273 = vpop.permute.xlu0 %1272
        %1275 = vset.pattern.permute.xlu0 2
        %1276 = vperm.xlu0 %1275, %v1157
        %v1277 = vpop.permute.xlu0 %1276
        %1279 = vset.pattern.permute.xlu0 2
        %1280 = vperm.xlu0 %1279, %v1158
        %v1281 = vpop.permute.xlu0 %1280
        %1283 = vset.pattern.permute.xlu0 2
        %1284 = vperm.xlu0 %1283, %v1159
        %v1285 = vpop.permute.xlu0 %1284
        %1287 = vset.pattern.permute.xlu0 2
        %1288 = vperm.xlu0 %1287, %v1160
        %v1289 = vpop.permute.xlu0 %1288
        %1291 = vset.pattern.permute.xlu0 2
        %1292 = vperm.xlu0 %1291, %v1161
        %v1293 = vpop.permute.xlu0 %1292
        %1295 = vset.pattern.permute.xlu0 2
        %1296 = vperm.xlu0 %1295, %v1162
        %v1297 = vpop.permute.xlu0 %1296
        %v1299 = vmul.f32 %v1269, %v793
        %v1300 = vmul.f32 %v1273, %v793
        %v1301 = vmul.f32 %v1277, %v793
        %v1302 = vmul.f32 %v1281, %v793
        %v1303 = vmul.f32 %v1285, %v793
        %v1304 = vmul.f32 %v1289, %v793
        %v1305 = vmul.f32 %v1293, %v793
        %v1306 = vmul.f32 %v1297, %v793
        %v1307 = vadd.f32 %v1259, %v1299
        %v1308 = vadd.f32 %v1260, %v1300
        %v1309 = vadd.f32 %v1261, %v1301
        %v1310 = vadd.f32 %v1262, %v1302
        %v1311 = vadd.f32 %v1263, %v1303
        %v1312 = vadd.f32 %v1264, %v1304
        %v1313 = vadd.f32 %v1265, %v1305
        %v1314 = vadd.f32 %v1266, %v1306
        %1315 = vset.pattern.permute.xlu0 3
        %1316 = vperm.xlu0 %1315, %v1155
        %v1317 = vpop.permute.xlu0 %1316
        %1319 = vset.pattern.permute.xlu0 3
        %1320 = vperm.xlu0 %1319, %v1156
        %v1321 = vpop.permute.xlu0 %1320
        %1323 = vset.pattern.permute.xlu0 3
        %1324 = vperm.xlu0 %1323, %v1157
        %v1325 = vpop.permute.xlu0 %1324
        %1327 = vset.pattern.permute.xlu0 3
        %1328 = vperm.xlu0 %1327, %v1158
        %v1329 = vpop.permute.xlu0 %1328
        %1331 = vset.pattern.permute.xlu0 3
        %1332 = vperm.xlu0 %1331, %v1159
        %v1333 = vpop.permute.xlu0 %1332
        %1335 = vset.pattern.permute.xlu0 3
        %1336 = vperm.xlu0 %1335, %v1160
        %v1337 = vpop.permute.xlu0 %1336
        %1339 = vset.pattern.permute.xlu0 3
        %1340 = vperm.xlu0 %1339, %v1161
        %v1341 = vpop.permute.xlu0 %1340
        %1343 = vset.pattern.permute.xlu0 3
        %1344 = vperm.xlu0 %1343, %v1162
        %v1345 = vpop.permute.xlu0 %1344
        %v1347 = vmul.f32 %v1317, %v845
        %v1348 = vmul.f32 %v1321, %v845
        %v1349 = vmul.f32 %v1325, %v845
        %v1350 = vmul.f32 %v1329, %v845
        %v1351 = vmul.f32 %v1333, %v845
        %v1352 = vmul.f32 %v1337, %v845
        %v1353 = vmul.f32 %v1341, %v845
        %v1354 = vmul.f32 %v1345, %v845
        %v1355 = vadd.f32 %v1307, %v1347
        %v1356 = vadd.f32 %v1308, %v1348
        %v1357 = vadd.f32 %v1309, %v1349
        %v1358 = vadd.f32 %v1310, %v1350
        %v1359 = vadd.f32 %v1311, %v1351
        %v1360 = vadd.f32 %v1312, %v1352
        %v1361 = vadd.f32 %v1313, %v1353
        %v1362 = vadd.f32 %v1314, %v1354
        %v1363 = vmax.f32 %v1355, 0.0
        %v1364 = vmax.f32 %v1356, 0.0
        %v1365 = vmax.f32 %v1357, 0.0
        %v1366 = vmax.f32 %v1358, 0.0
        %v1367 = vmax.f32 %v1359, 0.0
        %v1368 = vmax.f32 %v1360, 0.0
        %v1369 = vmax.f32 %v1361, 0.0
        %v1370 = vmax.f32 %v1362, 0.0
        %v1371 = vmin.f32 %v1363, 6.0
        %v1372 = vmin.f32 %v1364, 6.0
        %v1373 = vmin.f32 %v1365, 6.0
        %v1374 = vmin.f32 %v1366, 6.0
        %v1375 = vmin.f32 %v1367, 6.0
        %v1376 = vmin.f32 %v1368, 6.0
        %v1377 = vmin.f32 %v1369, 6.0
        %v1378 = vmin.f32 %v1370, 6.0
        %s1379 = scalar_select %p1154, 1, 0
        %v1380 = vstv %s1379
        %vm1381 = vcmp.eq.s32.totalorder %v1380, 1
        %v1382 = vsel %vm1381, %v1371, 0.0
        %v1383 = vsel %vm1381, %v1372, 0.0
        %v1384 = vsel %vm1381, %v1373, 0.0
        %v1385 = vsel %vm1381, %v1374, 0.0
        %v1386 = vsel %vm1381, %v1375, 0.0
        %v1387 = vsel %vm1381, %v1376, 0.0
        %v1388 = vsel %vm1381, %v1377, 0.0
        %v1389 = vsel %vm1381, %v1378, 0.0
        %1390 = vst.msk [vmem:[%s889 + $0x1] sm:$0xff] %vm597, %v1382
        %1391 = vst.msk [vmem:[%s889 + $0x11] sm:$0xff] %vm597, %v1383
        %1392 = vst.msk [vmem:[%s889 + $0x21] sm:$0xff] %vm597, %v1384
        %1393 = vst.msk [vmem:[%s889 + $0x31] sm:$0xff] %vm597, %v1385
        %1394 = vst.msk [vmem:[%s889 + $0x41] sm:$0xff] %vm597, %v1386
        %1395 = vst.msk [vmem:[%s889 + $0x51] sm:$0xff] %vm597, %v1387
        %1396 = vst.msk [vmem:[%s889 + $0x61] sm:$0xff] %vm597, %v1388
        %1397 = vst.msk [vmem:[%s889 + $0x71] sm:$0xff] %vm597, %v1389
        %v1398 = vld [vmem:[#allocation2] sm:$0xff]
        %v1399 = vld [vmem:[#allocation2 + $0x10] sm:$0xff]
        %v1400 = vld [vmem:[#allocation2 + $0x20] sm:$0xff]
        %v1401 = vld [vmem:[#allocation2 + $0x30] sm:$0xff]
        %v1402 = vld [vmem:[#allocation2 + $0x40] sm:$0xff]
        %v1403 = vld [vmem:[#allocation2 + $0x50] sm:$0xff]
        %v1404 = vld [vmem:[#allocation2 + $0x60] sm:$0xff]
        %v1405 = vld [vmem:[#allocation2 + $0x70] sm:$0xff]
        %v1406 = vlaneseq
        %v1407 = vshrl.u32 %v1406, 7
        %v1408 = vsub.s32 1, %v1407
        %v1409 = vrot.slane %v591, %v1408
        %v1410 = vmul.f32 %v1398, %v1409
        %v1411 = vmul.f32 %v1399, %v1409
        %v1412 = vmul.f32 %v1400, %v1409
        %v1413 = vmul.f32 %v1401, %v1409
        %v1414 = vmul.f32 %v1402, %v1409
        %v1415 = vmul.f32 %v1403, %v1409
        %v1416 = vmul.f32 %v1404, %v1409
        %v1417 = vmul.f32 %v1405, %v1409
        %v1418 = vadd.f32 %v1143, %v1410
        %v1419 = vadd.f32 %v1144, %v1411
        %v1420 = vadd.f32 %v1145, %v1412
        %v1421 = vadd.f32 %v1146, %v1413
        %v1422 = vadd.f32 %v1147, %v1414
        %v1423 = vadd.f32 %v1148, %v1415
        %v1424 = vadd.f32 %v1149, %v1416
        %v1425 = vadd.f32 %v1150, %v1417
        %v1426 = vld [vmem:[#allocation2 + $0x1] sm:$0xff]
        %v1427 = vld [vmem:[#allocation2 + $0x11] sm:$0xff]
        %v1428 = vld [vmem:[#allocation2 + $0x21] sm:$0xff]
        %v1429 = vld [vmem:[#allocation2 + $0x31] sm:$0xff]
        %v1430 = vld [vmem:[#allocation2 + $0x41] sm:$0xff]
        %v1431 = vld [vmem:[#allocation2 + $0x51] sm:$0xff]
        %v1432 = vld [vmem:[#allocation2 + $0x61] sm:$0xff]
        %v1433 = vld [vmem:[#allocation2 + $0x71] sm:$0xff]
        %v1434 = vlaneseq
        %v1435 = vshrl.u32 %v1434, 7
        %v1436 = vsub.s32 2, %v1435
        %v1437 = vrot.slane %v591, %v1436
        %v1438 = vmul.f32 %v1426, %v1437
        %v1439 = vmul.f32 %v1427, %v1437
        %v1440 = vmul.f32 %v1428, %v1437
        %v1441 = vmul.f32 %v1429, %v1437
        %v1442 = vmul.f32 %v1430, %v1437
        %v1443 = vmul.f32 %v1431, %v1437
        %v1444 = vmul.f32 %v1432, %v1437
        %v1445 = vmul.f32 %v1433, %v1437
        %v1446 = vadd.f32 %v1418, %v1438
        %v1447 = vadd.f32 %v1419, %v1439
        %v1448 = vadd.f32 %v1420, %v1440
        %v1449 = vadd.f32 %v1421, %v1441
        %v1450 = vadd.f32 %v1422, %v1442
        %v1451 = vadd.f32 %v1423, %v1443
        %v1452 = vadd.f32 %v1424, %v1444
        %v1453 = vadd.f32 %v1425, %v1445
        %v1454 = vld [vmem:[#allocation2 + $0x2] sm:$0xff]
        %v1455 = vld [vmem:[#allocation2 + $0x12] sm:$0xff]
        %v1456 = vld [vmem:[#allocation2 + $0x22] sm:$0xff]
        %v1457 = vld [vmem:[#allocation2 + $0x32] sm:$0xff]
        %v1458 = vld [vmem:[#allocation2 + $0x42] sm:$0xff]
        %v1459 = vld [vmem:[#allocation2 + $0x52] sm:$0xff]
        %v1460 = vld [vmem:[#allocation2 + $0x62] sm:$0xff]
        %v1461 = vld [vmem:[#allocation2 + $0x72] sm:$0xff]
        %v1462 = vlaneseq
        %v1463 = vshrl.u32 %v1462, 7
        %v1464 = vsub.s32 3, %v1463
        %v1465 = vrot.slane %v591, %v1464
        %v1466 = vmul.f32 %v1454, %v1465
        %v1467 = vmul.f32 %v1455, %v1465
        %v1468 = vmul.f32 %v1456, %v1465
        %v1469 = vmul.f32 %v1457, %v1465
        %v1470 = vmul.f32 %v1458, %v1465
        %v1471 = vmul.f32 %v1459, %v1465
        %v1472 = vmul.f32 %v1460, %v1465
        %v1473 = vmul.f32 %v1461, %v1465
        %v1474 = vadd.f32 %v1446, %v1466
        %v1475 = vadd.f32 %v1447, %v1467
        %v1476 = vadd.f32 %v1448, %v1468
        %v1477 = vadd.f32 %v1449, %v1469
        %v1478 = vadd.f32 %v1450, %v1470
        %v1479 = vadd.f32 %v1451, %v1471
        %v1480 = vadd.f32 %v1452, %v1472
        %v1481 = vadd.f32 %v1453, %v1473
        %v1482 = vld [vmem:[%s889] sm:$0xff]
        %v1483 = vld [vmem:[%s889 + $0x10] sm:$0xff]
        %v1484 = vld [vmem:[%s889 + $0x20] sm:$0xff]
        %v1485 = vld [vmem:[%s889 + $0x30] sm:$0xff]
        %v1486 = vld [vmem:[%s889 + $0x40] sm:$0xff]
        %v1487 = vld [vmem:[%s889 + $0x50] sm:$0xff]
        %v1488 = vld [vmem:[%s889 + $0x60] sm:$0xff]
        %v1489 = vld [vmem:[%s889 + $0x70] sm:$0xff]
        %v1490 = vlaneseq
        %v1491 = vshrl.u32 %v1490, 7
        %v1492 = vsub.s32 4, %v1491
        %v1493 = vrot.slane %v591, %v1492
        %v1494 = vmul.f32 %v1482, %v1493
        %v1495 = vmul.f32 %v1483, %v1493
        %v1496 = vmul.f32 %v1484, %v1493
        %v1497 = vmul.f32 %v1485, %v1493
        %v1498 = vmul.f32 %v1486, %v1493
        %v1499 = vmul.f32 %v1487, %v1493
        %v1500 = vmul.f32 %v1488, %v1493
        %v1501 = vmul.f32 %v1489, %v1493
        %v1502 = vadd.f32 %v1474, %v1494
        %v1503 = vadd.f32 %v1475, %v1495
        %v1504 = vadd.f32 %v1476, %v1496
        %v1505 = vadd.f32 %v1477, %v1497
        %v1506 = vadd.f32 %v1478, %v1498
        %v1507 = vadd.f32 %v1479, %v1499
        %v1508 = vadd.f32 %v1480, %v1500
        %v1509 = vadd.f32 %v1481, %v1501
        %v1510 = vld [vmem:[%s889 + $0x1] sm:$0xff]
        %v1511 = vld [vmem:[%s889 + $0x11] sm:$0xff]
        %v1512 = vld [vmem:[%s889 + $0x21] sm:$0xff]
        %v1513 = vld [vmem:[%s889 + $0x31] sm:$0xff]
        %v1514 = vld [vmem:[%s889 + $0x41] sm:$0xff]
        %v1515 = vld [vmem:[%s889 + $0x51] sm:$0xff]
        %v1516 = vld [vmem:[%s889 + $0x61] sm:$0xff]
        %v1517 = vld [vmem:[%s889 + $0x71] sm:$0xff]
        %v1518 = vlaneseq
        %v1519 = vshrl.u32 %v1518, 7
        %v1520 = vsub.s32 5, %v1519
        %v1521 = vrot.slane %v591, %v1520
        %v1522 = vmul.f32 %v1510, %v1521
        %v1523 = vmul.f32 %v1511, %v1521
        %v1524 = vmul.f32 %v1512, %v1521
        %v1525 = vmul.f32 %v1513, %v1521
        %v1526 = vmul.f32 %v1514, %v1521
        %v1527 = vmul.f32 %v1515, %v1521
        %v1528 = vmul.f32 %v1516, %v1521
        %v1529 = vmul.f32 %v1517, %v1521
        %v1530 = vadd.f32 %v1502, %v1522
        %v1531 = vadd.f32 %v1503, %v1523
        %v1532 = vadd.f32 %v1504, %v1524
        %v1533 = vadd.f32 %v1505, %v1525
        %v1534 = vadd.f32 %v1506, %v1526
        %v1535 = vadd.f32 %v1507, %v1527
        %v1536 = vadd.f32 %v1508, %v1528
        %v1537 = vadd.f32 %v1509, %v1529
        %v1538 = vld [vmem:[%s889 + $0x2] sm:$0xff]
        %v1539 = vld [vmem:[%s889 + $0x12] sm:$0xff]
        %v1540 = vld [vmem:[%s889 + $0x22] sm:$0xff]
        %v1541 = vld [vmem:[%s889 + $0x32] sm:$0xff]
        %v1542 = vld [vmem:[%s889 + $0x42] sm:$0xff]
        %v1543 = vld [vmem:[%s889 + $0x52] sm:$0xff]
        %v1544 = vld [vmem:[%s889 + $0x62] sm:$0xff]
        %v1545 = vld [vmem:[%s889 + $0x72] sm:$0xff]
        %v1546 = vlaneseq
        %v1547 = vshrl.u32 %v1546, 7
        %v1548 = vsub.s32 6, %v1547
        %v1549 = vrot.slane %v591, %v1548
        %v1550 = vmul.f32 %v1538, %v1549
        %v1551 = vmul.f32 %v1539, %v1549
        %v1552 = vmul.f32 %v1540, %v1549
        %v1553 = vmul.f32 %v1541, %v1549
        %v1554 = vmul.f32 %v1542, %v1549
        %v1555 = vmul.f32 %v1543, %v1549
        %v1556 = vmul.f32 %v1544, %v1549
        %v1557 = vmul.f32 %v1545, %v1549
        %v1558 = vadd.f32 %v1530, %v1550
        %v1559 = vadd.f32 %v1531, %v1551
        %v1560 = vadd.f32 %v1532, %v1552
        %v1561 = vadd.f32 %v1533, %v1553
        %v1562 = vadd.f32 %v1534, %v1554
        %v1563 = vadd.f32 %v1535, %v1555
        %v1564 = vadd.f32 %v1536, %v1556
        %v1565 = vadd.f32 %v1537, %v1557
        %v1566 = vld [vmem:[%s1066] sm:$0xff]
        %v1567 = vld [vmem:[%s1066 + $0x10] sm:$0xff]
        %v1568 = vld [vmem:[%s1066 + $0x20] sm:$0xff]
        %v1569 = vld [vmem:[%s1066 + $0x30] sm:$0xff]
        %v1570 = vld [vmem:[%s1066 + $0x40] sm:$0xff]
        %v1571 = vld [vmem:[%s1066 + $0x50] sm:$0xff]
        %v1572 = vld [vmem:[%s1066 + $0x60] sm:$0xff]
        %v1573 = vld [vmem:[%s1066 + $0x70] sm:$0xff]
        %v1574 = vlaneseq
        %v1575 = vshrl.u32 %v1574, 7
        %v1576 = vsub.s32 7, %v1575
        %v1577 = vrot.slane %v591, %v1576
        %v1578 = vmul.f32 %v1566, %v1577
        %v1579 = vmul.f32 %v1567, %v1577
        %v1580 = vmul.f32 %v1568, %v1577
        %v1581 = vmul.f32 %v1569, %v1577
        %v1582 = vmul.f32 %v1570, %v1577
        %v1583 = vmul.f32 %v1571, %v1577
        %v1584 = vmul.f32 %v1572, %v1577
        %v1585 = vmul.f32 %v1573, %v1577
        %v1586 = vadd.f32 %v1558, %v1578
        %v1587 = vadd.f32 %v1559, %v1579
        %v1588 = vadd.f32 %v1560, %v1580
        %v1589 = vadd.f32 %v1561, %v1581
        %v1590 = vadd.f32 %v1562, %v1582
        %v1591 = vadd.f32 %v1563, %v1583
        %v1592 = vadd.f32 %v1564, %v1584
        %v1593 = vadd.f32 %v1565, %v1585
        %v1594 = vld [vmem:[%s1066 + $0x1] sm:$0xff]
        %v1595 = vld [vmem:[%s1066 + $0x11] sm:$0xff]
        %v1596 = vld [vmem:[%s1066 + $0x21] sm:$0xff]
        %v1597 = vld [vmem:[%s1066 + $0x31] sm:$0xff]
        %v1598 = vld [vmem:[%s1066 + $0x41] sm:$0xff]
        %v1599 = vld [vmem:[%s1066 + $0x51] sm:$0xff]
        %v1600 = vld [vmem:[%s1066 + $0x61] sm:$0xff]
        %v1601 = vld [vmem:[%s1066 + $0x71] sm:$0xff]
        %v1602 = vlaneseq
        %v1603 = vshrl.u32 %v1602, 7
        %v1604 = vsub.s32 0, %v1603
        %v1605 = vrot.slane %v592, %v1604
        %v1606 = vmul.f32 %v1594, %v1605
        %v1607 = vmul.f32 %v1595, %v1605
        %v1608 = vmul.f32 %v1596, %v1605
        %v1609 = vmul.f32 %v1597, %v1605
        %v1610 = vmul.f32 %v1598, %v1605
        %v1611 = vmul.f32 %v1599, %v1605
        %v1612 = vmul.f32 %v1600, %v1605
        %v1613 = vmul.f32 %v1601, %v1605
        %v1614 = vadd.f32 %v1586, %v1606
        %v1615 = vadd.f32 %v1587, %v1607
        %v1616 = vadd.f32 %v1588, %v1608
        %v1617 = vadd.f32 %v1589, %v1609
        %v1618 = vadd.f32 %v1590, %v1610
        %v1619 = vadd.f32 %v1591, %v1611
        %v1620 = vadd.f32 %v1592, %v1612
        %v1621 = vadd.f32 %v1593, %v1613
        %v1622 = vld [vmem:[%s1066 + $0x2] sm:$0xff]
        %v1623 = vld [vmem:[%s1066 + $0x12] sm:$0xff]
        %v1624 = vld [vmem:[%s1066 + $0x22] sm:$0xff]
        %v1625 = vld [vmem:[%s1066 + $0x32] sm:$0xff]
        %v1626 = vld [vmem:[%s1066 + $0x42] sm:$0xff]
        %v1627 = vld [vmem:[%s1066 + $0x52] sm:$0xff]
        %v1628 = vld [vmem:[%s1066 + $0x62] sm:$0xff]
        %v1629 = vld [vmem:[%s1066 + $0x72] sm:$0xff]
        %v1630 = vlaneseq
        %v1631 = vshrl.u32 %v1630, 7
        %v1632 = vsub.s32 1, %v1631
        %v1633 = vrot.slane %v592, %v1632
        %v1634 = vmul.f32 %v1622, %v1633
        %v1635 = vmul.f32 %v1623, %v1633
        %v1636 = vmul.f32 %v1624, %v1633
        %v1637 = vmul.f32 %v1625, %v1633
        %v1638 = vmul.f32 %v1626, %v1633
        %v1639 = vmul.f32 %v1627, %v1633
        %v1640 = vmul.f32 %v1628, %v1633
        %v1641 = vmul.f32 %v1629, %v1633
        %v1642 = vadd.f32 %v1614, %v1634
        %v1643 = vadd.f32 %v1615, %v1635
        %v1644 = vadd.f32 %v1616, %v1636
        %v1645 = vadd.f32 %v1617, %v1637
        %v1646 = vadd.f32 %v1618, %v1638
        %v1647 = vadd.f32 %v1619, %v1639
        %v1648 = vadd.f32 %v1620, %v1640
        %v1649 = vadd.f32 %v1621, %v1641
        %s1650 = sadd.s32 %s37, 1
        %p1651 = scmp.ge.s32.totalorder %s1650, 0
        %p1652 = scmp.lt.s32.totalorder %s1650, 8
        %p1653 = pnand %p1651, %p1652
        %p1654 = pneg %p1653
        %v1655 = vld [vmem:[%s506] sm:$0xff]
        %v1656 = vld [vmem:[%s506 + $0x8] sm:$0xff]
        %v1657 = vld [vmem:[%s506 + $0x10] sm:$0xff]
        %v1658 = vld [vmem:[%s506 + $0x18] sm:$0xff]
        %v1659 = vld [vmem:[%s506 + $0x20] sm:$0xff]
        %v1660 = vld [vmem:[%s506 + $0x28] sm:$0xff]
        %v1661 = vld [vmem:[%s506 + $0x30] sm:$0xff]
        %v1662 = vld [vmem:[%s506 + $0x38] sm:$0xff]
        %1664 = vset.pattern.permute.xlu0 0
        %1665 = vperm.xlu0 %1664, %v1655
        %v1666 = vpop.permute.xlu0 %1665
        %1669 = vset.pattern.permute.xlu0 0
        %1670 = vperm.xlu0 %1669, %v1656
        %v1671 = vpop.permute.xlu0 %1670
        %1674 = vset.pattern.permute.xlu0 0
        %1675 = vperm.xlu0 %1674, %v1657
        %v1676 = vpop.permute.xlu0 %1675
        %1679 = vset.pattern.permute.xlu0 0
        %1680 = vperm.xlu0 %1679, %v1658
        %v1681 = vpop.permute.xlu0 %1680
        %1684 = vset.pattern.permute.xlu0 0
        %1685 = vperm.xlu0 %1684, %v1659
        %v1686 = vpop.permute.xlu0 %1685
        %1689 = vset.pattern.permute.xlu0 0
        %1690 = vperm.xlu0 %1689, %v1660
        %v1691 = vpop.permute.xlu0 %1690
        %1694 = vset.pattern.permute.xlu0 0
        %1695 = vperm.xlu0 %1694, %v1661
        %v1696 = vpop.permute.xlu0 %1695
        %1699 = vset.pattern.permute.xlu0 0
        %1700 = vperm.xlu0 %1699, %v1662
        %v1701 = vpop.permute.xlu0 %1700
        %v1703 = vmul.f32 %v1666, %v689
        %v1704 = vmul.f32 %v1671, %v689
        %v1705 = vmul.f32 %v1676, %v689
        %v1706 = vmul.f32 %v1681, %v689
        %v1707 = vmul.f32 %v1686, %v689
        %v1708 = vmul.f32 %v1691, %v689
        %v1709 = vmul.f32 %v1696, %v689
        %v1710 = vmul.f32 %v1701, %v689
        %v1711 = vadd.f32 %v645, %v1703
        %v1712 = vadd.f32 %v645, %v1704
        %v1713 = vadd.f32 %v645, %v1705
        %v1714 = vadd.f32 %v645, %v1706
        %v1715 = vadd.f32 %v645, %v1707
        %v1716 = vadd.f32 %v645, %v1708
        %v1717 = vadd.f32 %v645, %v1709
        %v1718 = vadd.f32 %v645, %v1710
        %1719 = vset.pattern.permute.xlu0 1
        %1720 = vperm.xlu0 %1719, %v1655
        %v1721 = vpop.permute.xlu0 %1720
        %1723 = vset.pattern.permute.xlu0 1
        %1724 = vperm.xlu0 %1723, %v1656
        %v1725 = vpop.permute.xlu0 %1724
        %1727 = vset.pattern.permute.xlu0 1
        %1728 = vperm.xlu0 %1727, %v1657
        %v1729 = vpop.permute.xlu0 %1728
        %1731 = vset.pattern.permute.xlu0 1
        %1732 = vperm.xlu0 %1731, %v1658
        %v1733 = vpop.permute.xlu0 %1732
        %1735 = vset.pattern.permute.xlu0 1
        %1736 = vperm.xlu0 %1735, %v1659
        %v1737 = vpop.permute.xlu0 %1736
        %1739 = vset.pattern.permute.xlu0 1
        %1740 = vperm.xlu0 %1739, %v1660
        %v1741 = vpop.permute.xlu0 %1740
        %1743 = vset.pattern.permute.xlu0 1
        %1744 = vperm.xlu0 %1743, %v1661
        %v1745 = vpop.permute.xlu0 %1744
        %1747 = vset.pattern.permute.xlu0 1
        %1748 = vperm.xlu0 %1747, %v1662
        %v1749 = vpop.permute.xlu0 %1748
        %v1751 = vmul.f32 %v1721, %v741
        %v1752 = vmul.f32 %v1725, %v741
        %v1753 = vmul.f32 %v1729, %v741
        %v1754 = vmul.f32 %v1733, %v741
        %v1755 = vmul.f32 %v1737, %v741
        %v1756 = vmul.f32 %v1741, %v741
        %v1757 = vmul.f32 %v1745, %v741
        %v1758 = vmul.f32 %v1749, %v741
        %v1759 = vadd.f32 %v1711, %v1751
        %v1760 = vadd.f32 %v1712, %v1752
        %v1761 = vadd.f32 %v1713, %v1753
        %v1762 = vadd.f32 %v1714, %v1754
        %v1763 = vadd.f32 %v1715, %v1755
        %v1764 = vadd.f32 %v1716, %v1756
        %v1765 = vadd.f32 %v1717, %v1757
        %v1766 = vadd.f32 %v1718, %v1758
        %1767 = vset.pattern.permute.xlu0 2
        %1768 = vperm.xlu0 %1767, %v1655
        %v1769 = vpop.permute.xlu0 %1768
        %1771 = vset.pattern.permute.xlu0 2
        %1772 = vperm.xlu0 %1771, %v1656
        %v1773 = vpop.permute.xlu0 %1772
        %1775 = vset.pattern.permute.xlu0 2
        %1776 = vperm.xlu0 %1775, %v1657
        %v1777 = vpop.permute.xlu0 %1776
        %1779 = vset.pattern.permute.xlu0 2
        %1780 = vperm.xlu0 %1779, %v1658
        %v1781 = vpop.permute.xlu0 %1780
        %1783 = vset.pattern.permute.xlu0 2
        %1784 = vperm.xlu0 %1783, %v1659
        %v1785 = vpop.permute.xlu0 %1784
        %1787 = vset.pattern.permute.xlu0 2
        %1788 = vperm.xlu0 %1787, %v1660
        %v1789 = vpop.permute.xlu0 %1788
        %1791 = vset.pattern.permute.xlu0 2
        %1792 = vperm.xlu0 %1791, %v1661
        %v1793 = vpop.permute.xlu0 %1792
        %1795 = vset.pattern.permute.xlu0 2
        %1796 = vperm.xlu0 %1795, %v1662
        %v1797 = vpop.permute.xlu0 %1796
        %v1799 = vmul.f32 %v1769, %v793
        %v1800 = vmul.f32 %v1773, %v793
        %v1801 = vmul.f32 %v1777, %v793
        %v1802 = vmul.f32 %v1781, %v793
        %v1803 = vmul.f32 %v1785, %v793
        %v1804 = vmul.f32 %v1789, %v793
        %v1805 = vmul.f32 %v1793, %v793
        %v1806 = vmul.f32 %v1797, %v793
        %v1807 = vadd.f32 %v1759, %v1799
        %v1808 = vadd.f32 %v1760, %v1800
        %v1809 = vadd.f32 %v1761, %v1801
        %v1810 = vadd.f32 %v1762, %v1802
        %v1811 = vadd.f32 %v1763, %v1803
        %v1812 = vadd.f32 %v1764, %v1804
        %v1813 = vadd.f32 %v1765, %v1805
        %v1814 = vadd.f32 %v1766, %v1806
        %1815 = vset.pattern.permute.xlu0 3
        %1816 = vperm.xlu0 %1815, %v1655
        %v1817 = vpop.permute.xlu0 %1816
        %1819 = vset.pattern.permute.xlu0 3
        %1820 = vperm.xlu0 %1819, %v1656
        %v1821 = vpop.permute.xlu0 %1820
        %1823 = vset.pattern.permute.xlu0 3
        %1824 = vperm.xlu0 %1823, %v1657
        %v1825 = vpop.permute.xlu0 %1824
        %1827 = vset.pattern.permute.xlu0 3
        %1828 = vperm.xlu0 %1827, %v1658
        %v1829 = vpop.permute.xlu0 %1828
        %1831 = vset.pattern.permute.xlu0 3
        %1832 = vperm.xlu0 %1831, %v1659
        %v1833 = vpop.permute.xlu0 %1832
        %1835 = vset.pattern.permute.xlu0 3
        %1836 = vperm.xlu0 %1835, %v1660
        %v1837 = vpop.permute.xlu0 %1836
        %1839 = vset.pattern.permute.xlu0 3
        %1840 = vperm.xlu0 %1839, %v1661
        %v1841 = vpop.permute.xlu0 %1840
        %1843 = vset.pattern.permute.xlu0 3
        %1844 = vperm.xlu0 %1843, %v1662
        %v1845 = vpop.permute.xlu0 %1844
        %v1847 = vmul.f32 %v1817, %v845
        %v1848 = vmul.f32 %v1821, %v845
        %v1849 = vmul.f32 %v1825, %v845
        %v1850 = vmul.f32 %v1829, %v845
        %v1851 = vmul.f32 %v1833, %v845
        %v1852 = vmul.f32 %v1837, %v845
        %v1853 = vmul.f32 %v1841, %v845
        %v1854 = vmul.f32 %v1845, %v845
        %v1855 = vadd.f32 %v1807, %v1847
        %v1856 = vadd.f32 %v1808, %v1848
        %v1857 = vadd.f32 %v1809, %v1849
        %v1858 = vadd.f32 %v1810, %v1850
        %v1859 = vadd.f32 %v1811, %v1851
        %v1860 = vadd.f32 %v1812, %v1852
        %v1861 = vadd.f32 %v1813, %v1853
        %v1862 = vadd.f32 %v1814, %v1854
        %v1863 = vmax.f32 %v1855, 0.0
        %v1864 = vmax.f32 %v1856, 0.0
        %v1865 = vmax.f32 %v1857, 0.0
        %v1866 = vmax.f32 %v1858, 0.0
        %v1867 = vmax.f32 %v1859, 0.0
        %v1868 = vmax.f32 %v1860, 0.0
        %v1869 = vmax.f32 %v1861, 0.0
        %v1870 = vmax.f32 %v1862, 0.0
        %v1871 = vmin.f32 %v1863, 6.0
        %v1872 = vmin.f32 %v1864, 6.0
        %v1873 = vmin.f32 %v1865, 6.0
        %v1874 = vmin.f32 %v1866, 6.0
        %v1875 = vmin.f32 %v1867, 6.0
        %v1876 = vmin.f32 %v1868, 6.0
        %v1877 = vmin.f32 %v1869, 6.0
        %v1878 = vmin.f32 %v1870, 6.0
        %s1879 = scalar_select %p1654, 1, 0
        %v1880 = vstv %s1879
        %vm1881 = vcmp.eq.s32.totalorder %v1880, 1
        %v1882 = vsel %vm1881, %v1871, 0.0
        %v1883 = vsel %vm1881, %v1872, 0.0
        %v1884 = vsel %vm1881, %v1873, 0.0
        %v1885 = vsel %vm1881, %v1874, 0.0
        %v1886 = vsel %vm1881, %v1875, 0.0
        %v1887 = vsel %vm1881, %v1876, 0.0
        %v1888 = vsel %vm1881, %v1877, 0.0
        %v1889 = vsel %vm1881, %v1878, 0.0
        %1890 = vst.msk [vmem:[%s889 + $0x1] sm:$0xff] %vm597, %v1882
        %1891 = vst.msk [vmem:[%s889 + $0x11] sm:$0xff] %vm597, %v1883
        %1892 = vst.msk [vmem:[%s889 + $0x21] sm:$0xff] %vm597, %v1884
        %1893 = vst.msk [vmem:[%s889 + $0x31] sm:$0xff] %vm597, %v1885
        %1894 = vst.msk [vmem:[%s889 + $0x41] sm:$0xff] %vm597, %v1886
        %1895 = vst.msk [vmem:[%s889 + $0x51] sm:$0xff] %vm597, %v1887
        %1896 = vst.msk [vmem:[%s889 + $0x61] sm:$0xff] %vm597, %v1888
        %1897 = vst.msk [vmem:[%s889 + $0x71] sm:$0xff] %vm597, %v1889
        %v1898 = vld [vmem:[#allocation2] sm:$0xff]
        %v1899 = vld [vmem:[#allocation2 + $0x10] sm:$0xff]
        %v1900 = vld [vmem:[#allocation2 + $0x20] sm:$0xff]
        %v1901 = vld [vmem:[#allocation2 + $0x30] sm:$0xff]
        %v1902 = vld [vmem:[#allocation2 + $0x40] sm:$0xff]
        %v1903 = vld [vmem:[#allocation2 + $0x50] sm:$0xff]
        %v1904 = vld [vmem:[#allocation2 + $0x60] sm:$0xff]
        %v1905 = vld [vmem:[#allocation2 + $0x70] sm:$0xff]
        %v1906 = vlaneseq
        %v1907 = vshrl.u32 %v1906, 7
        %v1908 = vsub.s32 2, %v1907
        %v1909 = vrot.slane %v592, %v1908
        %v1910 = vmul.f32 %v1898, %v1909
        %v1911 = vmul.f32 %v1899, %v1909
        %v1912 = vmul.f32 %v1900, %v1909
        %v1913 = vmul.f32 %v1901, %v1909
        %v1914 = vmul.f32 %v1902, %v1909
        %v1915 = vmul.f32 %v1903, %v1909
        %v1916 = vmul.f32 %v1904, %v1909
        %v1917 = vmul.f32 %v1905, %v1909
        %v1918 = vadd.f32 %v1642, %v1910
        %v1919 = vadd.f32 %v1643, %v1911
        %v1920 = vadd.f32 %v1644, %v1912
        %v1921 = vadd.f32 %v1645, %v1913
        %v1922 = vadd.f32 %v1646, %v1914
        %v1923 = vadd.f32 %v1647, %v1915
        %v1924 = vadd.f32 %v1648, %v1916
        %v1925 = vadd.f32 %v1649, %v1917
        %v1926 = vld [vmem:[#allocation2 + $0x1] sm:$0xff]
        %v1927 = vld [vmem:[#allocation2 + $0x11] sm:$0xff]
        %v1928 = vld [vmem:[#allocation2 + $0x21] sm:$0xff]
        %v1929 = vld [vmem:[#allocation2 + $0x31] sm:$0xff]
        %v1930 = vld [vmem:[#allocation2 + $0x41] sm:$0xff]
        %v1931 = vld [vmem:[#allocation2 + $0x51] sm:$0xff]
        %v1932 = vld [vmem:[#allocation2 + $0x61] sm:$0xff]
        %v1933 = vld [vmem:[#allocation2 + $0x71] sm:$0xff]
        %v1934 = vlaneseq
        %v1935 = vshrl.u32 %v1934, 7
        %v1936 = vsub.s32 3, %v1935
        %v1937 = vrot.slane %v592, %v1936
        %v1938 = vmul.f32 %v1926, %v1937
        %v1939 = vmul.f32 %v1927, %v1937
        %v1940 = vmul.f32 %v1928, %v1937
        %v1941 = vmul.f32 %v1929, %v1937
        %v1942 = vmul.f32 %v1930, %v1937
        %v1943 = vmul.f32 %v1931, %v1937
        %v1944 = vmul.f32 %v1932, %v1937
        %v1945 = vmul.f32 %v1933, %v1937
        %v1946 = vadd.f32 %v1918, %v1938
        %v1947 = vadd.f32 %v1919, %v1939
        %v1948 = vadd.f32 %v1920, %v1940
        %v1949 = vadd.f32 %v1921, %v1941
        %v1950 = vadd.f32 %v1922, %v1942
        %v1951 = vadd.f32 %v1923, %v1943
        %v1952 = vadd.f32 %v1924, %v1944
        %v1953 = vadd.f32 %v1925, %v1945
        %v1954 = vld [vmem:[#allocation2 + $0x2] sm:$0xff]
        %v1955 = vld [vmem:[#allocation2 + $0x12] sm:$0xff]
        %v1956 = vld [vmem:[#allocation2 + $0x22] sm:$0xff]
        %v1957 = vld [vmem:[#allocation2 + $0x32] sm:$0xff]
        %v1958 = vld [vmem:[#allocation2 + $0x42] sm:$0xff]
        %v1959 = vld [vmem:[#allocation2 + $0x52] sm:$0xff]
        %v1960 = vld [vmem:[#allocation2 + $0x62] sm:$0xff]
        %v1961 = vld [vmem:[#allocation2 + $0x72] sm:$0xff]
        %v1962 = vlaneseq
        %v1963 = vshrl.u32 %v1962, 7
        %v1964 = vsub.s32 4, %v1963
        %v1965 = vrot.slane %v592, %v1964
        %v1966 = vmul.f32 %v1954, %v1965
        %v1967 = vmul.f32 %v1955, %v1965
        %v1968 = vmul.f32 %v1956, %v1965
        %v1969 = vmul.f32 %v1957, %v1965
        %v1970 = vmul.f32 %v1958, %v1965
        %v1971 = vmul.f32 %v1959, %v1965
        %v1972 = vmul.f32 %v1960, %v1965
        %v1973 = vmul.f32 %v1961, %v1965
        %v1974 = vadd.f32 %v1946, %v1966
        %v1975 = vadd.f32 %v1947, %v1967
        %v1976 = vadd.f32 %v1948, %v1968
        %v1977 = vadd.f32 %v1949, %v1969
        %v1978 = vadd.f32 %v1950, %v1970
        %v1979 = vadd.f32 %v1951, %v1971
        %v1980 = vadd.f32 %v1952, %v1972
        %v1981 = vadd.f32 %v1953, %v1973
        %v1982 = vld [vmem:[%s889] sm:$0xff]
        %v1983 = vld [vmem:[%s889 + $0x10] sm:$0xff]
        %v1984 = vld [vmem:[%s889 + $0x20] sm:$0xff]
        %v1985 = vld [vmem:[%s889 + $0x30] sm:$0xff]
        %v1986 = vld [vmem:[%s889 + $0x40] sm:$0xff]
        %v1987 = vld [vmem:[%s889 + $0x50] sm:$0xff]
        %v1988 = vld [vmem:[%s889 + $0x60] sm:$0xff]
        %v1989 = vld [vmem:[%s889 + $0x70] sm:$0xff]
        %v1990 = vlaneseq
        %v1991 = vshrl.u32 %v1990, 7
        %v1992 = vsub.s32 5, %v1991
        %v1993 = vrot.slane %v592, %v1992
        %v1994 = vmul.f32 %v1982, %v1993
        %v1995 = vmul.f32 %v1983, %v1993
        %v1996 = vmul.f32 %v1984, %v1993
        %v1997 = vmul.f32 %v1985, %v1993
        %v1998 = vmul.f32 %v1986, %v1993
        %v1999 = vmul.f32 %v1987, %v1993
        %v2000 = vmul.f32 %v1988, %v1993
        %v2001 = vmul.f32 %v1989, %v1993
        %v2002 = vadd.f32 %v1974, %v1994
        %v2003 = vadd.f32 %v1975, %v1995
        %v2004 = vadd.f32 %v1976, %v1996
        %v2005 = vadd.f32 %v1977, %v1997
        %v2006 = vadd.f32 %v1978, %v1998
        %v2007 = vadd.f32 %v1979, %v1999
        %v2008 = vadd.f32 %v1980, %v2000
        %v2009 = vadd.f32 %v1981, %v2001
        %v2010 = vld [vmem:[%s889 + $0x1] sm:$0xff]
        %v2011 = vld [vmem:[%s889 + $0x11] sm:$0xff]
        %v2012 = vld [vmem:[%s889 + $0x21] sm:$0xff]
        %v2013 = vld [vmem:[%s889 + $0x31] sm:$0xff]
        %v2014 = vld [vmem:[%s889 + $0x41] sm:$0xff]
        %v2015 = vld [vmem:[%s889 + $0x51] sm:$0xff]
        %v2016 = vld [vmem:[%s889 + $0x61] sm:$0xff]
        %v2017 = vld [vmem:[%s889 + $0x71] sm:$0xff]
        %v2018 = vlaneseq
        %v2019 = vshrl.u32 %v2018, 7
        %v2020 = vsub.s32 6, %v2019
        %v2021 = vrot.slane %v592, %v2020
        %v2022 = vmul.f32 %v2010, %v2021
        %v2023 = vmul.f32 %v2011, %v2021
        %v2024 = vmul.f32 %v2012, %v2021
        %v2025 = vmul.f32 %v2013, %v2021
        %v2026 = vmul.f32 %v2014, %v2021
        %v2027 = vmul.f32 %v2015, %v2021
        %v2028 = vmul.f32 %v2016, %v2021
        %v2029 = vmul.f32 %v2017, %v2021
        %v2030 = vadd.f32 %v2002, %v2022
        %v2031 = vadd.f32 %v2003, %v2023
        %v2032 = vadd.f32 %v2004, %v2024
        %v2033 = vadd.f32 %v2005, %v2025
        %v2034 = vadd.f32 %v2006, %v2026
        %v2035 = vadd.f32 %v2007, %v2027
        %v2036 = vadd.f32 %v2008, %v2028
        %v2037 = vadd.f32 %v2009, %v2029
        %v2038 = vld [vmem:[%s889 + $0x2] sm:$0xff]
        %v2039 = vld [vmem:[%s889 + $0x12] sm:$0xff]
        %v2040 = vld [vmem:[%s889 + $0x22] sm:$0xff]
        %v2041 = vld [vmem:[%s889 + $0x32] sm:$0xff]
        %v2042 = vld [vmem:[%s889 + $0x42] sm:$0xff]
        %v2043 = vld [vmem:[%s889 + $0x52] sm:$0xff]
        %v2044 = vld [vmem:[%s889 + $0x62] sm:$0xff]
        %v2045 = vld [vmem:[%s889 + $0x72] sm:$0xff]
        %v2046 = vlaneseq
        %v2047 = vshrl.u32 %v2046, 7
        %v2048 = vsub.s32 7, %v2047
        %v2049 = vrot.slane %v592, %v2048
        %v2050 = vmul.f32 %v2038, %v2049
        %v2051 = vmul.f32 %v2039, %v2049
        %v2052 = vmul.f32 %v2040, %v2049
        %v2053 = vmul.f32 %v2041, %v2049
        %v2054 = vmul.f32 %v2042, %v2049
        %v2055 = vmul.f32 %v2043, %v2049
        %v2056 = vmul.f32 %v2044, %v2049
        %v2057 = vmul.f32 %v2045, %v2049
        %v2058 = vadd.f32 %v2030, %v2050
        %v2059 = vadd.f32 %v2031, %v2051
        %v2060 = vadd.f32 %v2032, %v2052
        %v2061 = vadd.f32 %v2033, %v2053
        %v2062 = vadd.f32 %v2034, %v2054
        %v2063 = vadd.f32 %v2035, %v2055
        %v2064 = vadd.f32 %v2036, %v2056
        %v2065 = vadd.f32 %v2037, %v2057
        %v2066 = vld [vmem:[%s1066] sm:$0xff]
        %v2067 = vld [vmem:[%s1066 + $0x10] sm:$0xff]
        %v2068 = vld [vmem:[%s1066 + $0x20] sm:$0xff]
        %v2069 = vld [vmem:[%s1066 + $0x30] sm:$0xff]
        %v2070 = vld [vmem:[%s1066 + $0x40] sm:$0xff]
        %v2071 = vld [vmem:[%s1066 + $0x50] sm:$0xff]
        %v2072 = vld [vmem:[%s1066 + $0x60] sm:$0xff]
        %v2073 = vld [vmem:[%s1066 + $0x70] sm:$0xff]
        %v2074 = vlaneseq
        %v2075 = vshrl.u32 %v2074, 7
        %v2076 = vsub.s32 0, %v2075
        %v2077 = vrot.slane %v593, %v2076
        %v2078 = vmul.f32 %v2066, %v2077
        %v2079 = vmul.f32 %v2067, %v2077
        %v2080 = vmul.f32 %v2068, %v2077
        %v2081 = vmul.f32 %v2069, %v2077
        %v2082 = vmul.f32 %v2070, %v2077
        %v2083 = vmul.f32 %v2071, %v2077
        %v2084 = vmul.f32 %v2072, %v2077
        %v2085 = vmul.f32 %v2073, %v2077
        %v2086 = vadd.f32 %v2058, %v2078
        %v2087 = vadd.f32 %v2059, %v2079
        %v2088 = vadd.f32 %v2060, %v2080
        %v2089 = vadd.f32 %v2061, %v2081
        %v2090 = vadd.f32 %v2062, %v2082
        %v2091 = vadd.f32 %v2063, %v2083
        %v2092 = vadd.f32 %v2064, %v2084
        %v2093 = vadd.f32 %v2065, %v2085
        %v2094 = vld [vmem:[%s1066 + $0x1] sm:$0xff]
        %v2095 = vld [vmem:[%s1066 + $0x11] sm:$0xff]
        %v2096 = vld [vmem:[%s1066 + $0x21] sm:$0xff]
        %v2097 = vld [vmem:[%s1066 + $0x31] sm:$0xff]
        %v2098 = vld [vmem:[%s1066 + $0x41] sm:$0xff]
        %v2099 = vld [vmem:[%s1066 + $0x51] sm:$0xff]
        %v2100 = vld [vmem:[%s1066 + $0x61] sm:$0xff]
        %v2101 = vld [vmem:[%s1066 + $0x71] sm:$0xff]
        %v2102 = vlaneseq
        %v2103 = vshrl.u32 %v2102, 7
        %v2104 = vsub.s32 1, %v2103
        %v2105 = vrot.slane %v593, %v2104
        %v2106 = vmul.f32 %v2094, %v2105
        %v2107 = vmul.f32 %v2095, %v2105
        %v2108 = vmul.f32 %v2096, %v2105
        %v2109 = vmul.f32 %v2097, %v2105
        %v2110 = vmul.f32 %v2098, %v2105
        %v2111 = vmul.f32 %v2099, %v2105
        %v2112 = vmul.f32 %v2100, %v2105
        %v2113 = vmul.f32 %v2101, %v2105
        %v2114 = vadd.f32 %v2086, %v2106
        %v2115 = vadd.f32 %v2087, %v2107
        %v2116 = vadd.f32 %v2088, %v2108
        %v2117 = vadd.f32 %v2089, %v2109
        %v2118 = vadd.f32 %v2090, %v2110
        %v2119 = vadd.f32 %v2091, %v2111
        %v2120 = vadd.f32 %v2092, %v2112
        %v2121 = vadd.f32 %v2093, %v2113
        %v2122 = vld [vmem:[%s1066 + $0x2] sm:$0xff]
        %v2123 = vld [vmem:[%s1066 + $0x12] sm:$0xff]
        %v2124 = vld [vmem:[%s1066 + $0x22] sm:$0xff]
        %v2125 = vld [vmem:[%s1066 + $0x32] sm:$0xff]
        %v2126 = vld [vmem:[%s1066 + $0x42] sm:$0xff]
        %v2127 = vld [vmem:[%s1066 + $0x52] sm:$0xff]
        %v2128 = vld [vmem:[%s1066 + $0x62] sm:$0xff]
        %v2129 = vld [vmem:[%s1066 + $0x72] sm:$0xff]
        %v2130 = vlaneseq
        %v2131 = vshrl.u32 %v2130, 7
        %v2132 = vsub.s32 2, %v2131
        %v2133 = vrot.slane %v593, %v2132
        %v2134 = vmul.f32 %v2122, %v2133
        %v2135 = vmul.f32 %v2123, %v2133
        %v2136 = vmul.f32 %v2124, %v2133
        %v2137 = vmul.f32 %v2125, %v2133
        %v2138 = vmul.f32 %v2126, %v2133
        %v2139 = vmul.f32 %v2127, %v2133
        %v2140 = vmul.f32 %v2128, %v2133
        %v2141 = vmul.f32 %v2129, %v2133
        %v2142 = vadd.f32 %v2114, %v2134
        %v2143 = vadd.f32 %v2115, %v2135
        %v2144 = vadd.f32 %v2116, %v2136
        %v2145 = vadd.f32 %v2117, %v2137
        %v2146 = vadd.f32 %v2118, %v2138
        %v2147 = vadd.f32 %v2119, %v2139
        %v2148 = vadd.f32 %v2120, %v2140
        %v2149 = vadd.f32 %v2121, %v2141
        %v2150 = vmax.f32 %v2142, 0.0
        %v2151 = vmax.f32 %v2143, 0.0
        %v2152 = vmax.f32 %v2144, 0.0
        %v2153 = vmax.f32 %v2145, 0.0
        %v2154 = vmax.f32 %v2146, 0.0
        %v2155 = vmax.f32 %v2147, 0.0
        %v2156 = vmax.f32 %v2148, 0.0
        %v2157 = vmax.f32 %v2149, 0.0
        %v2158 = vmin.f32 %v2150, 6.0
        %v2159 = vmin.f32 %v2151, 6.0
        %v2160 = vmin.f32 %v2152, 6.0
        %v2161 = vmin.f32 %v2153, 6.0
        %v2162 = vmin.f32 %v2154, 6.0
        %v2163 = vmin.f32 %v2155, 6.0
        %v2164 = vmin.f32 %v2156, 6.0
        %v2165 = vmin.f32 %v2157, 6.0
        %v2166 = vpack.c.bf16 %v2159, %v2158
        %v2167 = vpack.c.bf16 %v2161, %v2160
        %v2168 = vpack.c.bf16 %v2163, %v2162
        %v2169 = vpack.c.bf16 %v2165, %v2164
        %v2170 = vld [vmem:[#allocation15] sm:$0xf]
        %v2171 = vld [vmem:[#allocation15 + $0x4] sm:$0xf]
        %v2172 = vld [vmem:[#allocation17] sm:$0x1]
        %v2174 = vlaneseq
        %v2175 = vshrl.u32 %v2174, 7
        %v2176 = vsub.s32 0, %v2175
        %v2177 = vrot.slane %v2172, %v2176
        %v2181 = vunpack.c.l.b16 %v2170
        %v2182 = vunpack.c.l.b16 %v2171
        %v2183 = vpack.c.b16 %v2182, %v2181
        %v2186 = vsel %vm597, %v2166, 0
        %v2189 = vsel %vm597, %v2167, 0
        %v2192 = vsel %vm597, %v2168, 0
        %v2195 = vsel %vm597, %v2169, 0
        %2197 = vmatprep.subr.bf16.mxu0 0
        %2198 = vmatpush1.bf16.msra.mxu0 %v2183
        %2199 = vmatprep.subr.bf16.mxu0 0
        %2200 = vmatpush1.bf16.msra.mxu0 0
        %2201 = vmatprep.subr.bf16.mxu0 0
        %2202 = vmatpush1.bf16.msra.mxu0 0
        %2203 = vmatprep.subr.bf16.mxu0 0
        %2204 = vmatpush1.bf16.msra.mxu0 0
        %2205 = vmatprep.subr.bf16.mxu0 0
        %2206 = vmatpush1.bf16.msra.mxu0 0
        %2207 = vmatprep.subr.bf16.mxu0 0
        %2208 = vmatpush1.bf16.msra.mxu0 0
        %2209 = vmatprep.subr.bf16.mxu0 0
        %2210 = vmatpush1.bf16.msra.mxu0 0
        %2211 = vmatprep.subr.bf16.mxu0 0
        %2212 = vmatpush1.bf16.msra.mxu0 0
        %2213 = vmatprep.subr.bf16.mxu0 0
        %2214 = vmatpush1.bf16.msra.mxu0 0
        %2215 = vmatprep.subr.bf16.mxu0 0
        %2216 = vmatpush1.bf16.msra.mxu0 0
        %2217 = vmatprep.subr.bf16.mxu0 0
        %2218 = vmatpush1.bf16.msra.mxu0 0
        %2219 = vmatprep.subr.bf16.mxu0 0
        %2220 = vmatpush1.bf16.msra.mxu0 0
        %2221 = vmatprep.subr.bf16.mxu0 0
        %2222 = vmatpush1.bf16.msra.mxu0 0
        %2223 = vmatprep.subr.bf16.mxu0 0
        %2224 = vmatpush1.bf16.msra.mxu0 0
        %2225 = vmatprep.subr.bf16.mxu0 0
        %2226 = vmatpush1.bf16.msra.mxu0 0
        %2227 = vmatprep.subr.bf16.mxu0 0
        %2228 = vmatpush1.bf16.msra.mxu0 0
        %2229 = vmatprep.mubr.bf16.mxu0 0
        %2230 = vmatmul.mubr.bf16.gmra.mrb[0].mxu0 %v2186
        %v2231 = vpop.f32.mrb[0].mxu0
        %v2232 = vadd.f32 %v2177, %v2231
        %v2233 = vpop.f32.mrb[0].mxu0
        %v2234 = vpop.f32.mrb[0].mxu0
        %v2235 = vadd.f32 %v2177, %v2234
        %v2236 = vpop.f32.mrb[0].mxu0
        %2237 = vmatprep.mubr.bf16.mxu0 0
        %2238 = vmatmul.mubr.bf16.gmra.mrb[0].mxu0 %v2189
        %v2239 = vpop.f32.mrb[0].mxu0
        %v2240 = vadd.f32 %v2177, %v2239
        %v2241 = vpop.f32.mrb[0].mxu0
        %v2242 = vpop.f32.mrb[0].mxu0
        %v2243 = vadd.f32 %v2177, %v2242
        %v2244 = vpop.f32.mrb[0].mxu0
        %2245 = vmatprep.mubr.bf16.mxu0 0
        %2246 = vmatmul.mubr.bf16.gmra.mrb[0].mxu0 %v2192
        %v2247 = vpop.f32.mrb[0].mxu0
        %v2248 = vadd.f32 %v2177, %v2247
        %v2249 = vpop.f32.mrb[0].mxu0
        %v2250 = vpop.f32.mrb[0].mxu0
        %v2251 = vadd.f32 %v2177, %v2250
        %v2252 = vpop.f32.mrb[0].mxu0
        %2253 = vmatprep.mubr.bf16.mxu0 0
        %2254 = vmatmul.mubr.bf16.gmra.mrb[0].mxu0 %v2195
        %v2255 = vpop.f32.mrb[0].mxu0
        %v2256 = vadd.f32 %v2177, %v2255
        %v2257 = vpop.f32.mrb[0].mxu0
        %v2258 = vpop.f32.mrb[0].mxu0
        %v2259 = vadd.f32 %v2177, %v2258
        %v2260 = vpop.f32.mrb[0].mxu0
        %2261 = vdwg.mxu0
        %v2262 = vld [vmem:[%s497] sm:$0xff]
        %v2263 = vld [vmem:[%s497 + $0x8] sm:$0xff]
        %v2264 = vld [vmem:[%s497 + $0x10] sm:$0xff]
        %v2265 = vld [vmem:[%s497 + $0x18] sm:$0xff]
        %v2266 = vld [vmem:[%s497 + $0x20] sm:$0xff]
        %v2267 = vld [vmem:[%s497 + $0x28] sm:$0xff]
        %v2268 = vld [vmem:[%s497 + $0x30] sm:$0xff]
        %v2269 = vld [vmem:[%s497 + $0x38] sm:$0xff]
        %v2270 = vadd.f32 %v2232, %v2262
        %v2271 = vadd.f32 %v2235, %v2263
        %v2272 = vadd.f32 %v2240, %v2264
        %v2273 = vadd.f32 %v2243, %v2265
        %v2274 = vadd.f32 %v2248, %v2266
        %v2275 = vadd.f32 %v2251, %v2267
        %v2276 = vadd.f32 %v2256, %v2268
        %v2277 = vadd.f32 %v2259, %v2269
        %vm2278 = vcmask 31744
        %2279 = vst.msk [vmem:[%s574] sm:$0xff] %vm2278, %v2270
        %2280 = vst.msk [vmem:[%s574 + $0x8] sm:$0xff] %vm2278, %v2271
        %2281 = vst.msk [vmem:[%s574 + $0x10] sm:$0xff] %vm2278, %v2272
        %2282 = vst.msk [vmem:[%s574 + $0x18] sm:$0xff] %vm2278, %v2273
        %2283 = vst.msk [vmem:[%s574 + $0x20] sm:$0xff] %vm2278, %v2274
        %2284 = vst.msk [vmem:[%s574 + $0x28] sm:$0xff] %vm2278, %v2275
        %2285 = vst.msk [vmem:[%s574 + $0x30] sm:$0xff] %vm2278, %v2276
        %2286 = vst.msk [vmem:[%s574 + $0x38] sm:$0xff] %vm2278, %v2277
        %s2287 = sand.u32 %s292, 1
        %s2288 = scalar_lea.sflag [#allocation5], %s2287
        %s2289 = sand.u32 %s292, 1
        %s2290 = smul.addr %s2289, 64
        %s2291 = scalar_lea.vmem [#allocation18], %s2290
        // Predicated region
        $region93: #{tpu_custom_call.1} parent=55 // pred_check
          %p2292 = pneg %p302
        $region94: #{tpu_custom_call.1} parent=55 // pred_check_branch
          %2294 = sbr.rel (%p2292) target = $region96
        $region95: #{tpu_custom_call.1} parent=55 // pred_region
          %s2296 = ssub.s32 1024, 1024
          %2297 = vsyncadd %s2288, %s2296
          %s2298 = smul.addr %s37, 8
          %s2299 = smul.addr %s36, 64
          %s2300 = sadd.s32 %s2298, %s2299
          %s2301 = smul.addr %s2300, 128
          %s2302 = scalar_lea.hbm %s9, %s2301
          %s2303 = sshll.u32 %s2291, 4
          %s2304 = int_to_ptr.vmem [resolvable:$true] %s2303
          %2309 = dma.vmem_to_hbm [thread:$0]  %s2304, 1024, %s2302, %s2288, 128, 128, 8
        $region96: #{tpu_custom_call.1} parent=55 // pred_fallthru
          _
      $region56: #{tpu_custom_call.1} parent=5 // pred_fallthru
        _
      %p2310 = scmp.le.s32.totalorder 2, %s27
      // Predicated region
      $region97: #{tpu_custom_call.1} parent=5 // pred_check
        %p2311 = pneg %p2310
      $region98: #{tpu_custom_call.1} parent=5 // pred_check_branch
        %2313 = sbr.rel (%p2311) target = $region100
      $region99: #{tpu_custom_call.1} parent=5 // pred_region
        %s2314 = ssub.s32 %s27, 2
        // Predicated region
        $region101: #{tpu_custom_call.1} parent=99 // pred_check
          %p2315 = pneg %p308
        $region102: #{tpu_custom_call.1} parent=99 // pred_check_branch
          %2317 = sbr.rel (%p2315) target = $region104
        $region103: #{tpu_custom_call.1} parent=99 // pred_region
          %s2318 = sand.u32 %s293, 1
          %s2319 = scalar_lea.sflag [#allocation5], %s2318
          %s2320 = sand.u32 %s293, 1
          %s2321 = smul.addr %s2320, 64
          %s2322 = scalar_lea.vmem [#allocation18], %s2321
          %2323 = dma.done %s2319, 1024
        $region104: #{tpu_custom_call.1} parent=99 // pred_fallthru
          _
      $region100: #{tpu_custom_call.1} parent=5 // pred_fallthru
        _
    $region6: #{tpu_custom_call.1} parent=1 // loop_footer
      %s31 = sadd.s32 1, %s27
    $region7: #{tpu_custom_call.1} parent=1 // loop_footer_branch
      %26 = sbr.rel target = $region3
    $region8: #{tpu_custom_call.1} parent=1 // loop_exit
      _
    %2324 = vsyncpa [#allocation4], 1
    %s2325 = scalar_lea.sflag [#allocation4], 1
    %2326 = vsyncpa %s2325, 1
    %2327 = vsyncpa [#allocation7], 1
    %s2328 = scalar_lea.sflag [#allocation7], 1
    %2329 = vsyncpa %s2328, 1
    %2330 = vsyncpa [#allocation10], 1
    %2331 = vsyncpa [#allocation13], 1
    %2332 = vsyncpa [#allocation16], 1
    %2333 = vsyncpa [#allocation5], 1
    %s2334 = scalar_lea.sflag [#allocation5], 1
    %2335 = vsyncpa %s2334, 1

</llo_original>
